<compile_context>
chip_gen: v5e
topology: v5e:2x2
jax: 0.10.0
libtpu: 0.0.40
codegen_flags: <defaults>
</compile_context>

<pallas_src>
import functools

import jax
import jax.numpy as jnp
from jax.experimental import pallas as pl
from jax.experimental.pallas import tpu as pltpu

LANE = 128  # lane width / feature padding unit


def _round_up(v, m):
    return ((v + m - 1) // m) * m


# ---------------------------------------------------------------------------
# Pallas kernel: forward pass for one TB-row batch tile (weights resident).
# ---------------------------------------------------------------------------
def icnn_kernel(num_layer, hp,
                x_ref,      # [TB, D]                f32 (unpadded input tile)
                ws_ref,     # [D, num_layer*Hp+128]  bf16 stacked x-side weights
                bs_ref,     # [1, num_layer*Hp+128]  f32  stacked x-side biases
                wc_ref,     # [L-1, Hp, Hp]          bf16 convex[i].weight^T
                wsel_ref,   # [1, Hp+128]            f32  [last_convex row | e0]
                o_ref):     # [1, 1, TB]             f32  lane-packed result row
    xb = x_ref[...].astype(jnp.bfloat16)                     # cast once, in-kernel

    # One wide matmul: u = [fc1 | normal_1..normal_{L-1} | last_linear](x) + biases.
    u = jnp.dot(xb, ws_ref[...], preferred_element_type=jnp.float32) + bs_ref[...]

    # z = relu(fc1_normal(x)) ** 2
    z = jnp.maximum(u[:, :hp], 0.0)
    z = z * z

    # z = relu(convex[i](z) + normal[i](x));   normal[i](x) is a precomputed u slice.
    # TODO(synk): for large num_layer switch to lax.fori_loop with a VMEM-resident u
    # and dynamic wc_ref[i] indexing so code size / live ranges don't grow with depth.
    for i in range(num_layer - 1):
        zc = jnp.dot(z.astype(jnp.bfloat16), wc_ref[i],
                     preferred_element_type=jnp.float32)
        z = jnp.maximum(zc + u[:, (i + 1) * hp:(i + 2) * hp], 0.0)

    # out = last_convex(z) + last_linear(x) ** 2, packed lane-major.
    # ll_blk: column 0 holds last_linear(x) (+bias); the other 127 columns are exact
    # zeros (zero-padded weights/biases), so squaring keeps them zero.
    ll_blk = u[:, num_layer * hp:num_layer * hp + LANE]      # (TB, 128)
    zaug = jnp.concatenate([z, ll_blk * ll_blk], axis=-1)    # (TB, Hp+128)
    # Selector row [wlc | 1 at col Hp]: (1, Hp+128) @ (Hp+128, TB) -> (1, TB).
    # zaug.T is an aligned (multiples of 8/128) XLU transpose; the matmul is tiny.
    res_row = jnp.dot(wsel_ref[...], zaug.T, preferred_element_type=jnp.float32)

    o_ref[...] = res_row[None].astype(o_ref.dtype)           # (1, 1, TB) unmasked store


# ---------------------------------------------------------------------------
# One-time parameter preparation (stack / transpose / pad / bf16-cast).
# Zero padding invariant: every padded weight row/col and bias entry is exactly 0,
# so padded hidden lanes stay 0 through relu and never leak into the reductions.
# ---------------------------------------------------------------------------
def prepare_params(params, num_layer):
    assert num_layer >= 2, "kernel expects at least one convex/normal layer"
    H, D = params["w1"].shape                    # fc1_normal: [H, D] (PyTorch layout)
    O = params["wlc"].shape[0]
    assert O == 1  # module's forward only makes sense for out_dim == 1
    L1 = num_layer - 1
    Hp = _round_up(H, LANE)
    NS = num_layer * Hp + LANE                   # [fc1 | normal_1..L1 | last_linear blk]

    # Stacked x-side weight / bias.
    ws = jnp.zeros((D, NS), jnp.float32)
    ws = ws.at[:, :H].set(params["w1"].T)
    for i in range(L1):
        ws = ws.at[:, (i + 1) * Hp:(i + 1) * Hp + H].set(params["wn"][i].T)
    ws = ws.at[:, num_layer * Hp].set(params["wll"][0])          # last_linear weight col

    bs = jnp.zeros((1, NS), jnp.float32)
    bs = bs.at[0, :H].set(params["b1"])
    for i in range(L1):
        bs = bs.at[0, (i + 1) * Hp:(i + 1) * Hp + H].set(params["bn"][i])
    bs = bs.at[0, num_layer * Hp].set(params["bll"][0])          # last_linear bias

    # Convex (hidden->hidden) weights, transposed and padded.
    wc = jnp.zeros((L1, Hp, Hp), jnp.float32)
    wc = wc.at[:, :H, :H].set(jnp.transpose(params["wc"], (0, 2, 1)))

    # Final selector row: last_convex weights over z, plus a 1.0 that picks the
    # (last_linear(x))^2 lane of the augmented block.
    wsel = jnp.zeros((1, Hp + LANE), jnp.float32)
    wsel = wsel.at[0, :H].set(params["wlc"][0])
    wsel = wsel.at[0, Hp].set(1.0)

    return {
        "ws": ws.astype(jnp.bfloat16),
        "bs": bs,
        "wc": wc.astype(jnp.bfloat16),
        "wsel": wsel,
        "dims": (D, H, Hp, NS),
    }


# ---------------------------------------------------------------------------
# Wrapper: batch-tiled pallas_call with VMEM-resident weights, packed output.
# ---------------------------------------------------------------------------
def icnn_forward(prep, x, num_layer, *, block_b=1024):
    D, H, Hp, NS = prep["dims"]
    B, Dx = x.shape
    assert Dx == D
    L1 = num_layer - 1

    TB = min(block_b, _round_up(B, LANE))
    TB = _round_up(TB, LANE)                     # lane-dense packed output row
    B_pad = _round_up(B, TB)
    nb = B_pad // TB

    xp = x if B_pad == B else jnp.pad(x, ((0, B_pad - B), (0, 0)))

    out = pl.pallas_call(
        functools.partial(icnn_kernel, num_layer, Hp),
        out_shape=jax.ShapeDtypeStruct((nb, 1, TB), jnp.float32),
        grid=(nb,),
        in_specs=[
            pl.BlockSpec((TB, D), lambda i: (i, 0)),             # x tile (pipelined)
            pl.BlockSpec((D, NS), lambda i: (0, 0)),             # stacked x-side W
            pl.BlockSpec((1, NS), lambda i: (0, 0)),             # stacked x-side b
            pl.BlockSpec((L1, Hp, Hp), lambda i: (0, 0, 0)),     # convex weights
            pl.BlockSpec((1, Hp + LANE), lambda i: (0, 0)),      # final selector row
        ],
        out_specs=pl.BlockSpec((1, 1, TB), lambda i: (i, 0, 0)),  # packed result row
        compiler_params=pltpu.CompilerParams(
            dimension_semantics=("parallel",),   # v7x: shard batch tiles over 2 TCs
            vmem_limit_bytes=32 * 1024 * 1024,   # headroom for block_b up to ~2048
        ),
    )(xp, prep["ws"], prep["bs"], prep["wc"], prep["wsel"])

    return out.reshape(B_pad, 1)[:B]


# ---------------------------------------------------------------------------
# Deterministic parameter initialization (shapes from the module's __init__).
# ---------------------------------------------------------------------------
def init_params(key, input_dim, hidden_dim, num_layer, out_dim=1):
    ks = jax.random.split(key, 9)
    L = num_layer

    def uniform(k, shape, fan_in):
        bound = 1.0 / jnp.sqrt(fan_in)
        return jax.random.uniform(k, shape, jnp.float32, -bound, bound)

    def truncnorm(k, shape, fan_in):
        thr = 1.0 / jnp.sqrt(fan_in)
        return jax.random.truncated_normal(k, -1.0, 1.0, shape, jnp.float32) * thr

    return {
        # fc1_normal: nn.Linear(input_dim, hidden_dim, bias=True)
        "w1": uniform(ks[0], (hidden_dim, input_dim), input_dim),
        "b1": uniform(ks[1], (hidden_dim,), input_dim),
        # normal[i]: nn.Linear(input_dim, hidden_dim, bias=True)
        "wn": uniform(ks[2], (L - 1, hidden_dim, input_dim), input_dim),
        "bn": uniform(ks[3], (L - 1, hidden_dim), input_dim),
        # convex[i]: ConvexLinear(hidden_dim, hidden_dim, bias=False)
        "wc": truncnorm(ks[4], (L - 1, hidden_dim, hidden_dim), hidden_dim),
        # last_convex: ConvexLinear(hidden_dim, out_dim, bias=False)
        "wlc": truncnorm(ks[5], (out_dim, hidden_dim), hidden_dim),
        # last_linear: nn.Linear(input_dim, 1, bias=True)
        "wll": uniform(ks[6], (1, input_dim), input_dim),
        "bll": uniform(ks[7], (1,), input_dim),
        # w0, w1 scalar parameters exist in the module but are unused in forward.
        "w0": jnp.log(jnp.exp(jnp.ones((1,))) - 1.0),
        "w1_scalar": jnp.zeros((1,)),
    }


# ---------------------------------------------------------------------------
# Pure-JAX reference mirroring the kernel's bf16 MXU operands (f32 accumulate).
# NOTE: results drift slightly from a pure-f32 PyTorch module (bf16 operands +
# the final f32 MXU reduction); tolerance below accounts for that.
# ---------------------------------------------------------------------------
def icnn_ref_bf16(params, x, num_layer):
    bf = lambda a: a.astype(jnp.bfloat16)
    z = jnp.dot(bf(x), bf(params["w1"].T),
                preferred_element_type=jnp.float32) + params["b1"]
    z = jnp.maximum(z, 0.0)
    z = z * z
    for i in range(num_layer - 1):
        conv = jnp.dot(bf(z), bf(params["wc"][i].T),
                       preferred_element_type=jnp.float32)
        norm = jnp.dot(bf(x), bf(params["wn"][i].T),
                       preferred_element_type=jnp.float32) + params["bn"][i]
        z = jnp.maximum(conv + norm, 0.0)
    lc = jnp.sum(z * params["wlc"][0], axis=-1, keepdims=True)
    ll = jnp.dot(bf(x), bf(params["wll"].T),
                 preferred_element_type=jnp.float32) + params["bll"]
    return lc + ll * ll


if __name__ == "__main__":
    INPUT_DIM, HIDDEN_DIM, NUM_LAYER, OUT_DIM = 8, 32, 3, 1
    BATCH, TB = 2048, 1024     # grid of 2 "parallel" batch tiles (even, >=2 for v7x)

    key = jax.random.PRNGKey(0)
    pkey, xkey, xkey2 = jax.random.split(key, 3)
    params = init_params(pkey, INPUT_DIM, HIDDEN_DIM, NUM_LAYER, OUT_DIM)
    prep = prepare_params(params, NUM_LAYER)      # one-time stack/transpose/pad/cast

    # Main check: large even grid.
    x = jax.random.normal(xkey, (BATCH, INPUT_DIM), jnp.float32)
    out = jax.block_until_ready(icnn_forward(prep, x, NUM_LAYER, block_b=TB))
    ref = icnn_ref_bf16(params, x, NUM_LAYER)
    assert out.shape == (BATCH, OUT_DIM)
    assert jnp.allclose(out, ref, atol=2e-2, rtol=2e-2), (
        float(jnp.max(jnp.abs(out - ref))))

    # Secondary check: ragged batch exercising the batch-pad path (single grid step).
    x2 = jax.random.normal(xkey2, (200, INPUT_DIM), jnp.float32)
    out2 = jax.block_until_ready(icnn_forward(prep, x2, NUM_LAYER, block_b=TB))
    ref2 = icnn_ref_bf16(params, x2, NUM_LAYER)
    assert out2.shape == (200, OUT_DIM)
    assert jnp.allclose(out2, ref2, atol=2e-2, rtol=2e-2), (
        float(jnp.max(jnp.abs(out2 - ref2))))

    print("KERNEL_OK")
</pallas_src>

<mosaic_0001>
module attributes {stable_mosaic.version = 11 : i64} {
  func.func @icnn_kernel(%arg0: i32, %arg1: memref<1024x8xf32, #tpu.memory_space<vmem>>, %arg2: memref<8x512xbf16, #tpu.memory_space<vmem>>, %arg3: memref<1x512xf32, #tpu.memory_space<vmem>>, %arg4: memref<2x128x128xbf16, #tpu.memory_space<vmem>>, %arg5: memref<1x256xf32, #tpu.memory_space<vmem>>, %arg6: memref<1x1x1024xf32, #tpu.memory_space<vmem>>) attributes {dimension_semantics = [#tpu.dimension_semantics<parallel>], iteration_bounds = array<i64: 2>, scalar_prefetch = 0 : i64, scratch_operands = 0 : i64, tpu.core_type = #tpu.core_type<tc>, window_params = [{transform_indices = @transform_0, window_bounds = array<i64: 1024, 8>}, {pipeline_mode = #tpu.pipeline_mode<synchronous>, transform_indices = @transform_1, window_bounds = array<i64: 8, 512>}, {pipeline_mode = #tpu.pipeline_mode<synchronous>, transform_indices = @transform_2, window_bounds = array<i64: 1, 512>}, {pipeline_mode = #tpu.pipeline_mode<synchronous>, transform_indices = @transform_3, window_bounds = array<i64: 2, 128, 128>}, {pipeline_mode = #tpu.pipeline_mode<synchronous>, transform_indices = @transform_4, window_bounds = array<i64: 1, 256>}, {transform_indices = @transform_5, window_bounds = array<i64: 1, 1, 1024>}]} {
    %c0 = arith.constant 0 : index
    %c0_0 = arith.constant 0 : index
    %0 = vector.load %arg1[%c0, %c0_0] : memref<1024x8xf32, #tpu.memory_space<vmem>>, vector<1024x8xf32>
    %1 = arith.truncf %0 : vector<1024x8xf32> to vector<1024x8xbf16>
    %c0_1 = arith.constant 0 : index
    %c0_2 = arith.constant 0 : index
    %2 = vector.load %arg2[%c0_1, %c0_2] : memref<8x512xbf16, #tpu.memory_space<vmem>>, vector<8x512xbf16>
    %cst = arith.constant dense<0.000000e+00> : vector<1024x512xf32>
    %3 = tpu.matmul %1, %2, %cst {dimension_numbers = #tpu.dot_dimension_numbers<[1], [0], [0], [1], [0, 0, 1, 1], [], []>} : vector<1024x8xbf16>, vector<8x512xbf16>, vector<1024x512xf32> -> vector<1024x512xf32>
    %c0_3 = arith.constant 0 : index
    %c0_4 = arith.constant 0 : index
    %4 = vector.load %arg3[%c0_3, %c0_4] : memref<1x512xf32, #tpu.memory_space<vmem>>, vector<1x512xf32>
    %5 = vector.broadcast %4 : vector<1x512xf32> to vector<1024x512xf32>
    %6 = arith.addf %3, %5 : vector<1024x512xf32>
    %7 = vector.extract_strided_slice %6 {offsets = [0, 0], sizes = [1024, 128], strides = [1, 1]} : vector<1024x512xf32> to vector<1024x128xf32>
    %cst_5 = arith.constant 0.000000e+00 : f32
    %8 = vector.broadcast %cst_5 : f32 to vector<1024x128xf32>
    %9 = arith.maximumf %7, %8 : vector<1024x128xf32>
    %10 = arith.mulf %9, %9 : vector<1024x128xf32>
    %11 = arith.truncf %10 : vector<1024x128xf32> to vector<1024x128xbf16>
    %c0_6 = arith.constant 0 : index
    %c0_7 = arith.constant 0 : index
    %c0_8 = arith.constant 0 : index
    %12 = vector.load %arg4[%c0_6, %c0_7, %c0_8] : memref<2x128x128xbf16, #tpu.memory_space<vmem>>, vector<1x128x128xbf16>
    %13 = vector.shape_cast %12 : vector<1x128x128xbf16> to vector<128x128xbf16>
    %cst_9 = arith.constant dense<0.000000e+00> : vector<1024x128xf32>
    %14 = tpu.matmul %11, %13, %cst_9 {dimension_numbers = #tpu.dot_dimension_numbers<[1], [0], [0], [1], [0, 0, 1, 1], [], []>} : vector<1024x128xbf16>, vector<128x128xbf16>, vector<1024x128xf32> -> vector<1024x128xf32>
    %15 = vector.extract_strided_slice %6 {offsets = [0, 128], sizes = [1024, 128], strides = [1, 1]} : vector<1024x512xf32> to vector<1024x128xf32>
    %16 = arith.addf %14, %15 : vector<1024x128xf32>
    %cst_10 = arith.constant 0.000000e+00 : f32
    %17 = vector.broadcast %cst_10 : f32 to vector<1024x128xf32>
    %18 = arith.maximumf %16, %17 : vector<1024x128xf32>
    %19 = arith.truncf %18 : vector<1024x128xf32> to vector<1024x128xbf16>
    %c1 = arith.constant 1 : index
    %c0_11 = arith.constant 0 : index
    %c0_12 = arith.constant 0 : index
    %20 = vector.load %arg4[%c1, %c0_11, %c0_12] : memref<2x128x128xbf16, #tpu.memory_space<vmem>>, vector<1x128x128xbf16>
    %21 = vector.shape_cast %20 : vector<1x128x128xbf16> to vector<128x128xbf16>
    %cst_13 = arith.constant dense<0.000000e+00> : vector<1024x128xf32>
    %22 = tpu.matmul %19, %21, %cst_13 {dimension_numbers = #tpu.dot_dimension_numbers<[1], [0], [0], [1], [0, 0, 1, 1], [], []>} : vector<1024x128xbf16>, vector<128x128xbf16>, vector<1024x128xf32> -> vector<1024x128xf32>
    %23 = vector.extract_strided_slice %6 {offsets = [0, 256], sizes = [1024, 128], strides = [1, 1]} : vector<1024x512xf32> to vector<1024x128xf32>
    %24 = arith.addf %22, %23 : vector<1024x128xf32>
    %cst_14 = arith.constant 0.000000e+00 : f32
    %25 = vector.broadcast %cst_14 : f32 to vector<1024x128xf32>
    %26 = arith.maximumf %24, %25 : vector<1024x128xf32>
    %27 = vector.extract_strided_slice %6 {offsets = [0, 384], sizes = [1024, 128], strides = [1, 1]} : vector<1024x512xf32> to vector<1024x128xf32>
    %28 = arith.mulf %27, %27 : vector<1024x128xf32>
    %29 = tpu.concatenate %26, %28 in 1 : vector<1024x128xf32>, vector<1024x128xf32> -> vector<1024x256xf32>
    %c0_15 = arith.constant 0 : index
    %c0_16 = arith.constant 0 : index
    %30 = vector.load %arg5[%c0_15, %c0_16] : memref<1x256xf32, #tpu.memory_space<vmem>>, vector<1x256xf32>
    %31 = tpu.transpose %29, [1, 0] : vector<1024x256xf32> -> vector<256x1024xf32>
    %cst_17 = arith.constant dense<0.000000e+00> : vector<1x1024xf32>
    %32 = tpu.matmul %30, %31, %cst_17 {dimension_numbers = #tpu.dot_dimension_numbers<[1], [0], [0], [1], [0, 0, 1, 1], [], []>} : vector<1x256xf32>, vector<256x1024xf32>, vector<1x1024xf32> -> vector<1x1024xf32>
    %33 = vector.shape_cast %32 : vector<1x1024xf32> to vector<1x1x1024xf32>
    %c0_18 = arith.constant 0 : index
    %c0_19 = arith.constant 0 : index
    %c0_20 = arith.constant 0 : index
    %34 = vector.load %arg6[%c0_18, %c0_19, %c0_20] : memref<1x1x1024xf32, #tpu.memory_space<vmem>>, vector<1x1x1024xf32>
    tpu.vector_store %arg6[%c0_18, %c0_19, %c0_20], %33 {strides = array<i32>} : memref<1x1x1024xf32, #tpu.memory_space<vmem>>, vector<1x1x1024xf32>,
    return
  }
  func.func @transform_0(%arg0: i32) -> (i32, i32) {
    %c0_i32 = arith.constant 0 : i32
    %c0_i32_0 = arith.constant 0 : i32
    return %arg0, %c0_i32 : i32, i32
  }
  func.func @transform_1(%arg0: i32) -> (i32, i32) {
    %c0_i32 = arith.constant 0 : i32
    %c0_i32_0 = arith.constant 0 : i32
    %c0_i32_1 = arith.constant 0 : i32
    return %c0_i32, %c0_i32_0 : i32, i32
  }
  func.func @transform_2(%arg0: i32) -> (i32, i32) {
    %c0_i32 = arith.constant 0 : i32
    %c0_i32_0 = arith.constant 0 : i32
    %c0_i32_1 = arith.constant 0 : i32
    return %c0_i32, %c0_i32_0 : i32, i32
  }
  func.func @transform_3(%arg0: i32) -> (i32, i32, i32) {
    %c0_i32 = arith.constant 0 : i32
    %c0_i32_0 = arith.constant 0 : i32
    %c0_i32_1 = arith.constant 0 : i32
    %c0_i32_2 = arith.constant 0 : i32
    return %c0_i32, %c0_i32_0, %c0_i32_1 : i32, i32, i32
  }
  func.func @transform_4(%arg0: i32) -> (i32, i32) {
    %c0_i32 = arith.constant 0 : i32
    %c0_i32_0 = arith.constant 0 : i32
    %c0_i32_1 = arith.constant 0 : i32
    return %c0_i32, %c0_i32_0 : i32, i32
  }
  func.func @transform_5(%arg0: i32) -> (i32, i32, i32) {
    %c0_i32 = arith.constant 0 : i32
    %c0_i32_0 = arith.constant 0 : i32
    %c0_i32_1 = arith.constant 0 : i32
    return %arg0, %c0_i32, %c0_i32_0 : i32, i32, i32
  }
}

</mosaic_0001>

<llo_original>
// kernel: tpu_custom_call.1
$region0: #{tpu_custom_call.1}
  #allocation0 [shape = 'u32[]', space=smem, size = 0x4, offset = 0x4, fixed_abs, tag = 'smem constant byte address 0x4 - core index']
  #allocation1 [shape = 'u32[72,128]{1,0:T(1,128)}', space=vmem, size = 0x9000, scoped, tag = 'internal scratch']
  %s0 = inlined_call_operand.vmem [shape: f32[2048,8], index: 0, kind: input, shape index: {}]
  %s1 = inlined_call_operand.vmem [shape: bf16[8,512], index: 1, kind: input, shape index: {}]
  %s2 = inlined_call_operand.vmem [shape: f32[1,512], index: 2, kind: input, shape index: {}]
  %s3 = inlined_call_operand.vmem [shape: bf16[2,128,128], index: 3, kind: input, shape index: {}]
  %s4 = inlined_call_operand.vmem [shape: f32[1,256], index: 4, kind: input, shape index: {}]
  %s5 = inlined_call_operand.hbm [shape: f32[2,1,1024], index: 5, kind: output, shape index: {}]
  %s6 = sld [smem:[#allocation0]]
  $region53: #{tpu_custom_call.1} parent=0
    _
  %s8 = ssub.s32 1, %s6
  %s9 = scalar_select 0, %s8, %s6
  $region1: #{tpu_custom_call.1} parent=0
    #allocation2 [shape = 'u8[8192]{0}', space=vmem, size = 0x2000, scoped, tag = 'output window, operand 0']
    #allocation3 [shape = 's32[2]{0}', space=sflag, size = 0x8, scoped, tag = 'scoped memory for tpu_custom_call.1']
    %10 = vsyncpa [#allocation3], 0
    %s11 = scalar_lea.sflag [#allocation3], 1
    %12 = vsyncpa %s11, 0
    loop: start=0, step=1, limit=4
    $region2: #{tpu_custom_call.1} parent=1 // loop_pre_header
      _
    $region3: #{tpu_custom_call.1} parent=1 // loop_header
      %s14 = sphi 0, %s18
      %p15 = scmp.ge.s32.totalorder %s14, 4
      %s24 = sphi 0, %s26
      %s27 = sphi 0, %s24
      %s28 = sphi 0, %s27
      %s44 = sphi 0, %s28
      %s48 = sphi 0, %s48
      %s50 = sphi 0, %s48
      %s51 = sphi 0, %s50
      %s65 = sphi 0, %s51
      %s69 = sphi 0, %s69
      %s71 = sphi 0, %s69
      %s72 = sphi 0, %s71
      %s86 = sphi 0, %s72
      %s90 = sphi 0, %s90
      %s92 = sphi 0, %s90
      %s93 = sphi 0, %s92
      %s107 = sphi 0, %s93
      %s111 = sphi 0, %s111
      %s113 = sphi 0, %s111
      %s114 = sphi 0, %s113
      %s128 = sphi 0, %s114
      %s134 = sphi 0, %s136
      %s137 = sphi 0, %s134
      %s138 = sphi 0, %s137
      %s154 = sphi 0, %s138
    $region4: #{tpu_custom_call.1} parent=1 // loop_header_branch
      %17 = sbr.rel (%p15) target = $region8
    $region5: #{tpu_custom_call.1} parent=1 // loop_body
      %s19 = ssub.s32 %s14, 1
      %s20 = ssub.s32 %s14, 2
      %s21 = sadd.s32 %s14, 1
      %s22 = ssub.s32 %s14, %s21
      %p23 = scmp.eq.s32.totalorder %s22, 0
      %s25 = sadd.s32 %s24, 1
      %s26 = scalar_select %p23, %s24, %s25
      %p29 = pneg %p23
      %p30 = scmp.eq.s32.totalorder %s14, 1
      %p31 = por %p29, %p30
      %p32 = scmp.ne.s32.totalorder %s24, %s27
      %p33 = scmp.eq.s32.totalorder %s14, 0
      %p34 = por %p32, %p33
      %p35 = scmp.ne.s32.totalorder %s24, %s27
      %p36 = scmp.eq.s32.totalorder %s19, 1
      %p37 = por %p35, %p36
      %p38 = scmp.ne.s32.totalorder %s27, %s28
      %p39 = scmp.eq.s32.totalorder %s19, 0
      %p40 = por %p38, %p39
      %p41 = scmp.ne.s32.totalorder %s27, %s28
      %p42 = scmp.eq.s32.totalorder %s20, 1
      %p43 = por %p41, %p42
      %p45 = scmp.ne.s32.totalorder %s28, %s44
      %p46 = scmp.eq.s32.totalorder %s20, 0
      %p47 = por %p45, %p46
      %s49 = sadd.s32 %s48, 1
      %p52 = scmp.eq.s32.totalorder %s14, 1
      %p53 = scmp.ne.s32.totalorder %s48, %s50
      %p54 = scmp.eq.s32.totalorder %s14, 0
      %p55 = por %p53, %p54
      %p56 = scmp.ne.s32.totalorder %s48, %s50
      %p57 = scmp.eq.s32.totalorder %s19, 1
      %p58 = por %p56, %p57
      %p59 = scmp.ne.s32.totalorder %s50, %s51
      %p60 = scmp.eq.s32.totalorder %s19, 0
      %p61 = por %p59, %p60
      %p62 = scmp.ne.s32.totalorder %s50, %s51
      %p63 = scmp.eq.s32.totalorder %s20, 1
      %p64 = por %p62, %p63
      %p66 = scmp.ne.s32.totalorder %s51, %s65
      %p67 = scmp.eq.s32.totalorder %s20, 0
      %p68 = por %p66, %p67
      %s70 = sadd.s32 %s69, 1
      %p73 = scmp.eq.s32.totalorder %s14, 1
      %p74 = scmp.ne.s32.totalorder %s69, %s71
      %p75 = scmp.eq.s32.totalorder %s14, 0
      %p76 = por %p74, %p75
      %p77 = scmp.ne.s32.totalorder %s69, %s71
      %p78 = scmp.eq.s32.totalorder %s19, 1
      %p79 = por %p77, %p78
      %p80 = scmp.ne.s32.totalorder %s71, %s72
      %p81 = scmp.eq.s32.totalorder %s19, 0
      %p82 = por %p80, %p81
      %p83 = scmp.ne.s32.totalorder %s71, %s72
      %p84 = scmp.eq.s32.totalorder %s20, 1
      %p85 = por %p83, %p84
      %p87 = scmp.ne.s32.totalorder %s72, %s86
      %p88 = scmp.eq.s32.totalorder %s20, 0
      %p89 = por %p87, %p88
      %s91 = sadd.s32 %s90, 1
      %p94 = scmp.eq.s32.totalorder %s14, 1
      %p95 = scmp.ne.s32.totalorder %s90, %s92
      %p96 = scmp.eq.s32.totalorder %s14, 0
      %p97 = por %p95, %p96
      %p98 = scmp.ne.s32.totalorder %s90, %s92
      %p99 = scmp.eq.s32.totalorder %s19, 1
      %p100 = por %p98, %p99
      %p101 = scmp.ne.s32.totalorder %s92, %s93
      %p102 = scmp.eq.s32.totalorder %s19, 0
      %p103 = por %p101, %p102
      %p104 = scmp.ne.s32.totalorder %s92, %s93
      %p105 = scmp.eq.s32.totalorder %s20, 1
      %p106 = por %p104, %p105
      %p108 = scmp.ne.s32.totalorder %s93, %s107
      %p109 = scmp.eq.s32.totalorder %s20, 0
      %p110 = por %p108, %p109
      %s112 = sadd.s32 %s111, 1
      %p115 = scmp.eq.s32.totalorder %s14, 1
      %p116 = scmp.ne.s32.totalorder %s111, %s113
      %p117 = scmp.eq.s32.totalorder %s14, 0
      %p118 = por %p116, %p117
      %p119 = scmp.ne.s32.totalorder %s111, %s113
      %p120 = scmp.eq.s32.totalorder %s19, 1
      %p121 = por %p119, %p120
      %p122 = scmp.ne.s32.totalorder %s113, %s114
      %p123 = scmp.eq.s32.totalorder %s19, 0
      %p124 = por %p122, %p123
      %p125 = scmp.ne.s32.totalorder %s113, %s114
      %p126 = scmp.eq.s32.totalorder %s20, 1
      %p127 = por %p125, %p126
      %p129 = scmp.ne.s32.totalorder %s114, %s128
      %p130 = scmp.eq.s32.totalorder %s20, 0
      %p131 = por %p129, %p130
      %s132 = ssub.s32 %s14, %s21
      %p133 = scmp.eq.s32.totalorder %s132, 0
      %s135 = sadd.s32 %s134, 1
      %s136 = scalar_select %p133, %s134, %s135
      %p139 = pneg %p133
      %p140 = scmp.eq.s32.totalorder %s14, 1
      %p141 = por %p139, %p140
      %p142 = scmp.ne.s32.totalorder %s134, %s137
      %p143 = scmp.eq.s32.totalorder %s14, 0
      %p144 = por %p142, %p143
      %p145 = scmp.ne.s32.totalorder %s134, %s137
      %p146 = scmp.eq.s32.totalorder %s19, 1
      %p147 = por %p145, %p146
      %p148 = scmp.ne.s32.totalorder %s137, %s138
      %p149 = scmp.eq.s32.totalorder %s19, 0
      %p150 = por %p148, %p149
      %p151 = scmp.ne.s32.totalorder %s137, %s138
      %p152 = scmp.eq.s32.totalorder %s20, 1
      %p153 = por %p151, %p152
      %p155 = scmp.ne.s32.totalorder %s138, %s154
      %p156 = scmp.eq.s32.totalorder %s20, 0
      %p157 = por %p155, %p156
      %p158 = scmp.le.s32.totalorder 1, %s14
      %p159 = scmp.lt.s32.totalorder %s14, 3
      %p160 = pnand %p158, %p159
      %p161 = pneg %p160
      // Predicated region
      $region9: #{tpu_custom_call.1} parent=5 // pred_check
        _
      $region10: #{tpu_custom_call.1} parent=5 // pred_check_branch
        %163 = sbr.rel (%p160) target = $region12
      $region11: #{tpu_custom_call.1} parent=5 // pred_region
        %s164 = ssub.s32 %s14, 1
        // Predicated region
        $region13: #{tpu_custom_call.1} parent=11 // pred_check
          %p165 = pneg %p61
        $region14: #{tpu_custom_call.1} parent=11 // pred_check_branch
          %167 = sbr.rel (%p165) target = $region16
        $region15: #{tpu_custom_call.1} parent=11 // pred_region
          _
        $region16: #{tpu_custom_call.1} parent=11 // pred_fallthru
          _
        // Predicated region
        $region17: #{tpu_custom_call.1} parent=11 // pred_check
          %p168 = pneg %p82
        $region18: #{tpu_custom_call.1} parent=11 // pred_check_branch
          %170 = sbr.rel (%p168) target = $region20
        $region19: #{tpu_custom_call.1} parent=11 // pred_region
          _
        $region20: #{tpu_custom_call.1} parent=11 // pred_fallthru
          _
        // Predicated region
        $region21: #{tpu_custom_call.1} parent=11 // pred_check
          %p171 = pneg %p103
        $region22: #{tpu_custom_call.1} parent=11 // pred_check_branch
          %173 = sbr.rel (%p171) target = $region24
        $region23: #{tpu_custom_call.1} parent=11 // pred_region
          _
        $region24: #{tpu_custom_call.1} parent=11 // pred_fallthru
          _
        // Predicated region
        $region25: #{tpu_custom_call.1} parent=11 // pred_check
          %p174 = pneg %p124
        $region26: #{tpu_custom_call.1} parent=11 // pred_check_branch
          %176 = sbr.rel (%p174) target = $region28
        $region27: #{tpu_custom_call.1} parent=11 // pred_region
          _
        $region28: #{tpu_custom_call.1} parent=11 // pred_fallthru
          _
      $region12: #{tpu_custom_call.1} parent=5 // pred_fallthru
        _
      %p177 = scmp.lt.s32.totalorder %s14, 2
      // Predicated region
      $region29: #{tpu_custom_call.1} parent=5 // pred_check
        %p178 = pneg %p177
      $region30: #{tpu_custom_call.1} parent=5 // pred_check_branch
        %180 = sbr.rel (%p178) target = $region32
      $region31: #{tpu_custom_call.1} parent=5 // pred_region
        // Predicated region
        $region33: #{tpu_custom_call.1} parent=31 // pred_check
          %p181 = pneg %p34
        $region34: #{tpu_custom_call.1} parent=31 // pred_check_branch
          %183 = sbr.rel (%p181) target = $region36
        $region35: #{tpu_custom_call.1} parent=31 // pred_region
          %s184 = smul.u32 128, %s14
          %p185 = scmp.lt.s32.totalorder %s184, 255
          %s186 = scalar_select %p185, %s184, 255
          %s187 = smul.addr %s186, 8
          %s188 = scalar_lea.vmem %s0, %s187
          %s189 = smul.u32 128, %s14
        $region36: #{tpu_custom_call.1} parent=31 // pred_fallthru
          _
      $region32: #{tpu_custom_call.1} parent=5 // pred_fallthru
        _
      %p190 = scmp.le.s32.totalorder 1, %s14
      %p191 = scmp.lt.s32.totalorder %s14, 3
      %p192 = pnand %p190, %p191
      %p193 = pneg %p192
      // Predicated region
      $region37: #{tpu_custom_call.1} parent=5 // pred_check
        _
      $region38: #{tpu_custom_call.1} parent=5 // pred_check_branch
        %195 = sbr.rel (%p192) target = $region40
      $region39: #{tpu_custom_call.1} parent=5 // pred_region
        %s196 = ssub.s32 %s14, 1
        %s197 = smul.u32 128, %s19
        %p198 = scmp.lt.s32.totalorder %s197, 255
        %s199 = scalar_select %p198, %s197, 255
        %s200 = smul.addr %s199, 8
        %s201 = scalar_lea.vmem %s0, %s200
        %p202 = pneg %p40
        %p203 = pneg %p37
        %p204 = pneg %p61
        %p205 = pneg %p58
        %p206 = pneg %p82
        %p207 = pneg %p79
        %p208 = pneg %p103
        %p209 = pneg %p100
        %p210 = pneg %p124
        %p211 = pneg %p121
        %p212 = pneg %p150
        %p213 = pneg %p147
        %s214 = sand.u32 %s137, 1
        %s215 = scalar_lea.sflag [#allocation3], %s214
        %s216 = sand.u32 %s137, 1
        %s217 = smul.addr %s216, 8
        %s218 = scalar_lea.vmem [#allocation2], %s217
        %s219 = smul.u32 128, %s19
        %p220 = scmp.lt.s32.totalorder %s219, 255
        %s221 = scalar_select %p220, %s219, 255
        %s222 = smul.addr %s221, 8
        %s223 = scalar_lea.vmem %s0, %s222
        %s224 = smul.u32 128, %s19
        %v226 = vld [vmem:[%s223] sm:$0xff]
        %v227 = vld [vmem:[%s223 + $0x8] sm:$0xff]
        %v228 = vld [vmem:[%s223 + $0x10] sm:$0xff]
        %v229 = vld [vmem:[%s223 + $0x18] sm:$0xff]
        %v230 = vld [vmem:[%s223 + $0x20] sm:$0xff]
        %v231 = vld [vmem:[%s223 + $0x28] sm:$0xff]
        %v232 = vld [vmem:[%s223 + $0x30] sm:$0xff]
        %v233 = vld [vmem:[%s223 + $0x38] sm:$0xff]
        %v234 = vld [vmem:[%s223 + $0x40] sm:$0xff]
        %v235 = vld [vmem:[%s223 + $0x48] sm:$0xff]
        %v236 = vld [vmem:[%s223 + $0x50] sm:$0xff]
        %v237 = vld [vmem:[%s223 + $0x58] sm:$0xff]
        %v238 = vld [vmem:[%s223 + $0x60] sm:$0xff]
        %v239 = vld [vmem:[%s223 + $0x68] sm:$0xff]
        %v240 = vld [vmem:[%s223 + $0x70] sm:$0xff]
        %v241 = vld [vmem:[%s223 + $0x78] sm:$0xff]
        %v242 = vld [vmem:[%s223 + $0x80] sm:$0xff]
        %v243 = vld [vmem:[%s223 + $0x88] sm:$0xff]
        %v244 = vld [vmem:[%s223 + $0x90] sm:$0xff]
        %v245 = vld [vmem:[%s223 + $0x98] sm:$0xff]
        %v246 = vld [vmem:[%s223 + $0xa0] sm:$0xff]
        %v247 = vld [vmem:[%s223 + $0xa8] sm:$0xff]
        %v248 = vld [vmem:[%s223 + $0xb0] sm:$0xff]
        %v249 = vld [vmem:[%s223 + $0xb8] sm:$0xff]
        %v250 = vld [vmem:[%s223 + $0xc0] sm:$0xff]
        %v251 = vld [vmem:[%s223 + $0xc8] sm:$0xff]
        %v252 = vld [vmem:[%s223 + $0xd0] sm:$0xff]
        %v253 = vld [vmem:[%s223 + $0xd8] sm:$0xff]
        %v254 = vld [vmem:[%s223 + $0xe0] sm:$0xff]
        %v255 = vld [vmem:[%s223 + $0xe8] sm:$0xff]
        %v256 = vld [vmem:[%s223 + $0xf0] sm:$0xff]
        %v257 = vld [vmem:[%s223 + $0xf8] sm:$0xff]
        %v258 = vld [vmem:[%s223 + $0x100] sm:$0xff]
        %v259 = vld [vmem:[%s223 + $0x108] sm:$0xff]
        %v260 = vld [vmem:[%s223 + $0x110] sm:$0xff]
        %v261 = vld [vmem:[%s223 + $0x118] sm:$0xff]
        %v262 = vld [vmem:[%s223 + $0x120] sm:$0xff]
        %v263 = vld [vmem:[%s223 + $0x128] sm:$0xff]
        %v264 = vld [vmem:[%s223 + $0x130] sm:$0xff]
        %v265 = vld [vmem:[%s223 + $0x138] sm:$0xff]
        %v266 = vld [vmem:[%s223 + $0x140] sm:$0xff]
        %v267 = vld [vmem:[%s223 + $0x148] sm:$0xff]
        %v268 = vld [vmem:[%s223 + $0x150] sm:$0xff]
        %v269 = vld [vmem:[%s223 + $0x158] sm:$0xff]
        %v270 = vld [vmem:[%s223 + $0x160] sm:$0xff]
        %v271 = vld [vmem:[%s223 + $0x168] sm:$0xff]
        %v272 = vld [vmem:[%s223 + $0x170] sm:$0xff]
        %v273 = vld [vmem:[%s223 + $0x178] sm:$0xff]
        %v274 = vld [vmem:[%s223 + $0x180] sm:$0xff]
        %v275 = vld [vmem:[%s223 + $0x188] sm:$0xff]
        %v276 = vld [vmem:[%s223 + $0x190] sm:$0xff]
        %v277 = vld [vmem:[%s223 + $0x198] sm:$0xff]
        %v278 = vld [vmem:[%s223 + $0x1a0] sm:$0xff]
        %v279 = vld [vmem:[%s223 + $0x1a8] sm:$0xff]
        %v280 = vld [vmem:[%s223 + $0x1b0] sm:$0xff]
        %v281 = vld [vmem:[%s223 + $0x1b8] sm:$0xff]
        %v282 = vld [vmem:[%s223 + $0x1c0] sm:$0xff]
        %v283 = vld [vmem:[%s223 + $0x1c8] sm:$0xff]
        %v284 = vld [vmem:[%s223 + $0x1d0] sm:$0xff]
        %v285 = vld [vmem:[%s223 + $0x1d8] sm:$0xff]
        %v286 = vld [vmem:[%s223 + $0x1e0] sm:$0xff]
        %v287 = vld [vmem:[%s223 + $0x1e8] sm:$0xff]
        %v288 = vld [vmem:[%s223 + $0x1f0] sm:$0xff]
        %v289 = vld [vmem:[%s223 + $0x1f8] sm:$0xff]
        %v290 = vld [vmem:[%s223 + $0x200] sm:$0xff]
        %v291 = vld [vmem:[%s223 + $0x208] sm:$0xff]
        %v292 = vld [vmem:[%s223 + $0x210] sm:$0xff]
        %v293 = vld [vmem:[%s223 + $0x218] sm:$0xff]
        %v294 = vld [vmem:[%s223 + $0x220] sm:$0xff]
        %v295 = vld [vmem:[%s223 + $0x228] sm:$0xff]
        %v296 = vld [vmem:[%s223 + $0x230] sm:$0xff]
        %v297 = vld [vmem:[%s223 + $0x238] sm:$0xff]
        %v298 = vld [vmem:[%s223 + $0x240] sm:$0xff]
        %v299 = vld [vmem:[%s223 + $0x248] sm:$0xff]
        %v300 = vld [vmem:[%s223 + $0x250] sm:$0xff]
        %v301 = vld [vmem:[%s223 + $0x258] sm:$0xff]
        %v302 = vld [vmem:[%s223 + $0x260] sm:$0xff]
        %v303 = vld [vmem:[%s223 + $0x268] sm:$0xff]
        %v304 = vld [vmem:[%s223 + $0x270] sm:$0xff]
        %v305 = vld [vmem:[%s223 + $0x278] sm:$0xff]
        %v306 = vld [vmem:[%s223 + $0x280] sm:$0xff]
        %v307 = vld [vmem:[%s223 + $0x288] sm:$0xff]
        %v308 = vld [vmem:[%s223 + $0x290] sm:$0xff]
        %v309 = vld [vmem:[%s223 + $0x298] sm:$0xff]
        %v310 = vld [vmem:[%s223 + $0x2a0] sm:$0xff]
        %v311 = vld [vmem:[%s223 + $0x2a8] sm:$0xff]
        %v312 = vld [vmem:[%s223 + $0x2b0] sm:$0xff]
        %v313 = vld [vmem:[%s223 + $0x2b8] sm:$0xff]
        %v314 = vld [vmem:[%s223 + $0x2c0] sm:$0xff]
        %v315 = vld [vmem:[%s223 + $0x2c8] sm:$0xff]
        %v316 = vld [vmem:[%s223 + $0x2d0] sm:$0xff]
        %v317 = vld [vmem:[%s223 + $0x2d8] sm:$0xff]
        %v318 = vld [vmem:[%s223 + $0x2e0] sm:$0xff]
        %v319 = vld [vmem:[%s223 + $0x2e8] sm:$0xff]
        %v320 = vld [vmem:[%s223 + $0x2f0] sm:$0xff]
        %v321 = vld [vmem:[%s223 + $0x2f8] sm:$0xff]
        %v322 = vld [vmem:[%s223 + $0x300] sm:$0xff]
        %v323 = vld [vmem:[%s223 + $0x308] sm:$0xff]
        %v324 = vld [vmem:[%s223 + $0x310] sm:$0xff]
        %v325 = vld [vmem:[%s223 + $0x318] sm:$0xff]
        %v326 = vld [vmem:[%s223 + $0x320] sm:$0xff]
        %v327 = vld [vmem:[%s223 + $0x328] sm:$0xff]
        %v328 = vld [vmem:[%s223 + $0x330] sm:$0xff]
        %v329 = vld [vmem:[%s223 + $0x338] sm:$0xff]
        %v330 = vld [vmem:[%s223 + $0x340] sm:$0xff]
        %v331 = vld [vmem:[%s223 + $0x348] sm:$0xff]
        %v332 = vld [vmem:[%s223 + $0x350] sm:$0xff]
        %v333 = vld [vmem:[%s223 + $0x358] sm:$0xff]
        %v334 = vld [vmem:[%s223 + $0x360] sm:$0xff]
        %v335 = vld [vmem:[%s223 + $0x368] sm:$0xff]
        %v336 = vld [vmem:[%s223 + $0x370] sm:$0xff]
        %v337 = vld [vmem:[%s223 + $0x378] sm:$0xff]
        %v338 = vld [vmem:[%s223 + $0x380] sm:$0xff]
        %v339 = vld [vmem:[%s223 + $0x388] sm:$0xff]
        %v340 = vld [vmem:[%s223 + $0x390] sm:$0xff]
        %v341 = vld [vmem:[%s223 + $0x398] sm:$0xff]
        %v342 = vld [vmem:[%s223 + $0x3a0] sm:$0xff]
        %v343 = vld [vmem:[%s223 + $0x3a8] sm:$0xff]
        %v344 = vld [vmem:[%s223 + $0x3b0] sm:$0xff]
        %v345 = vld [vmem:[%s223 + $0x3b8] sm:$0xff]
        %v346 = vld [vmem:[%s223 + $0x3c0] sm:$0xff]
        %v347 = vld [vmem:[%s223 + $0x3c8] sm:$0xff]
        %v348 = vld [vmem:[%s223 + $0x3d0] sm:$0xff]
        %v349 = vld [vmem:[%s223 + $0x3d8] sm:$0xff]
        %v350 = vld [vmem:[%s223 + $0x3e0] sm:$0xff]
        %v351 = vld [vmem:[%s223 + $0x3e8] sm:$0xff]
        %v352 = vld [vmem:[%s223 + $0x3f0] sm:$0xff]
        %v353 = vld [vmem:[%s223 + $0x3f8] sm:$0xff]
        %v354 = vpack.c.bf16 %v227, %v226
        %v355 = vpack.c.bf16 %v229, %v228
        %v356 = vpack.c.bf16 %v231, %v230
        %v357 = vpack.c.bf16 %v233, %v232
        %v358 = vpack.c.bf16 %v235, %v234
        %v359 = vpack.c.bf16 %v237, %v236
        %v360 = vpack.c.bf16 %v239, %v238
        %v361 = vpack.c.bf16 %v241, %v240
        %v362 = vpack.c.bf16 %v243, %v242
        %v363 = vpack.c.bf16 %v245, %v244
        %v364 = vpack.c.bf16 %v247, %v246
        %v365 = vpack.c.bf16 %v249, %v248
        %v366 = vpack.c.bf16 %v251, %v250
        %v367 = vpack.c.bf16 %v253, %v252
        %v368 = vpack.c.bf16 %v255, %v254
        %v369 = vpack.c.bf16 %v257, %v256
        %v370 = vpack.c.bf16 %v259, %v258
        %v371 = vpack.c.bf16 %v261, %v260
        %v372 = vpack.c.bf16 %v263, %v262
        %v373 = vpack.c.bf16 %v265, %v264
        %v374 = vpack.c.bf16 %v267, %v266
        %v375 = vpack.c.bf16 %v269, %v268
        %v376 = vpack.c.bf16 %v271, %v270
        %v377 = vpack.c.bf16 %v273, %v272
        %v378 = vpack.c.bf16 %v275, %v274
        %v379 = vpack.c.bf16 %v277, %v276
        %v380 = vpack.c.bf16 %v279, %v278
        %v381 = vpack.c.bf16 %v281, %v280
        %v382 = vpack.c.bf16 %v283, %v282
        %v383 = vpack.c.bf16 %v285, %v284
        %v384 = vpack.c.bf16 %v287, %v286
        %v385 = vpack.c.bf16 %v289, %v288
        %v386 = vpack.c.bf16 %v291, %v290
        %v387 = vpack.c.bf16 %v293, %v292
        %v388 = vpack.c.bf16 %v295, %v294
        %v389 = vpack.c.bf16 %v297, %v296
        %v390 = vpack.c.bf16 %v299, %v298
        %v391 = vpack.c.bf16 %v301, %v300
        %v392 = vpack.c.bf16 %v303, %v302
        %v393 = vpack.c.bf16 %v305, %v304
        %v394 = vpack.c.bf16 %v307, %v306
        %v395 = vpack.c.bf16 %v309, %v308
        %v396 = vpack.c.bf16 %v311, %v310
        %v397 = vpack.c.bf16 %v313, %v312
        %v398 = vpack.c.bf16 %v315, %v314
        %v399 = vpack.c.bf16 %v317, %v316
        %v400 = vpack.c.bf16 %v319, %v318
        %v401 = vpack.c.bf16 %v321, %v320
        %v402 = vpack.c.bf16 %v323, %v322
        %v403 = vpack.c.bf16 %v325, %v324
        %v404 = vpack.c.bf16 %v327, %v326
        %v405 = vpack.c.bf16 %v329, %v328
        %v406 = vpack.c.bf16 %v331, %v330
        %v407 = vpack.c.bf16 %v333, %v332
        %v408 = vpack.c.bf16 %v335, %v334
        %v409 = vpack.c.bf16 %v337, %v336
        %v410 = vpack.c.bf16 %v339, %v338
        %v411 = vpack.c.bf16 %v341, %v340
        %v412 = vpack.c.bf16 %v343, %v342
        %v413 = vpack.c.bf16 %v345, %v344
        %v414 = vpack.c.bf16 %v347, %v346
        %v415 = vpack.c.bf16 %v349, %v348
        %v416 = vpack.c.bf16 %v351, %v350
        %v417 = vpack.c.bf16 %v353, %v352
        %v418 = vld [vmem:[%s1] sm:$0xff]
        %v419 = vld [vmem:[%s1 + $0x8] sm:$0xff]
        %v420 = vld [vmem:[%s2] sm:$0xf]
        %v422 = vperm.slane %v420, 0
        %v423 = vperm.slane %v420, 1
        %v424 = vperm.slane %v420, 2
        %v425 = vperm.slane %v420, 3
        %v432 = vunpack.c.l.b16 %v418
        %v433 = vunpack.c.h.b16 %v418
        %v434 = vunpack.c.l.b16 %v419
        %v435 = vunpack.c.h.b16 %v419
        %v436 = vpack.c.b16 %v432, %v432
        %v437 = vpack.c.b16 %v433, %v433
        %v438 = vpack.c.b16 %v434, %v434
        %v439 = vpack.c.b16 %v435, %v435
        %vm440 = vcmask 64512
        %v442 = vsel %vm440, %v354, 0
        %v445 = vsel %vm440, %v355, 0
        %v448 = vsel %vm440, %v356, 0
        %v451 = vsel %vm440, %v357, 0
        %v454 = vsel %vm440, %v358, 0
        %v457 = vsel %vm440, %v359, 0
        %v460 = vsel %vm440, %v360, 0
        %v463 = vsel %vm440, %v361, 0
        %v466 = vsel %vm440, %v362, 0
        %v469 = vsel %vm440, %v363, 0
        %v472 = vsel %vm440, %v364, 0
        %v475 = vsel %vm440, %v365, 0
        %v478 = vsel %vm440, %v366, 0
        %v481 = vsel %vm440, %v367, 0
        %v484 = vsel %vm440, %v368, 0
        %v487 = vsel %vm440, %v369, 0
        %v490 = vsel %vm440, %v370, 0
        %v493 = vsel %vm440, %v371, 0
        %v496 = vsel %vm440, %v372, 0
        %v499 = vsel %vm440, %v373, 0
        %v502 = vsel %vm440, %v374, 0
        %v505 = vsel %vm440, %v375, 0
        %v508 = vsel %vm440, %v376, 0
        %v511 = vsel %vm440, %v377, 0
        %v514 = vsel %vm440, %v378, 0
        %v517 = vsel %vm440, %v379, 0
        %v520 = vsel %vm440, %v380, 0
        %v523 = vsel %vm440, %v381, 0
        %v526 = vsel %vm440, %v382, 0
        %v529 = vsel %vm440, %v383, 0
        %v532 = vsel %vm440, %v384, 0
        %v535 = vsel %vm440, %v385, 0
        %v538 = vsel %vm440, %v386, 0
        %v541 = vsel %vm440, %v387, 0
        %v544 = vsel %vm440, %v388, 0
        %v547 = vsel %vm440, %v389, 0
        %v550 = vsel %vm440, %v390, 0
        %v553 = vsel %vm440, %v391, 0
        %v556 = vsel %vm440, %v392, 0
        %v559 = vsel %vm440, %v393, 0
        %v562 = vsel %vm440, %v394, 0
        %v565 = vsel %vm440, %v395, 0
        %v568 = vsel %vm440, %v396, 0
        %v571 = vsel %vm440, %v397, 0
        %v574 = vsel %vm440, %v398, 0
        %v577 = vsel %vm440, %v399, 0
        %v580 = vsel %vm440, %v400, 0
        %v583 = vsel %vm440, %v401, 0
        %v586 = vsel %vm440, %v402, 0
        %v589 = vsel %vm440, %v403, 0
        %v592 = vsel %vm440, %v404, 0
        %v595 = vsel %vm440, %v405, 0
        %v598 = vsel %vm440, %v406, 0
        %v601 = vsel %vm440, %v407, 0
        %v604 = vsel %vm440, %v408, 0
        %v607 = vsel %vm440, %v409, 0
        %v610 = vsel %vm440, %v410, 0
        %v613 = vsel %vm440, %v411, 0
        %v616 = vsel %vm440, %v412, 0
        %v619 = vsel %vm440, %v413, 0
        %v622 = vsel %vm440, %v414, 0
        %v625 = vsel %vm440, %v415, 0
        %v628 = vsel %vm440, %v416, 0
        %v631 = vsel %vm440, %v417, 0
        %vm633 = vcmask 1043456
        %v635 = vsel %vm633, %v436, 0
        %v638 = vsel %vm633, %v437, 0
        %v641 = vsel %vm633, %v438, 0
        %v644 = vsel %vm633, %v439, 0
        %646 = vmatpush.bf16.msra.mxu0 0
        %647 = vmatpush.bf16.msra.mxu0 0
        %648 = vmatpush.bf16.msra.mxu0 0
        %649 = vmatpush.bf16.msra.mxu0 0
        %650 = vmatpush.bf16.msra.mxu0 0
        %651 = vmatpush.bf16.msra.mxu0 0
        %652 = vmatpush.bf16.msra.mxu0 0
        %653 = vmatpush.bf16.msra.mxu0 %v635
        %654 = vmatmul.bf16.gmra.mxu0 %v442
        %v655 = vpop.f32.mrf.mxu0
        %v656 = vadd.f32 %v422, %v655
        %v657 = vpop.f32.mrf.mxu0
        %v658 = vadd.f32 %v422, %v657
        %659 = vmatmul.bf16.gmra.mxu0 %v445
        %v660 = vpop.f32.mrf.mxu0
        %v661 = vadd.f32 %v422, %v660
        %v662 = vpop.f32.mrf.mxu0
        %v663 = vadd.f32 %v422, %v662
        %664 = vmatmul.bf16.gmra.mxu0 %v448
        %v665 = vpop.f32.mrf.mxu0
        %v666 = vadd.f32 %v422, %v665
        %v667 = vpop.f32.mrf.mxu0
        %v668 = vadd.f32 %v422, %v667
        %669 = vmatmul.bf16.gmra.mxu0 %v451
        %v670 = vpop.f32.mrf.mxu0
        %v671 = vadd.f32 %v422, %v670
        %v672 = vpop.f32.mrf.mxu0
        %v673 = vadd.f32 %v422, %v672
        %674 = vmatmul.bf16.gmra.mxu0 %v454
        %v675 = vpop.f32.mrf.mxu0
        %v676 = vadd.f32 %v422, %v675
        %v677 = vpop.f32.mrf.mxu0
        %v678 = vadd.f32 %v422, %v677
        %679 = vmatmul.bf16.gmra.mxu0 %v457
        %v680 = vpop.f32.mrf.mxu0
        %v681 = vadd.f32 %v422, %v680
        %v682 = vpop.f32.mrf.mxu0
        %v683 = vadd.f32 %v422, %v682
        %684 = vmatmul.bf16.gmra.mxu0 %v460
        %v685 = vpop.f32.mrf.mxu0
        %v686 = vadd.f32 %v422, %v685
        %v687 = vpop.f32.mrf.mxu0
        %v688 = vadd.f32 %v422, %v687
        %689 = vmatmul.bf16.gmra.mxu0 %v463
        %v690 = vpop.f32.mrf.mxu0
        %v691 = vadd.f32 %v422, %v690
        %v692 = vpop.f32.mrf.mxu0
        %v693 = vadd.f32 %v422, %v692
        %694 = vmatmul.bf16.gmra.mxu0 %v466
        %v695 = vpop.f32.mrf.mxu0
        %v696 = vadd.f32 %v422, %v695
        %v697 = vpop.f32.mrf.mxu0
        %v698 = vadd.f32 %v422, %v697
        %699 = vmatmul.bf16.gmra.mxu0 %v469
        %v700 = vpop.f32.mrf.mxu0
        %v701 = vadd.f32 %v422, %v700
        %v702 = vpop.f32.mrf.mxu0
        %v703 = vadd.f32 %v422, %v702
        %704 = vmatmul.bf16.gmra.mxu0 %v472
        %v705 = vpop.f32.mrf.mxu0
        %v706 = vadd.f32 %v422, %v705
        %v707 = vpop.f32.mrf.mxu0
        %v708 = vadd.f32 %v422, %v707
        %709 = vmatmul.bf16.gmra.mxu0 %v475
        %v710 = vpop.f32.mrf.mxu0
        %v711 = vadd.f32 %v422, %v710
        %v712 = vpop.f32.mrf.mxu0
        %v713 = vadd.f32 %v422, %v712
        %714 = vmatmul.bf16.gmra.mxu0 %v478
        %v715 = vpop.f32.mrf.mxu0
        %v716 = vadd.f32 %v422, %v715
        %v717 = vpop.f32.mrf.mxu0
        %v718 = vadd.f32 %v422, %v717
        %719 = vmatmul.bf16.gmra.mxu0 %v481
        %v720 = vpop.f32.mrf.mxu0
        %v721 = vadd.f32 %v422, %v720
        %v722 = vpop.f32.mrf.mxu0
        %v723 = vadd.f32 %v422, %v722
        %724 = vmatmul.bf16.gmra.mxu0 %v484
        %v725 = vpop.f32.mrf.mxu0
        %v726 = vadd.f32 %v422, %v725
        %v727 = vpop.f32.mrf.mxu0
        %v728 = vadd.f32 %v422, %v727
        %729 = vmatmul.bf16.gmra.mxu0 %v487
        %v730 = vpop.f32.mrf.mxu0
        %v731 = vadd.f32 %v422, %v730
        %v732 = vpop.f32.mrf.mxu0
        %v733 = vadd.f32 %v422, %v732
        %734 = vmatmul.bf16.gmra.mxu0 %v490
        %v735 = vpop.f32.mrf.mxu0
        %v736 = vadd.f32 %v422, %v735
        %v737 = vpop.f32.mrf.mxu0
        %v738 = vadd.f32 %v422, %v737
        %739 = vmatmul.bf16.gmra.mxu0 %v493
        %v740 = vpop.f32.mrf.mxu0
        %v741 = vadd.f32 %v422, %v740
        %v742 = vpop.f32.mrf.mxu0
        %v743 = vadd.f32 %v422, %v742
        %744 = vmatmul.bf16.gmra.mxu0 %v496
        %v745 = vpop.f32.mrf.mxu0
        %v746 = vadd.f32 %v422, %v745
        %v747 = vpop.f32.mrf.mxu0
        %v748 = vadd.f32 %v422, %v747
        %749 = vmatmul.bf16.gmra.mxu0 %v499
        %v750 = vpop.f32.mrf.mxu0
        %v751 = vadd.f32 %v422, %v750
        %v752 = vpop.f32.mrf.mxu0
        %v753 = vadd.f32 %v422, %v752
        %754 = vmatmul.bf16.gmra.mxu0 %v502
        %v755 = vpop.f32.mrf.mxu0
        %v756 = vadd.f32 %v422, %v755
        %v757 = vpop.f32.mrf.mxu0
        %v758 = vadd.f32 %v422, %v757
        %759 = vmatmul.bf16.gmra.mxu0 %v505
        %v760 = vpop.f32.mrf.mxu0
        %v761 = vadd.f32 %v422, %v760
        %v762 = vpop.f32.mrf.mxu0
        %v763 = vadd.f32 %v422, %v762
        %764 = vmatmul.bf16.gmra.mxu0 %v508
        %v765 = vpop.f32.mrf.mxu0
        %v766 = vadd.f32 %v422, %v765
        %v767 = vpop.f32.mrf.mxu0
        %v768 = vadd.f32 %v422, %v767
        %769 = vmatmul.bf16.gmra.mxu0 %v511
        %v770 = vpop.f32.mrf.mxu0
        %v771 = vadd.f32 %v422, %v770
        %v772 = vpop.f32.mrf.mxu0
        %v773 = vadd.f32 %v422, %v772
        %774 = vmatmul.bf16.gmra.mxu0 %v514
        %v775 = vpop.f32.mrf.mxu0
        %v776 = vadd.f32 %v422, %v775
        %v777 = vpop.f32.mrf.mxu0
        %v778 = vadd.f32 %v422, %v777
        %779 = vmatmul.bf16.gmra.mxu0 %v517
        %v780 = vpop.f32.mrf.mxu0
        %v781 = vadd.f32 %v422, %v780
        %v782 = vpop.f32.mrf.mxu0
        %v783 = vadd.f32 %v422, %v782
        %784 = vmatmul.bf16.gmra.mxu0 %v520
        %v785 = vpop.f32.mrf.mxu0
        %v786 = vadd.f32 %v422, %v785
        %v787 = vpop.f32.mrf.mxu0
        %v788 = vadd.f32 %v422, %v787
        %789 = vmatmul.bf16.gmra.mxu0 %v523
        %v790 = vpop.f32.mrf.mxu0
        %v791 = vadd.f32 %v422, %v790
        %v792 = vpop.f32.mrf.mxu0
        %v793 = vadd.f32 %v422, %v792
        %794 = vmatmul.bf16.gmra.mxu0 %v526
        %v795 = vpop.f32.mrf.mxu0
        %v796 = vadd.f32 %v422, %v795
        %v797 = vpop.f32.mrf.mxu0
        %v798 = vadd.f32 %v422, %v797
        %799 = vmatmul.bf16.gmra.mxu0 %v529
        %v800 = vpop.f32.mrf.mxu0
        %v801 = vadd.f32 %v422, %v800
        %v802 = vpop.f32.mrf.mxu0
        %v803 = vadd.f32 %v422, %v802
        %804 = vmatmul.bf16.gmra.mxu0 %v532
        %v805 = vpop.f32.mrf.mxu0
        %v806 = vadd.f32 %v422, %v805
        %v807 = vpop.f32.mrf.mxu0
        %v808 = vadd.f32 %v422, %v807
        %809 = vmatmul.bf16.gmra.mxu0 %v535
        %v810 = vpop.f32.mrf.mxu0
        %v811 = vadd.f32 %v422, %v810
        %v812 = vpop.f32.mrf.mxu0
        %v813 = vadd.f32 %v422, %v812
        %814 = vmatmul.bf16.gmra.mxu0 %v538
        %v815 = vpop.f32.mrf.mxu0
        %v816 = vadd.f32 %v422, %v815
        %v817 = vpop.f32.mrf.mxu0
        %v818 = vadd.f32 %v422, %v817
        %819 = vmatmul.bf16.gmra.mxu0 %v541
        %v820 = vpop.f32.mrf.mxu0
        %v821 = vadd.f32 %v422, %v820
        %v822 = vpop.f32.mrf.mxu0
        %v823 = vadd.f32 %v422, %v822
        %824 = vmatmul.bf16.gmra.mxu0 %v544
        %v825 = vpop.f32.mrf.mxu0
        %v826 = vadd.f32 %v422, %v825
        %v827 = vpop.f32.mrf.mxu0
        %v828 = vadd.f32 %v422, %v827
        %829 = vmatmul.bf16.gmra.mxu0 %v547
        %v830 = vpop.f32.mrf.mxu0
        %v831 = vadd.f32 %v422, %v830
        %v832 = vpop.f32.mrf.mxu0
        %v833 = vadd.f32 %v422, %v832
        %834 = vmatmul.bf16.gmra.mxu0 %v550
        %v835 = vpop.f32.mrf.mxu0
        %v836 = vadd.f32 %v422, %v835
        %v837 = vpop.f32.mrf.mxu0
        %v838 = vadd.f32 %v422, %v837
        %839 = vmatmul.bf16.gmra.mxu0 %v553
        %v840 = vpop.f32.mrf.mxu0
        %v841 = vadd.f32 %v422, %v840
        %v842 = vpop.f32.mrf.mxu0
        %v843 = vadd.f32 %v422, %v842
        %844 = vmatmul.bf16.gmra.mxu0 %v556
        %v845 = vpop.f32.mrf.mxu0
        %v846 = vadd.f32 %v422, %v845
        %v847 = vpop.f32.mrf.mxu0
        %v848 = vadd.f32 %v422, %v847
        %849 = vmatmul.bf16.gmra.mxu0 %v559
        %v850 = vpop.f32.mrf.mxu0
        %v851 = vadd.f32 %v422, %v850
        %v852 = vpop.f32.mrf.mxu0
        %v853 = vadd.f32 %v422, %v852
        %854 = vmatmul.bf16.gmra.mxu0 %v562
        %v855 = vpop.f32.mrf.mxu0
        %v856 = vadd.f32 %v422, %v855
        %v857 = vpop.f32.mrf.mxu0
        %v858 = vadd.f32 %v422, %v857
        %859 = vmatmul.bf16.gmra.mxu0 %v565
        %v860 = vpop.f32.mrf.mxu0
        %v861 = vadd.f32 %v422, %v860
        %v862 = vpop.f32.mrf.mxu0
        %v863 = vadd.f32 %v422, %v862
        %864 = vmatmul.bf16.gmra.mxu0 %v568
        %v865 = vpop.f32.mrf.mxu0
        %v866 = vadd.f32 %v422, %v865
        %v867 = vpop.f32.mrf.mxu0
        %v868 = vadd.f32 %v422, %v867
        %869 = vmatmul.bf16.gmra.mxu0 %v571
        %v870 = vpop.f32.mrf.mxu0
        %v871 = vadd.f32 %v422, %v870
        %v872 = vpop.f32.mrf.mxu0
        %v873 = vadd.f32 %v422, %v872
        %874 = vmatmul.bf16.gmra.mxu0 %v574
        %v875 = vpop.f32.mrf.mxu0
        %v876 = vadd.f32 %v422, %v875
        %v877 = vpop.f32.mrf.mxu0
        %v878 = vadd.f32 %v422, %v877
        %879 = vmatmul.bf16.gmra.mxu0 %v577
        %v880 = vpop.f32.mrf.mxu0
        %v881 = vadd.f32 %v422, %v880
        %v882 = vpop.f32.mrf.mxu0
        %v883 = vadd.f32 %v422, %v882
        %884 = vmatmul.bf16.gmra.mxu0 %v580
        %v885 = vpop.f32.mrf.mxu0
        %v886 = vadd.f32 %v422, %v885
        %v887 = vpop.f32.mrf.mxu0
        %v888 = vadd.f32 %v422, %v887
        %889 = vmatmul.bf16.gmra.mxu0 %v583
        %v890 = vpop.f32.mrf.mxu0
        %v891 = vadd.f32 %v422, %v890
        %v892 = vpop.f32.mrf.mxu0
        %v893 = vadd.f32 %v422, %v892
        %894 = vmatmul.bf16.gmra.mxu0 %v586
        %v895 = vpop.f32.mrf.mxu0
        %v896 = vadd.f32 %v422, %v895
        %v897 = vpop.f32.mrf.mxu0
        %v898 = vadd.f32 %v422, %v897
        %899 = vmatmul.bf16.gmra.mxu0 %v589
        %v900 = vpop.f32.mrf.mxu0
        %v901 = vadd.f32 %v422, %v900
        %v902 = vpop.f32.mrf.mxu0
        %v903 = vadd.f32 %v422, %v902
        %904 = vmatmul.bf16.gmra.mxu0 %v592
        %v905 = vpop.f32.mrf.mxu0
        %v906 = vadd.f32 %v422, %v905
        %v907 = vpop.f32.mrf.mxu0
        %v908 = vadd.f32 %v422, %v907
        %909 = vmatmul.bf16.gmra.mxu0 %v595
        %v910 = vpop.f32.mrf.mxu0
        %v911 = vadd.f32 %v422, %v910
        %v912 = vpop.f32.mrf.mxu0
        %v913 = vadd.f32 %v422, %v912
        %914 = vmatmul.bf16.gmra.mxu0 %v598
        %v915 = vpop.f32.mrf.mxu0
        %v916 = vadd.f32 %v422, %v915
        %v917 = vpop.f32.mrf.mxu0
        %v918 = vadd.f32 %v422, %v917
        %919 = vmatmul.bf16.gmra.mxu0 %v601
        %v920 = vpop.f32.mrf.mxu0
        %v921 = vadd.f32 %v422, %v920
        %v922 = vpop.f32.mrf.mxu0
        %v923 = vadd.f32 %v422, %v922
        %924 = vmatmul.bf16.gmra.mxu0 %v604
        %v925 = vpop.f32.mrf.mxu0
        %v926 = vadd.f32 %v422, %v925
        %v927 = vpop.f32.mrf.mxu0
        %v928 = vadd.f32 %v422, %v927
        %929 = vmatmul.bf16.gmra.mxu0 %v607
        %v930 = vpop.f32.mrf.mxu0
        %v931 = vadd.f32 %v422, %v930
        %v932 = vpop.f32.mrf.mxu0
        %v933 = vadd.f32 %v422, %v932
        %934 = vmatmul.bf16.gmra.mxu0 %v610
        %v935 = vpop.f32.mrf.mxu0
        %v936 = vadd.f32 %v422, %v935
        %v937 = vpop.f32.mrf.mxu0
        %v938 = vadd.f32 %v422, %v937
        %939 = vmatmul.bf16.gmra.mxu0 %v613
        %v940 = vpop.f32.mrf.mxu0
        %v941 = vadd.f32 %v422, %v940
        %v942 = vpop.f32.mrf.mxu0
        %v943 = vadd.f32 %v422, %v942
        %944 = vmatmul.bf16.gmra.mxu0 %v616
        %v945 = vpop.f32.mrf.mxu0
        %v946 = vadd.f32 %v422, %v945
        %v947 = vpop.f32.mrf.mxu0
        %v948 = vadd.f32 %v422, %v947
        %949 = vmatmul.bf16.gmra.mxu0 %v619
        %v950 = vpop.f32.mrf.mxu0
        %v951 = vadd.f32 %v422, %v950
        %v952 = vpop.f32.mrf.mxu0
        %v953 = vadd.f32 %v422, %v952
        %954 = vmatmul.bf16.gmra.mxu0 %v622
        %v955 = vpop.f32.mrf.mxu0
        %v956 = vadd.f32 %v422, %v955
        %v957 = vpop.f32.mrf.mxu0
        %v958 = vadd.f32 %v422, %v957
        %959 = vmatmul.bf16.gmra.mxu0 %v625
        %v960 = vpop.f32.mrf.mxu0
        %v961 = vadd.f32 %v422, %v960
        %v962 = vpop.f32.mrf.mxu0
        %v963 = vadd.f32 %v422, %v962
        %964 = vmatmul.bf16.gmra.mxu0 %v628
        %v965 = vpop.f32.mrf.mxu0
        %v966 = vadd.f32 %v422, %v965
        %v967 = vpop.f32.mrf.mxu0
        %v968 = vadd.f32 %v422, %v967
        %969 = vmatmul.bf16.gmra.mxu0 %v631
        %v970 = vpop.f32.mrf.mxu0
        %v971 = vadd.f32 %v422, %v970
        %v972 = vpop.f32.mrf.mxu0
        %v973 = vadd.f32 %v422, %v972
        %974 = vdwg.mxu0
        %975 = vmatpush.bf16.msra.mxu0 0
        %976 = vmatpush.bf16.msra.mxu0 0
        %977 = vmatpush.bf16.msra.mxu0 0
        %978 = vmatpush.bf16.msra.mxu0 0
        %979 = vmatpush.bf16.msra.mxu0 0
        %980 = vmatpush.bf16.msra.mxu0 0
        %981 = vmatpush.bf16.msra.mxu0 0
        %982 = vmatpush.bf16.msra.mxu0 %v638
        %983 = vmatmul.bf16.gmra.mxu0 %v442
        %v984 = vpop.f32.mrf.mxu0
        %v985 = vadd.f32 %v423, %v984
        %v986 = vpop.f32.mrf.mxu0
        %v987 = vadd.f32 %v423, %v986
        %988 = vmatmul.bf16.gmra.mxu0 %v445
        %v989 = vpop.f32.mrf.mxu0
        %v990 = vadd.f32 %v423, %v989
        %v991 = vpop.f32.mrf.mxu0
        %v992 = vadd.f32 %v423, %v991
        %993 = vmatmul.bf16.gmra.mxu0 %v448
        %v994 = vpop.f32.mrf.mxu0
        %v995 = vadd.f32 %v423, %v994
        %v996 = vpop.f32.mrf.mxu0
        %v997 = vadd.f32 %v423, %v996
        %998 = vmatmul.bf16.gmra.mxu0 %v451
        %v999 = vpop.f32.mrf.mxu0
        %v1000 = vadd.f32 %v423, %v999
        %v1001 = vpop.f32.mrf.mxu0
        %v1002 = vadd.f32 %v423, %v1001
        %1003 = vmatmul.bf16.gmra.mxu0 %v454
        %v1004 = vpop.f32.mrf.mxu0
        %v1005 = vadd.f32 %v423, %v1004
        %v1006 = vpop.f32.mrf.mxu0
        %v1007 = vadd.f32 %v423, %v1006
        %1008 = vmatmul.bf16.gmra.mxu0 %v457
        %v1009 = vpop.f32.mrf.mxu0
        %v1010 = vadd.f32 %v423, %v1009
        %v1011 = vpop.f32.mrf.mxu0
        %v1012 = vadd.f32 %v423, %v1011
        %1013 = vmatmul.bf16.gmra.mxu0 %v460
        %v1014 = vpop.f32.mrf.mxu0
        %v1015 = vadd.f32 %v423, %v1014
        %v1016 = vpop.f32.mrf.mxu0
        %v1017 = vadd.f32 %v423, %v1016
        %1018 = vmatmul.bf16.gmra.mxu0 %v463
        %v1019 = vpop.f32.mrf.mxu0
        %v1020 = vadd.f32 %v423, %v1019
        %v1021 = vpop.f32.mrf.mxu0
        %v1022 = vadd.f32 %v423, %v1021
        %1023 = vmatmul.bf16.gmra.mxu0 %v466
        %v1024 = vpop.f32.mrf.mxu0
        %v1025 = vadd.f32 %v423, %v1024
        %v1026 = vpop.f32.mrf.mxu0
        %v1027 = vadd.f32 %v423, %v1026
        %1028 = vmatmul.bf16.gmra.mxu0 %v469
        %v1029 = vpop.f32.mrf.mxu0
        %v1030 = vadd.f32 %v423, %v1029
        %v1031 = vpop.f32.mrf.mxu0
        %v1032 = vadd.f32 %v423, %v1031
        %1033 = vmatmul.bf16.gmra.mxu0 %v472
        %v1034 = vpop.f32.mrf.mxu0
        %v1035 = vadd.f32 %v423, %v1034
        %v1036 = vpop.f32.mrf.mxu0
        %v1037 = vadd.f32 %v423, %v1036
        %1038 = vmatmul.bf16.gmra.mxu0 %v475
        %v1039 = vpop.f32.mrf.mxu0
        %v1040 = vadd.f32 %v423, %v1039
        %v1041 = vpop.f32.mrf.mxu0
        %v1042 = vadd.f32 %v423, %v1041
        %1043 = vmatmul.bf16.gmra.mxu0 %v478
        %v1044 = vpop.f32.mrf.mxu0
        %v1045 = vadd.f32 %v423, %v1044
        %v1046 = vpop.f32.mrf.mxu0
        %v1047 = vadd.f32 %v423, %v1046
        %1048 = vmatmul.bf16.gmra.mxu0 %v481
        %v1049 = vpop.f32.mrf.mxu0
        %v1050 = vadd.f32 %v423, %v1049
        %v1051 = vpop.f32.mrf.mxu0
        %v1052 = vadd.f32 %v423, %v1051
        %1053 = vmatmul.bf16.gmra.mxu0 %v484
        %v1054 = vpop.f32.mrf.mxu0
        %v1055 = vadd.f32 %v423, %v1054
        %v1056 = vpop.f32.mrf.mxu0
        %v1057 = vadd.f32 %v423, %v1056
        %1058 = vmatmul.bf16.gmra.mxu0 %v487
        %v1059 = vpop.f32.mrf.mxu0
        %v1060 = vadd.f32 %v423, %v1059
        %v1061 = vpop.f32.mrf.mxu0
        %v1062 = vadd.f32 %v423, %v1061
        %1063 = vmatmul.bf16.gmra.mxu0 %v490
        %v1064 = vpop.f32.mrf.mxu0
        %v1065 = vadd.f32 %v423, %v1064
        %v1066 = vpop.f32.mrf.mxu0
        %v1067 = vadd.f32 %v423, %v1066
        %1068 = vmatmul.bf16.gmra.mxu0 %v493
        %v1069 = vpop.f32.mrf.mxu0
        %v1070 = vadd.f32 %v423, %v1069
        %v1071 = vpop.f32.mrf.mxu0
        %v1072 = vadd.f32 %v423, %v1071
        %1073 = vmatmul.bf16.gmra.mxu0 %v496
        %v1074 = vpop.f32.mrf.mxu0
        %v1075 = vadd.f32 %v423, %v1074
        %v1076 = vpop.f32.mrf.mxu0
        %v1077 = vadd.f32 %v423, %v1076
        %1078 = vmatmul.bf16.gmra.mxu0 %v499
        %v1079 = vpop.f32.mrf.mxu0
        %v1080 = vadd.f32 %v423, %v1079
        %v1081 = vpop.f32.mrf.mxu0
        %v1082 = vadd.f32 %v423, %v1081
        %1083 = vmatmul.bf16.gmra.mxu0 %v502
        %v1084 = vpop.f32.mrf.mxu0
        %v1085 = vadd.f32 %v423, %v1084
        %v1086 = vpop.f32.mrf.mxu0
        %v1087 = vadd.f32 %v423, %v1086
        %1088 = vmatmul.bf16.gmra.mxu0 %v505
        %v1089 = vpop.f32.mrf.mxu0
        %v1090 = vadd.f32 %v423, %v1089
        %v1091 = vpop.f32.mrf.mxu0
        %v1092 = vadd.f32 %v423, %v1091
        %1093 = vmatmul.bf16.gmra.mxu0 %v508
        %v1094 = vpop.f32.mrf.mxu0
        %v1095 = vadd.f32 %v423, %v1094
        %v1096 = vpop.f32.mrf.mxu0
        %v1097 = vadd.f32 %v423, %v1096
        %1098 = vmatmul.bf16.gmra.mxu0 %v511
        %v1099 = vpop.f32.mrf.mxu0
        %v1100 = vadd.f32 %v423, %v1099
        %v1101 = vpop.f32.mrf.mxu0
        %v1102 = vadd.f32 %v423, %v1101
        %1103 = vmatmul.bf16.gmra.mxu0 %v514
        %v1104 = vpop.f32.mrf.mxu0
        %v1105 = vadd.f32 %v423, %v1104
        %v1106 = vpop.f32.mrf.mxu0
        %v1107 = vadd.f32 %v423, %v1106
        %1108 = vmatmul.bf16.gmra.mxu0 %v517
        %v1109 = vpop.f32.mrf.mxu0
        %v1110 = vadd.f32 %v423, %v1109
        %v1111 = vpop.f32.mrf.mxu0
        %v1112 = vadd.f32 %v423, %v1111
        %1113 = vmatmul.bf16.gmra.mxu0 %v520
        %v1114 = vpop.f32.mrf.mxu0
        %v1115 = vadd.f32 %v423, %v1114
        %v1116 = vpop.f32.mrf.mxu0
        %v1117 = vadd.f32 %v423, %v1116
        %1118 = vmatmul.bf16.gmra.mxu0 %v523
        %v1119 = vpop.f32.mrf.mxu0
        %v1120 = vadd.f32 %v423, %v1119
        %v1121 = vpop.f32.mrf.mxu0
        %v1122 = vadd.f32 %v423, %v1121
        %1123 = vmatmul.bf16.gmra.mxu0 %v526
        %v1124 = vpop.f32.mrf.mxu0
        %v1125 = vadd.f32 %v423, %v1124
        %v1126 = vpop.f32.mrf.mxu0
        %v1127 = vadd.f32 %v423, %v1126
        %1128 = vmatmul.bf16.gmra.mxu0 %v529
        %v1129 = vpop.f32.mrf.mxu0
        %v1130 = vadd.f32 %v423, %v1129
        %v1131 = vpop.f32.mrf.mxu0
        %v1132 = vadd.f32 %v423, %v1131
        %1133 = vmatmul.bf16.gmra.mxu0 %v532
        %v1134 = vpop.f32.mrf.mxu0
        %v1135 = vadd.f32 %v423, %v1134
        %v1136 = vpop.f32.mrf.mxu0
        %v1137 = vadd.f32 %v423, %v1136
        %1138 = vmatmul.bf16.gmra.mxu0 %v535
        %v1139 = vpop.f32.mrf.mxu0
        %v1140 = vadd.f32 %v423, %v1139
        %v1141 = vpop.f32.mrf.mxu0
        %v1142 = vadd.f32 %v423, %v1141
        %1143 = vmatmul.bf16.gmra.mxu0 %v538
        %v1144 = vpop.f32.mrf.mxu0
        %v1145 = vadd.f32 %v423, %v1144
        %v1146 = vpop.f32.mrf.mxu0
        %v1147 = vadd.f32 %v423, %v1146
        %1148 = vmatmul.bf16.gmra.mxu0 %v541
        %v1149 = vpop.f32.mrf.mxu0
        %v1150 = vadd.f32 %v423, %v1149
        %v1151 = vpop.f32.mrf.mxu0
        %v1152 = vadd.f32 %v423, %v1151
        %1153 = vmatmul.bf16.gmra.mxu0 %v544
        %v1154 = vpop.f32.mrf.mxu0
        %v1155 = vadd.f32 %v423, %v1154
        %v1156 = vpop.f32.mrf.mxu0
        %v1157 = vadd.f32 %v423, %v1156
        %1158 = vmatmul.bf16.gmra.mxu0 %v547
        %v1159 = vpop.f32.mrf.mxu0
        %v1160 = vadd.f32 %v423, %v1159
        %v1161 = vpop.f32.mrf.mxu0
        %v1162 = vadd.f32 %v423, %v1161
        %1163 = vmatmul.bf16.gmra.mxu0 %v550
        %v1164 = vpop.f32.mrf.mxu0
        %v1165 = vadd.f32 %v423, %v1164
        %v1166 = vpop.f32.mrf.mxu0
        %v1167 = vadd.f32 %v423, %v1166
        %1168 = vmatmul.bf16.gmra.mxu0 %v553
        %v1169 = vpop.f32.mrf.mxu0
        %v1170 = vadd.f32 %v423, %v1169
        %v1171 = vpop.f32.mrf.mxu0
        %v1172 = vadd.f32 %v423, %v1171
        %1173 = vmatmul.bf16.gmra.mxu0 %v556
        %v1174 = vpop.f32.mrf.mxu0
        %v1175 = vadd.f32 %v423, %v1174
        %v1176 = vpop.f32.mrf.mxu0
        %v1177 = vadd.f32 %v423, %v1176
        %1178 = vmatmul.bf16.gmra.mxu0 %v559
        %v1179 = vpop.f32.mrf.mxu0
        %v1180 = vadd.f32 %v423, %v1179
        %v1181 = vpop.f32.mrf.mxu0
        %v1182 = vadd.f32 %v423, %v1181
        %1183 = vmatmul.bf16.gmra.mxu0 %v562
        %v1184 = vpop.f32.mrf.mxu0
        %v1185 = vadd.f32 %v423, %v1184
        %v1186 = vpop.f32.mrf.mxu0
        %v1187 = vadd.f32 %v423, %v1186
        %1188 = vmatmul.bf16.gmra.mxu0 %v565
        %v1189 = vpop.f32.mrf.mxu0
        %v1190 = vadd.f32 %v423, %v1189
        %v1191 = vpop.f32.mrf.mxu0
        %v1192 = vadd.f32 %v423, %v1191
        %1193 = vmatmul.bf16.gmra.mxu0 %v568
        %v1194 = vpop.f32.mrf.mxu0
        %v1195 = vadd.f32 %v423, %v1194
        %v1196 = vpop.f32.mrf.mxu0
        %v1197 = vadd.f32 %v423, %v1196
        %1198 = vmatmul.bf16.gmra.mxu0 %v571
        %v1199 = vpop.f32.mrf.mxu0
        %v1200 = vadd.f32 %v423, %v1199
        %v1201 = vpop.f32.mrf.mxu0
        %v1202 = vadd.f32 %v423, %v1201
        %1203 = vmatmul.bf16.gmra.mxu0 %v574
        %v1204 = vpop.f32.mrf.mxu0
        %v1205 = vadd.f32 %v423, %v1204
        %v1206 = vpop.f32.mrf.mxu0
        %v1207 = vadd.f32 %v423, %v1206
        %1208 = vmatmul.bf16.gmra.mxu0 %v577
        %v1209 = vpop.f32.mrf.mxu0
        %v1210 = vadd.f32 %v423, %v1209
        %v1211 = vpop.f32.mrf.mxu0
        %v1212 = vadd.f32 %v423, %v1211
        %1213 = vmatmul.bf16.gmra.mxu0 %v580
        %v1214 = vpop.f32.mrf.mxu0
        %v1215 = vadd.f32 %v423, %v1214
        %v1216 = vpop.f32.mrf.mxu0
        %v1217 = vadd.f32 %v423, %v1216
        %1218 = vmatmul.bf16.gmra.mxu0 %v583
        %v1219 = vpop.f32.mrf.mxu0
        %v1220 = vadd.f32 %v423, %v1219
        %v1221 = vpop.f32.mrf.mxu0
        %v1222 = vadd.f32 %v423, %v1221
        %1223 = vmatmul.bf16.gmra.mxu0 %v586
        %v1224 = vpop.f32.mrf.mxu0
        %v1225 = vadd.f32 %v423, %v1224
        %v1226 = vpop.f32.mrf.mxu0
        %v1227 = vadd.f32 %v423, %v1226
        %1228 = vmatmul.bf16.gmra.mxu0 %v589
        %v1229 = vpop.f32.mrf.mxu0
        %v1230 = vadd.f32 %v423, %v1229
        %v1231 = vpop.f32.mrf.mxu0
        %v1232 = vadd.f32 %v423, %v1231
        %1233 = vmatmul.bf16.gmra.mxu0 %v592
        %v1234 = vpop.f32.mrf.mxu0
        %v1235 = vadd.f32 %v423, %v1234
        %v1236 = vpop.f32.mrf.mxu0
        %v1237 = vadd.f32 %v423, %v1236
        %1238 = vmatmul.bf16.gmra.mxu0 %v595
        %v1239 = vpop.f32.mrf.mxu0
        %v1240 = vadd.f32 %v423, %v1239
        %v1241 = vpop.f32.mrf.mxu0
        %v1242 = vadd.f32 %v423, %v1241
        %1243 = vmatmul.bf16.gmra.mxu0 %v598
        %v1244 = vpop.f32.mrf.mxu0
        %v1245 = vadd.f32 %v423, %v1244
        %v1246 = vpop.f32.mrf.mxu0
        %v1247 = vadd.f32 %v423, %v1246
        %1248 = vmatmul.bf16.gmra.mxu0 %v601
        %v1249 = vpop.f32.mrf.mxu0
        %v1250 = vadd.f32 %v423, %v1249
        %v1251 = vpop.f32.mrf.mxu0
        %v1252 = vadd.f32 %v423, %v1251
        %1253 = vmatmul.bf16.gmra.mxu0 %v604
        %v1254 = vpop.f32.mrf.mxu0
        %v1255 = vadd.f32 %v423, %v1254
        %v1256 = vpop.f32.mrf.mxu0
        %v1257 = vadd.f32 %v423, %v1256
        %1258 = vmatmul.bf16.gmra.mxu0 %v607
        %v1259 = vpop.f32.mrf.mxu0
        %v1260 = vadd.f32 %v423, %v1259
        %v1261 = vpop.f32.mrf.mxu0
        %v1262 = vadd.f32 %v423, %v1261
        %1263 = vmatmul.bf16.gmra.mxu0 %v610
        %v1264 = vpop.f32.mrf.mxu0
        %v1265 = vadd.f32 %v423, %v1264
        %v1266 = vpop.f32.mrf.mxu0
        %v1267 = vadd.f32 %v423, %v1266
        %1268 = vmatmul.bf16.gmra.mxu0 %v613
        %v1269 = vpop.f32.mrf.mxu0
        %v1270 = vadd.f32 %v423, %v1269
        %v1271 = vpop.f32.mrf.mxu0
        %v1272 = vadd.f32 %v423, %v1271
        %1273 = vmatmul.bf16.gmra.mxu0 %v616
        %v1274 = vpop.f32.mrf.mxu0
        %v1275 = vadd.f32 %v423, %v1274
        %v1276 = vpop.f32.mrf.mxu0
        %v1277 = vadd.f32 %v423, %v1276
        %1278 = vmatmul.bf16.gmra.mxu0 %v619
        %v1279 = vpop.f32.mrf.mxu0
        %v1280 = vadd.f32 %v423, %v1279
        %v1281 = vpop.f32.mrf.mxu0
        %v1282 = vadd.f32 %v423, %v1281
        %1283 = vmatmul.bf16.gmra.mxu0 %v622
        %v1284 = vpop.f32.mrf.mxu0
        %v1285 = vadd.f32 %v423, %v1284
        %v1286 = vpop.f32.mrf.mxu0
        %v1287 = vadd.f32 %v423, %v1286
        %1288 = vmatmul.bf16.gmra.mxu0 %v625
        %v1289 = vpop.f32.mrf.mxu0
        %v1290 = vadd.f32 %v423, %v1289
        %v1291 = vpop.f32.mrf.mxu0
        %v1292 = vadd.f32 %v423, %v1291
        %1293 = vmatmul.bf16.gmra.mxu0 %v628
        %v1294 = vpop.f32.mrf.mxu0
        %v1295 = vadd.f32 %v423, %v1294
        %v1296 = vpop.f32.mrf.mxu0
        %v1297 = vadd.f32 %v423, %v1296
        %1298 = vmatmul.bf16.gmra.mxu0 %v631
        %v1299 = vpop.f32.mrf.mxu0
        %v1300 = vadd.f32 %v423, %v1299
        %v1301 = vpop.f32.mrf.mxu0
        %v1302 = vadd.f32 %v423, %v1301
        %1303 = vdwg.mxu0
        %1304 = vmatpush.bf16.msra.mxu0 0
        %1305 = vmatpush.bf16.msra.mxu0 0
        %1306 = vmatpush.bf16.msra.mxu0 0
        %1307 = vmatpush.bf16.msra.mxu0 0
        %1308 = vmatpush.bf16.msra.mxu0 0
        %1309 = vmatpush.bf16.msra.mxu0 0
        %1310 = vmatpush.bf16.msra.mxu0 0
        %1311 = vmatpush.bf16.msra.mxu0 %v641
        %1312 = vmatmul.bf16.gmra.mxu0 %v442
        %v1313 = vpop.f32.mrf.mxu0
        %v1314 = vadd.f32 %v424, %v1313
        %v1315 = vpop.f32.mrf.mxu0
        %v1316 = vadd.f32 %v424, %v1315
        %1317 = vmatmul.bf16.gmra.mxu0 %v445
        %v1318 = vpop.f32.mrf.mxu0
        %v1319 = vadd.f32 %v424, %v1318
        %v1320 = vpop.f32.mrf.mxu0
        %v1321 = vadd.f32 %v424, %v1320
        %1322 = vmatmul.bf16.gmra.mxu0 %v448
        %v1323 = vpop.f32.mrf.mxu0
        %v1324 = vadd.f32 %v424, %v1323
        %v1325 = vpop.f32.mrf.mxu0
        %v1326 = vadd.f32 %v424, %v1325
        %1327 = vmatmul.bf16.gmra.mxu0 %v451
        %v1328 = vpop.f32.mrf.mxu0
        %v1329 = vadd.f32 %v424, %v1328
        %v1330 = vpop.f32.mrf.mxu0
        %v1331 = vadd.f32 %v424, %v1330
        %1332 = vmatmul.bf16.gmra.mxu0 %v454
        %v1333 = vpop.f32.mrf.mxu0
        %v1334 = vadd.f32 %v424, %v1333
        %v1335 = vpop.f32.mrf.mxu0
        %v1336 = vadd.f32 %v424, %v1335
        %1337 = vmatmul.bf16.gmra.mxu0 %v457
        %v1338 = vpop.f32.mrf.mxu0
        %v1339 = vadd.f32 %v424, %v1338
        %v1340 = vpop.f32.mrf.mxu0
        %v1341 = vadd.f32 %v424, %v1340
        %1342 = vmatmul.bf16.gmra.mxu0 %v460
        %v1343 = vpop.f32.mrf.mxu0
        %v1344 = vadd.f32 %v424, %v1343
        %v1345 = vpop.f32.mrf.mxu0
        %v1346 = vadd.f32 %v424, %v1345
        %1347 = vmatmul.bf16.gmra.mxu0 %v463
        %v1348 = vpop.f32.mrf.mxu0
        %v1349 = vadd.f32 %v424, %v1348
        %v1350 = vpop.f32.mrf.mxu0
        %v1351 = vadd.f32 %v424, %v1350
        %1352 = vmatmul.bf16.gmra.mxu0 %v466
        %v1353 = vpop.f32.mrf.mxu0
        %v1354 = vadd.f32 %v424, %v1353
        %v1355 = vpop.f32.mrf.mxu0
        %v1356 = vadd.f32 %v424, %v1355
        %1357 = vmatmul.bf16.gmra.mxu0 %v469
        %v1358 = vpop.f32.mrf.mxu0
        %v1359 = vadd.f32 %v424, %v1358
        %v1360 = vpop.f32.mrf.mxu0
        %v1361 = vadd.f32 %v424, %v1360
        %1362 = vmatmul.bf16.gmra.mxu0 %v472
        %v1363 = vpop.f32.mrf.mxu0
        %v1364 = vadd.f32 %v424, %v1363
        %v1365 = vpop.f32.mrf.mxu0
        %v1366 = vadd.f32 %v424, %v1365
        %1367 = vmatmul.bf16.gmra.mxu0 %v475
        %v1368 = vpop.f32.mrf.mxu0
        %v1369 = vadd.f32 %v424, %v1368
        %v1370 = vpop.f32.mrf.mxu0
        %v1371 = vadd.f32 %v424, %v1370
        %1372 = vmatmul.bf16.gmra.mxu0 %v478
        %v1373 = vpop.f32.mrf.mxu0
        %v1374 = vadd.f32 %v424, %v1373
        %v1375 = vpop.f32.mrf.mxu0
        %v1376 = vadd.f32 %v424, %v1375
        %1377 = vmatmul.bf16.gmra.mxu0 %v481
        %v1378 = vpop.f32.mrf.mxu0
        %v1379 = vadd.f32 %v424, %v1378
        %v1380 = vpop.f32.mrf.mxu0
        %v1381 = vadd.f32 %v424, %v1380
        %1382 = vmatmul.bf16.gmra.mxu0 %v484
        %v1383 = vpop.f32.mrf.mxu0
        %v1384 = vadd.f32 %v424, %v1383
        %v1385 = vpop.f32.mrf.mxu0
        %v1386 = vadd.f32 %v424, %v1385
        %1387 = vmatmul.bf16.gmra.mxu0 %v487
        %v1388 = vpop.f32.mrf.mxu0
        %v1389 = vadd.f32 %v424, %v1388
        %v1390 = vpop.f32.mrf.mxu0
        %v1391 = vadd.f32 %v424, %v1390
        %1392 = vmatmul.bf16.gmra.mxu0 %v490
        %v1393 = vpop.f32.mrf.mxu0
        %v1394 = vadd.f32 %v424, %v1393
        %v1395 = vpop.f32.mrf.mxu0
        %v1396 = vadd.f32 %v424, %v1395
        %1397 = vmatmul.bf16.gmra.mxu0 %v493
        %v1398 = vpop.f32.mrf.mxu0
        %v1399 = vadd.f32 %v424, %v1398
        %v1400 = vpop.f32.mrf.mxu0
        %v1401 = vadd.f32 %v424, %v1400
        %1402 = vmatmul.bf16.gmra.mxu0 %v496
        %v1403 = vpop.f32.mrf.mxu0
        %v1404 = vadd.f32 %v424, %v1403
        %v1405 = vpop.f32.mrf.mxu0
        %v1406 = vadd.f32 %v424, %v1405
        %1407 = vmatmul.bf16.gmra.mxu0 %v499
        %v1408 = vpop.f32.mrf.mxu0
        %v1409 = vadd.f32 %v424, %v1408
        %v1410 = vpop.f32.mrf.mxu0
        %v1411 = vadd.f32 %v424, %v1410
        %1412 = vmatmul.bf16.gmra.mxu0 %v502
        %v1413 = vpop.f32.mrf.mxu0
        %v1414 = vadd.f32 %v424, %v1413
        %v1415 = vpop.f32.mrf.mxu0
        %v1416 = vadd.f32 %v424, %v1415
        %1417 = vmatmul.bf16.gmra.mxu0 %v505
        %v1418 = vpop.f32.mrf.mxu0
        %v1419 = vadd.f32 %v424, %v1418
        %v1420 = vpop.f32.mrf.mxu0
        %v1421 = vadd.f32 %v424, %v1420
        %1422 = vmatmul.bf16.gmra.mxu0 %v508
        %v1423 = vpop.f32.mrf.mxu0
        %v1424 = vadd.f32 %v424, %v1423
        %v1425 = vpop.f32.mrf.mxu0
        %v1426 = vadd.f32 %v424, %v1425
        %1427 = vmatmul.bf16.gmra.mxu0 %v511
        %v1428 = vpop.f32.mrf.mxu0
        %v1429 = vadd.f32 %v424, %v1428
        %v1430 = vpop.f32.mrf.mxu0
        %v1431 = vadd.f32 %v424, %v1430
        %1432 = vmatmul.bf16.gmra.mxu0 %v514
        %v1433 = vpop.f32.mrf.mxu0
        %v1434 = vadd.f32 %v424, %v1433
        %v1435 = vpop.f32.mrf.mxu0
        %v1436 = vadd.f32 %v424, %v1435
        %1437 = vmatmul.bf16.gmra.mxu0 %v517
        %v1438 = vpop.f32.mrf.mxu0
        %v1439 = vadd.f32 %v424, %v1438
        %v1440 = vpop.f32.mrf.mxu0
        %v1441 = vadd.f32 %v424, %v1440
        %1442 = vmatmul.bf16.gmra.mxu0 %v520
        %v1443 = vpop.f32.mrf.mxu0
        %v1444 = vadd.f32 %v424, %v1443
        %v1445 = vpop.f32.mrf.mxu0
        %v1446 = vadd.f32 %v424, %v1445
        %1447 = vmatmul.bf16.gmra.mxu0 %v523
        %v1448 = vpop.f32.mrf.mxu0
        %v1449 = vadd.f32 %v424, %v1448
        %v1450 = vpop.f32.mrf.mxu0
        %v1451 = vadd.f32 %v424, %v1450
        %1452 = vmatmul.bf16.gmra.mxu0 %v526
        %v1453 = vpop.f32.mrf.mxu0
        %v1454 = vadd.f32 %v424, %v1453
        %v1455 = vpop.f32.mrf.mxu0
        %v1456 = vadd.f32 %v424, %v1455
        %1457 = vmatmul.bf16.gmra.mxu0 %v529
        %v1458 = vpop.f32.mrf.mxu0
        %v1459 = vadd.f32 %v424, %v1458
        %v1460 = vpop.f32.mrf.mxu0
        %v1461 = vadd.f32 %v424, %v1460
        %1462 = vmatmul.bf16.gmra.mxu0 %v532
        %v1463 = vpop.f32.mrf.mxu0
        %v1464 = vadd.f32 %v424, %v1463
        %v1465 = vpop.f32.mrf.mxu0
        %v1466 = vadd.f32 %v424, %v1465
        %1467 = vmatmul.bf16.gmra.mxu0 %v535
        %v1468 = vpop.f32.mrf.mxu0
        %v1469 = vadd.f32 %v424, %v1468
        %v1470 = vpop.f32.mrf.mxu0
        %v1471 = vadd.f32 %v424, %v1470
        %1472 = vmatmul.bf16.gmra.mxu0 %v538
        %v1473 = vpop.f32.mrf.mxu0
        %v1474 = vadd.f32 %v424, %v1473
        %v1475 = vpop.f32.mrf.mxu0
        %v1476 = vadd.f32 %v424, %v1475
        %1477 = vmatmul.bf16.gmra.mxu0 %v541
        %v1478 = vpop.f32.mrf.mxu0
        %v1479 = vadd.f32 %v424, %v1478
        %v1480 = vpop.f32.mrf.mxu0
        %v1481 = vadd.f32 %v424, %v1480
        %1482 = vmatmul.bf16.gmra.mxu0 %v544
        %v1483 = vpop.f32.mrf.mxu0
        %v1484 = vadd.f32 %v424, %v1483
        %v1485 = vpop.f32.mrf.mxu0
        %v1486 = vadd.f32 %v424, %v1485
        %1487 = vmatmul.bf16.gmra.mxu0 %v547
        %v1488 = vpop.f32.mrf.mxu0
        %v1489 = vadd.f32 %v424, %v1488
        %v1490 = vpop.f32.mrf.mxu0
        %v1491 = vadd.f32 %v424, %v1490
        %1492 = vmatmul.bf16.gmra.mxu0 %v550
        %v1493 = vpop.f32.mrf.mxu0
        %v1494 = vadd.f32 %v424, %v1493
        %v1495 = vpop.f32.mrf.mxu0
        %v1496 = vadd.f32 %v424, %v1495
        %1497 = vmatmul.bf16.gmra.mxu0 %v553
        %v1498 = vpop.f32.mrf.mxu0
        %v1499 = vadd.f32 %v424, %v1498
        %v1500 = vpop.f32.mrf.mxu0
        %v1501 = vadd.f32 %v424, %v1500
        %1502 = vmatmul.bf16.gmra.mxu0 %v556
        %v1503 = vpop.f32.mrf.mxu0
        %v1504 = vadd.f32 %v424, %v1503
        %v1505 = vpop.f32.mrf.mxu0
        %v1506 = vadd.f32 %v424, %v1505
        %1507 = vmatmul.bf16.gmra.mxu0 %v559
        %v1508 = vpop.f32.mrf.mxu0
        %v1509 = vadd.f32 %v424, %v1508
        %v1510 = vpop.f32.mrf.mxu0
        %v1511 = vadd.f32 %v424, %v1510
        %1512 = vmatmul.bf16.gmra.mxu0 %v562
        %v1513 = vpop.f32.mrf.mxu0
        %v1514 = vadd.f32 %v424, %v1513
        %v1515 = vpop.f32.mrf.mxu0
        %v1516 = vadd.f32 %v424, %v1515
        %1517 = vmatmul.bf16.gmra.mxu0 %v565
        %v1518 = vpop.f32.mrf.mxu0
        %v1519 = vadd.f32 %v424, %v1518
        %v1520 = vpop.f32.mrf.mxu0
        %v1521 = vadd.f32 %v424, %v1520
        %1522 = vmatmul.bf16.gmra.mxu0 %v568
        %v1523 = vpop.f32.mrf.mxu0
        %v1524 = vadd.f32 %v424, %v1523
        %v1525 = vpop.f32.mrf.mxu0
        %v1526 = vadd.f32 %v424, %v1525
        %1527 = vmatmul.bf16.gmra.mxu0 %v571
        %v1528 = vpop.f32.mrf.mxu0
        %v1529 = vadd.f32 %v424, %v1528
        %v1530 = vpop.f32.mrf.mxu0
        %v1531 = vadd.f32 %v424, %v1530
        %1532 = vmatmul.bf16.gmra.mxu0 %v574
        %v1533 = vpop.f32.mrf.mxu0
        %v1534 = vadd.f32 %v424, %v1533
        %v1535 = vpop.f32.mrf.mxu0
        %v1536 = vadd.f32 %v424, %v1535
        %1537 = vmatmul.bf16.gmra.mxu0 %v577
        %v1538 = vpop.f32.mrf.mxu0
        %v1539 = vadd.f32 %v424, %v1538
        %v1540 = vpop.f32.mrf.mxu0
        %v1541 = vadd.f32 %v424, %v1540
        %1542 = vmatmul.bf16.gmra.mxu0 %v580
        %v1543 = vpop.f32.mrf.mxu0
        %v1544 = vadd.f32 %v424, %v1543
        %v1545 = vpop.f32.mrf.mxu0
        %v1546 = vadd.f32 %v424, %v1545
        %1547 = vmatmul.bf16.gmra.mxu0 %v583
        %v1548 = vpop.f32.mrf.mxu0
        %v1549 = vadd.f32 %v424, %v1548
        %v1550 = vpop.f32.mrf.mxu0
        %v1551 = vadd.f32 %v424, %v1550
        %1552 = vmatmul.bf16.gmra.mxu0 %v586
        %v1553 = vpop.f32.mrf.mxu0
        %v1554 = vadd.f32 %v424, %v1553
        %v1555 = vpop.f32.mrf.mxu0
        %v1556 = vadd.f32 %v424, %v1555
        %1557 = vmatmul.bf16.gmra.mxu0 %v589
        %v1558 = vpop.f32.mrf.mxu0
        %v1559 = vadd.f32 %v424, %v1558
        %v1560 = vpop.f32.mrf.mxu0
        %v1561 = vadd.f32 %v424, %v1560
        %1562 = vmatmul.bf16.gmra.mxu0 %v592
        %v1563 = vpop.f32.mrf.mxu0
        %v1564 = vadd.f32 %v424, %v1563
        %v1565 = vpop.f32.mrf.mxu0
        %v1566 = vadd.f32 %v424, %v1565
        %1567 = vmatmul.bf16.gmra.mxu0 %v595
        %v1568 = vpop.f32.mrf.mxu0
        %v1569 = vadd.f32 %v424, %v1568
        %v1570 = vpop.f32.mrf.mxu0
        %v1571 = vadd.f32 %v424, %v1570
        %1572 = vmatmul.bf16.gmra.mxu0 %v598
        %v1573 = vpop.f32.mrf.mxu0
        %v1574 = vadd.f32 %v424, %v1573
        %v1575 = vpop.f32.mrf.mxu0
        %v1576 = vadd.f32 %v424, %v1575
        %1577 = vmatmul.bf16.gmra.mxu0 %v601
        %v1578 = vpop.f32.mrf.mxu0
        %v1579 = vadd.f32 %v424, %v1578
        %v1580 = vpop.f32.mrf.mxu0
        %v1581 = vadd.f32 %v424, %v1580
        %1582 = vmatmul.bf16.gmra.mxu0 %v604
        %v1583 = vpop.f32.mrf.mxu0
        %v1584 = vadd.f32 %v424, %v1583
        %v1585 = vpop.f32.mrf.mxu0
        %v1586 = vadd.f32 %v424, %v1585
        %1587 = vmatmul.bf16.gmra.mxu0 %v607
        %v1588 = vpop.f32.mrf.mxu0
        %v1589 = vadd.f32 %v424, %v1588
        %v1590 = vpop.f32.mrf.mxu0
        %v1591 = vadd.f32 %v424, %v1590
        %1592 = vmatmul.bf16.gmra.mxu0 %v610
        %v1593 = vpop.f32.mrf.mxu0
        %v1594 = vadd.f32 %v424, %v1593
        %v1595 = vpop.f32.mrf.mxu0
        %v1596 = vadd.f32 %v424, %v1595
        %1597 = vmatmul.bf16.gmra.mxu0 %v613
        %v1598 = vpop.f32.mrf.mxu0
        %v1599 = vadd.f32 %v424, %v1598
        %v1600 = vpop.f32.mrf.mxu0
        %v1601 = vadd.f32 %v424, %v1600
        %1602 = vmatmul.bf16.gmra.mxu0 %v616
        %v1603 = vpop.f32.mrf.mxu0
        %v1604 = vadd.f32 %v424, %v1603
        %v1605 = vpop.f32.mrf.mxu0
        %v1606 = vadd.f32 %v424, %v1605
        %1607 = vmatmul.bf16.gmra.mxu0 %v619
        %v1608 = vpop.f32.mrf.mxu0
        %v1609 = vadd.f32 %v424, %v1608
        %v1610 = vpop.f32.mrf.mxu0
        %v1611 = vadd.f32 %v424, %v1610
        %1612 = vmatmul.bf16.gmra.mxu0 %v622
        %v1613 = vpop.f32.mrf.mxu0
        %v1614 = vadd.f32 %v424, %v1613
        %v1615 = vpop.f32.mrf.mxu0
        %v1616 = vadd.f32 %v424, %v1615
        %1617 = vmatmul.bf16.gmra.mxu0 %v625
        %v1618 = vpop.f32.mrf.mxu0
        %v1619 = vadd.f32 %v424, %v1618
        %v1620 = vpop.f32.mrf.mxu0
        %v1621 = vadd.f32 %v424, %v1620
        %1622 = vmatmul.bf16.gmra.mxu0 %v628
        %v1623 = vpop.f32.mrf.mxu0
        %v1624 = vadd.f32 %v424, %v1623
        %v1625 = vpop.f32.mrf.mxu0
        %v1626 = vadd.f32 %v424, %v1625
        %1627 = vmatmul.bf16.gmra.mxu0 %v631
        %v1628 = vpop.f32.mrf.mxu0
        %v1629 = vadd.f32 %v424, %v1628
        %v1630 = vpop.f32.mrf.mxu0
        %v1631 = vadd.f32 %v424, %v1630
        %1632 = vdwg.mxu0
        %1633 = vmatpush.bf16.msra.mxu0 0
        %1634 = vmatpush.bf16.msra.mxu0 0
        %1635 = vmatpush.bf16.msra.mxu0 0
        %1636 = vmatpush.bf16.msra.mxu0 0
        %1637 = vmatpush.bf16.msra.mxu0 0
        %1638 = vmatpush.bf16.msra.mxu0 0
        %1639 = vmatpush.bf16.msra.mxu0 0
        %1640 = vmatpush.bf16.msra.mxu0 %v644
        %1641 = vmatmul.bf16.gmra.mxu0 %v442
        %v1642 = vpop.f32.mrf.mxu0
        %v1643 = vadd.f32 %v425, %v1642
        %v1644 = vpop.f32.mrf.mxu0
        %v1645 = vadd.f32 %v425, %v1644
        %1646 = vmatmul.bf16.gmra.mxu0 %v445
        %v1647 = vpop.f32.mrf.mxu0
        %v1648 = vadd.f32 %v425, %v1647
        %v1649 = vpop.f32.mrf.mxu0
        %v1650 = vadd.f32 %v425, %v1649
        %1651 = vmatmul.bf16.gmra.mxu0 %v448
        %v1652 = vpop.f32.mrf.mxu0
        %v1653 = vadd.f32 %v425, %v1652
        %v1654 = vpop.f32.mrf.mxu0
        %v1655 = vadd.f32 %v425, %v1654
        %1656 = vmatmul.bf16.gmra.mxu0 %v451
        %v1657 = vpop.f32.mrf.mxu0
        %v1658 = vadd.f32 %v425, %v1657
        %v1659 = vpop.f32.mrf.mxu0
        %v1660 = vadd.f32 %v425, %v1659
        %1661 = vmatmul.bf16.gmra.mxu0 %v454
        %v1662 = vpop.f32.mrf.mxu0
        %v1663 = vadd.f32 %v425, %v1662
        %v1664 = vpop.f32.mrf.mxu0
        %v1665 = vadd.f32 %v425, %v1664
        %1666 = vmatmul.bf16.gmra.mxu0 %v457
        %v1667 = vpop.f32.mrf.mxu0
        %v1668 = vadd.f32 %v425, %v1667
        %v1669 = vpop.f32.mrf.mxu0
        %v1670 = vadd.f32 %v425, %v1669
        %1671 = vmatmul.bf16.gmra.mxu0 %v460
        %v1672 = vpop.f32.mrf.mxu0
        %v1673 = vadd.f32 %v425, %v1672
        %v1674 = vpop.f32.mrf.mxu0
        %v1675 = vadd.f32 %v425, %v1674
        %1676 = vmatmul.bf16.gmra.mxu0 %v463
        %v1677 = vpop.f32.mrf.mxu0
        %v1678 = vadd.f32 %v425, %v1677
        %v1679 = vpop.f32.mrf.mxu0
        %v1680 = vadd.f32 %v425, %v1679
        %1681 = vmatmul.bf16.gmra.mxu0 %v466
        %v1682 = vpop.f32.mrf.mxu0
        %v1683 = vadd.f32 %v425, %v1682
        %v1684 = vpop.f32.mrf.mxu0
        %v1685 = vadd.f32 %v425, %v1684
        %1686 = vmatmul.bf16.gmra.mxu0 %v469
        %v1687 = vpop.f32.mrf.mxu0
        %v1688 = vadd.f32 %v425, %v1687
        %v1689 = vpop.f32.mrf.mxu0
        %v1690 = vadd.f32 %v425, %v1689
        %1691 = vmatmul.bf16.gmra.mxu0 %v472
        %v1692 = vpop.f32.mrf.mxu0
        %v1693 = vadd.f32 %v425, %v1692
        %v1694 = vpop.f32.mrf.mxu0
        %v1695 = vadd.f32 %v425, %v1694
        %1696 = vmatmul.bf16.gmra.mxu0 %v475
        %v1697 = vpop.f32.mrf.mxu0
        %v1698 = vadd.f32 %v425, %v1697
        %v1699 = vpop.f32.mrf.mxu0
        %v1700 = vadd.f32 %v425, %v1699
        %1701 = vmatmul.bf16.gmra.mxu0 %v478
        %v1702 = vpop.f32.mrf.mxu0
        %v1703 = vadd.f32 %v425, %v1702
        %v1704 = vpop.f32.mrf.mxu0
        %v1705 = vadd.f32 %v425, %v1704
        %1706 = vmatmul.bf16.gmra.mxu0 %v481
        %v1707 = vpop.f32.mrf.mxu0
        %v1708 = vadd.f32 %v425, %v1707
        %v1709 = vpop.f32.mrf.mxu0
        %v1710 = vadd.f32 %v425, %v1709
        %1711 = vmatmul.bf16.gmra.mxu0 %v484
        %v1712 = vpop.f32.mrf.mxu0
        %v1713 = vadd.f32 %v425, %v1712
        %v1714 = vpop.f32.mrf.mxu0
        %v1715 = vadd.f32 %v425, %v1714
        %1716 = vmatmul.bf16.gmra.mxu0 %v487
        %v1717 = vpop.f32.mrf.mxu0
        %v1718 = vadd.f32 %v425, %v1717
        %v1719 = vpop.f32.mrf.mxu0
        %v1720 = vadd.f32 %v425, %v1719
        %1721 = vmatmul.bf16.gmra.mxu0 %v490
        %v1722 = vpop.f32.mrf.mxu0
        %v1723 = vadd.f32 %v425, %v1722
        %v1724 = vpop.f32.mrf.mxu0
        %v1725 = vadd.f32 %v425, %v1724
        %1726 = vmatmul.bf16.gmra.mxu0 %v493
        %v1727 = vpop.f32.mrf.mxu0
        %v1728 = vadd.f32 %v425, %v1727
        %v1729 = vpop.f32.mrf.mxu0
        %v1730 = vadd.f32 %v425, %v1729
        %1731 = vmatmul.bf16.gmra.mxu0 %v496
        %v1732 = vpop.f32.mrf.mxu0
        %v1733 = vadd.f32 %v425, %v1732
        %v1734 = vpop.f32.mrf.mxu0
        %v1735 = vadd.f32 %v425, %v1734
        %1736 = vmatmul.bf16.gmra.mxu0 %v499
        %v1737 = vpop.f32.mrf.mxu0
        %v1738 = vadd.f32 %v425, %v1737
        %v1739 = vpop.f32.mrf.mxu0
        %v1740 = vadd.f32 %v425, %v1739
        %1741 = vmatmul.bf16.gmra.mxu0 %v502
        %v1742 = vpop.f32.mrf.mxu0
        %v1743 = vadd.f32 %v425, %v1742
        %v1744 = vpop.f32.mrf.mxu0
        %v1745 = vadd.f32 %v425, %v1744
        %1746 = vmatmul.bf16.gmra.mxu0 %v505
        %v1747 = vpop.f32.mrf.mxu0
        %v1748 = vadd.f32 %v425, %v1747
        %v1749 = vpop.f32.mrf.mxu0
        %v1750 = vadd.f32 %v425, %v1749
        %1751 = vmatmul.bf16.gmra.mxu0 %v508
        %v1752 = vpop.f32.mrf.mxu0
        %v1753 = vadd.f32 %v425, %v1752
        %v1754 = vpop.f32.mrf.mxu0
        %v1755 = vadd.f32 %v425, %v1754
        %1756 = vmatmul.bf16.gmra.mxu0 %v511
        %v1757 = vpop.f32.mrf.mxu0
        %v1758 = vadd.f32 %v425, %v1757
        %v1759 = vpop.f32.mrf.mxu0
        %v1760 = vadd.f32 %v425, %v1759
        %1761 = vmatmul.bf16.gmra.mxu0 %v514
        %v1762 = vpop.f32.mrf.mxu0
        %v1763 = vadd.f32 %v425, %v1762
        %v1764 = vpop.f32.mrf.mxu0
        %v1765 = vadd.f32 %v425, %v1764
        %1766 = vmatmul.bf16.gmra.mxu0 %v517
        %v1767 = vpop.f32.mrf.mxu0
        %v1768 = vadd.f32 %v425, %v1767
        %v1769 = vpop.f32.mrf.mxu0
        %v1770 = vadd.f32 %v425, %v1769
        %1771 = vmatmul.bf16.gmra.mxu0 %v520
        %v1772 = vpop.f32.mrf.mxu0
        %v1773 = vadd.f32 %v425, %v1772
        %v1774 = vpop.f32.mrf.mxu0
        %v1775 = vadd.f32 %v425, %v1774
        %1776 = vmatmul.bf16.gmra.mxu0 %v523
        %v1777 = vpop.f32.mrf.mxu0
        %v1778 = vadd.f32 %v425, %v1777
        %v1779 = vpop.f32.mrf.mxu0
        %v1780 = vadd.f32 %v425, %v1779
        %1781 = vmatmul.bf16.gmra.mxu0 %v526
        %v1782 = vpop.f32.mrf.mxu0
        %v1783 = vadd.f32 %v425, %v1782
        %v1784 = vpop.f32.mrf.mxu0
        %v1785 = vadd.f32 %v425, %v1784
        %1786 = vmatmul.bf16.gmra.mxu0 %v529
        %v1787 = vpop.f32.mrf.mxu0
        %v1788 = vadd.f32 %v425, %v1787
        %v1789 = vpop.f32.mrf.mxu0
        %v1790 = vadd.f32 %v425, %v1789
        %1791 = vmatmul.bf16.gmra.mxu0 %v532
        %v1792 = vpop.f32.mrf.mxu0
        %v1793 = vadd.f32 %v425, %v1792
        %v1794 = vpop.f32.mrf.mxu0
        %v1795 = vadd.f32 %v425, %v1794
        %1796 = vmatmul.bf16.gmra.mxu0 %v535
        %v1797 = vpop.f32.mrf.mxu0
        %v1798 = vadd.f32 %v425, %v1797
        %v1799 = vpop.f32.mrf.mxu0
        %v1800 = vadd.f32 %v425, %v1799
        %1801 = vmatmul.bf16.gmra.mxu0 %v538
        %v1802 = vpop.f32.mrf.mxu0
        %v1803 = vadd.f32 %v425, %v1802
        %v1804 = vpop.f32.mrf.mxu0
        %v1805 = vadd.f32 %v425, %v1804
        %1806 = vmatmul.bf16.gmra.mxu0 %v541
        %v1807 = vpop.f32.mrf.mxu0
        %v1808 = vadd.f32 %v425, %v1807
        %v1809 = vpop.f32.mrf.mxu0
        %v1810 = vadd.f32 %v425, %v1809
        %1811 = vmatmul.bf16.gmra.mxu0 %v544
        %v1812 = vpop.f32.mrf.mxu0
        %v1813 = vadd.f32 %v425, %v1812
        %v1814 = vpop.f32.mrf.mxu0
        %v1815 = vadd.f32 %v425, %v1814
        %1816 = vmatmul.bf16.gmra.mxu0 %v547
        %v1817 = vpop.f32.mrf.mxu0
        %v1818 = vadd.f32 %v425, %v1817
        %v1819 = vpop.f32.mrf.mxu0
        %v1820 = vadd.f32 %v425, %v1819
        %1821 = vmatmul.bf16.gmra.mxu0 %v550
        %v1822 = vpop.f32.mrf.mxu0
        %v1823 = vadd.f32 %v425, %v1822
        %v1824 = vpop.f32.mrf.mxu0
        %v1825 = vadd.f32 %v425, %v1824
        %1826 = vmatmul.bf16.gmra.mxu0 %v553
        %v1827 = vpop.f32.mrf.mxu0
        %v1828 = vadd.f32 %v425, %v1827
        %v1829 = vpop.f32.mrf.mxu0
        %v1830 = vadd.f32 %v425, %v1829
        %1831 = vmatmul.bf16.gmra.mxu0 %v556
        %v1832 = vpop.f32.mrf.mxu0
        %v1833 = vadd.f32 %v425, %v1832
        %v1834 = vpop.f32.mrf.mxu0
        %v1835 = vadd.f32 %v425, %v1834
        %1836 = vmatmul.bf16.gmra.mxu0 %v559
        %v1837 = vpop.f32.mrf.mxu0
        %v1838 = vadd.f32 %v425, %v1837
        %v1839 = vpop.f32.mrf.mxu0
        %v1840 = vadd.f32 %v425, %v1839
        %1841 = vmatmul.bf16.gmra.mxu0 %v562
        %v1842 = vpop.f32.mrf.mxu0
        %v1843 = vadd.f32 %v425, %v1842
        %v1844 = vpop.f32.mrf.mxu0
        %v1845 = vadd.f32 %v425, %v1844
        %1846 = vmatmul.bf16.gmra.mxu0 %v565
        %v1847 = vpop.f32.mrf.mxu0
        %v1848 = vadd.f32 %v425, %v1847
        %v1849 = vpop.f32.mrf.mxu0
        %v1850 = vadd.f32 %v425, %v1849
        %1851 = vmatmul.bf16.gmra.mxu0 %v568
        %v1852 = vpop.f32.mrf.mxu0
        %v1853 = vadd.f32 %v425, %v1852
        %v1854 = vpop.f32.mrf.mxu0
        %v1855 = vadd.f32 %v425, %v1854
        %1856 = vmatmul.bf16.gmra.mxu0 %v571
        %v1857 = vpop.f32.mrf.mxu0
        %v1858 = vadd.f32 %v425, %v1857
        %v1859 = vpop.f32.mrf.mxu0
        %v1860 = vadd.f32 %v425, %v1859
        %1861 = vmatmul.bf16.gmra.mxu0 %v574
        %v1862 = vpop.f32.mrf.mxu0
        %v1863 = vadd.f32 %v425, %v1862
        %v1864 = vpop.f32.mrf.mxu0
        %v1865 = vadd.f32 %v425, %v1864
        %1866 = vmatmul.bf16.gmra.mxu0 %v577
        %v1867 = vpop.f32.mrf.mxu0
        %v1868 = vadd.f32 %v425, %v1867
        %v1869 = vpop.f32.mrf.mxu0
        %v1870 = vadd.f32 %v425, %v1869
        %1871 = vmatmul.bf16.gmra.mxu0 %v580
        %v1872 = vpop.f32.mrf.mxu0
        %v1873 = vadd.f32 %v425, %v1872
        %v1874 = vpop.f32.mrf.mxu0
        %v1875 = vadd.f32 %v425, %v1874
        %1876 = vmatmul.bf16.gmra.mxu0 %v583
        %v1877 = vpop.f32.mrf.mxu0
        %v1878 = vadd.f32 %v425, %v1877
        %v1879 = vpop.f32.mrf.mxu0
        %v1880 = vadd.f32 %v425, %v1879
        %1881 = vmatmul.bf16.gmra.mxu0 %v586
        %v1882 = vpop.f32.mrf.mxu0
        %v1883 = vadd.f32 %v425, %v1882
        %v1884 = vpop.f32.mrf.mxu0
        %v1885 = vadd.f32 %v425, %v1884
        %1886 = vmatmul.bf16.gmra.mxu0 %v589
        %v1887 = vpop.f32.mrf.mxu0
        %v1888 = vadd.f32 %v425, %v1887
        %v1889 = vpop.f32.mrf.mxu0
        %v1890 = vadd.f32 %v425, %v1889
        %1891 = vmatmul.bf16.gmra.mxu0 %v592
        %v1892 = vpop.f32.mrf.mxu0
        %v1893 = vadd.f32 %v425, %v1892
        %v1894 = vpop.f32.mrf.mxu0
        %v1895 = vadd.f32 %v425, %v1894
        %1896 = vmatmul.bf16.gmra.mxu0 %v595
        %v1897 = vpop.f32.mrf.mxu0
        %v1898 = vadd.f32 %v425, %v1897
        %v1899 = vpop.f32.mrf.mxu0
        %v1900 = vadd.f32 %v425, %v1899
        %1901 = vmatmul.bf16.gmra.mxu0 %v598
        %v1902 = vpop.f32.mrf.mxu0
        %v1903 = vadd.f32 %v425, %v1902
        %v1904 = vpop.f32.mrf.mxu0
        %v1905 = vadd.f32 %v425, %v1904
        %1906 = vmatmul.bf16.gmra.mxu0 %v601
        %v1907 = vpop.f32.mrf.mxu0
        %v1908 = vadd.f32 %v425, %v1907
        %v1909 = vpop.f32.mrf.mxu0
        %v1910 = vadd.f32 %v425, %v1909
        %1911 = vmatmul.bf16.gmra.mxu0 %v604
        %v1912 = vpop.f32.mrf.mxu0
        %v1913 = vadd.f32 %v425, %v1912
        %v1914 = vpop.f32.mrf.mxu0
        %v1915 = vadd.f32 %v425, %v1914
        %1916 = vmatmul.bf16.gmra.mxu0 %v607
        %v1917 = vpop.f32.mrf.mxu0
        %v1918 = vadd.f32 %v425, %v1917
        %v1919 = vpop.f32.mrf.mxu0
        %v1920 = vadd.f32 %v425, %v1919
        %1921 = vmatmul.bf16.gmra.mxu0 %v610
        %v1922 = vpop.f32.mrf.mxu0
        %v1923 = vadd.f32 %v425, %v1922
        %v1924 = vpop.f32.mrf.mxu0
        %v1925 = vadd.f32 %v425, %v1924
        %1926 = vmatmul.bf16.gmra.mxu0 %v613
        %v1927 = vpop.f32.mrf.mxu0
        %v1928 = vadd.f32 %v425, %v1927
        %v1929 = vpop.f32.mrf.mxu0
        %v1930 = vadd.f32 %v425, %v1929
        %1931 = vmatmul.bf16.gmra.mxu0 %v616
        %v1932 = vpop.f32.mrf.mxu0
        %v1933 = vadd.f32 %v425, %v1932
        %v1934 = vpop.f32.mrf.mxu0
        %v1935 = vadd.f32 %v425, %v1934
        %1936 = vmatmul.bf16.gmra.mxu0 %v619
        %v1937 = vpop.f32.mrf.mxu0
        %v1938 = vadd.f32 %v425, %v1937
        %v1939 = vpop.f32.mrf.mxu0
        %v1940 = vadd.f32 %v425, %v1939
        %1941 = vmatmul.bf16.gmra.mxu0 %v622
        %v1942 = vpop.f32.mrf.mxu0
        %v1943 = vadd.f32 %v425, %v1942
        %v1944 = vpop.f32.mrf.mxu0
        %v1945 = vadd.f32 %v425, %v1944
        %1946 = vmatmul.bf16.gmra.mxu0 %v625
        %v1947 = vpop.f32.mrf.mxu0
        %v1948 = vadd.f32 %v425, %v1947
        %v1949 = vpop.f32.mrf.mxu0
        %v1950 = vadd.f32 %v425, %v1949
        %1951 = vmatmul.bf16.gmra.mxu0 %v628
        %v1952 = vpop.f32.mrf.mxu0
        %v1953 = vadd.f32 %v425, %v1952
        %v1954 = vpop.f32.mrf.mxu0
        %v1955 = vadd.f32 %v425, %v1954
        %1956 = vmatmul.bf16.gmra.mxu0 %v631
        %v1957 = vpop.f32.mrf.mxu0
        %v1958 = vadd.f32 %v425, %v1957
        %v1959 = vpop.f32.mrf.mxu0
        %v1960 = vadd.f32 %v425, %v1959
        %1961 = vdwg.mxu0
        %v1962 = vmax.f32 %v656, 0.0
        %v1963 = vmax.f32 %v658, 0.0
        %v1964 = vmax.f32 %v661, 0.0
        %v1965 = vmax.f32 %v663, 0.0
        %v1966 = vmax.f32 %v666, 0.0
        %v1967 = vmax.f32 %v668, 0.0
        %v1968 = vmax.f32 %v671, 0.0
        %v1969 = vmax.f32 %v673, 0.0
        %v1970 = vmax.f32 %v676, 0.0
        %v1971 = vmax.f32 %v678, 0.0
        %v1972 = vmax.f32 %v681, 0.0
        %v1973 = vmax.f32 %v683, 0.0
        %v1974 = vmax.f32 %v686, 0.0
        %v1975 = vmax.f32 %v688, 0.0
        %v1976 = vmax.f32 %v691, 0.0
        %v1977 = vmax.f32 %v693, 0.0
        %v1978 = vmax.f32 %v696, 0.0
        %v1979 = vmax.f32 %v698, 0.0
        %v1980 = vmax.f32 %v701, 0.0
        %v1981 = vmax.f32 %v703, 0.0
        %v1982 = vmax.f32 %v706, 0.0
        %v1983 = vmax.f32 %v708, 0.0
        %v1984 = vmax.f32 %v711, 0.0
        %v1985 = vmax.f32 %v713, 0.0
        %v1986 = vmax.f32 %v716, 0.0
        %v1987 = vmax.f32 %v718, 0.0
        %v1988 = vmax.f32 %v721, 0.0
        %v1989 = vmax.f32 %v723, 0.0
        %v1990 = vmax.f32 %v726, 0.0
        %v1991 = vmax.f32 %v728, 0.0
        %v1992 = vmax.f32 %v731, 0.0
        %v1993 = vmax.f32 %v733, 0.0
        %v1994 = vmax.f32 %v736, 0.0
        %v1995 = vmax.f32 %v738, 0.0
        %v1996 = vmax.f32 %v741, 0.0
        %v1997 = vmax.f32 %v743, 0.0
        %v1998 = vmax.f32 %v746, 0.0
        %v1999 = vmax.f32 %v748, 0.0
        %v2000 = vmax.f32 %v751, 0.0
        %v2001 = vmax.f32 %v753, 0.0
        %v2002 = vmax.f32 %v756, 0.0
        %v2003 = vmax.f32 %v758, 0.0
        %v2004 = vmax.f32 %v761, 0.0
        %v2005 = vmax.f32 %v763, 0.0
        %v2006 = vmax.f32 %v766, 0.0
        %v2007 = vmax.f32 %v768, 0.0
        %v2008 = vmax.f32 %v771, 0.0
        %v2009 = vmax.f32 %v773, 0.0
        %v2010 = vmax.f32 %v776, 0.0
        %v2011 = vmax.f32 %v778, 0.0
        %v2012 = vmax.f32 %v781, 0.0
        %v2013 = vmax.f32 %v783, 0.0
        %v2014 = vmax.f32 %v786, 0.0
        %v2015 = vmax.f32 %v788, 0.0
        %v2016 = vmax.f32 %v791, 0.0
        %v2017 = vmax.f32 %v793, 0.0
        %v2018 = vmax.f32 %v796, 0.0
        %v2019 = vmax.f32 %v798, 0.0
        %v2020 = vmax.f32 %v801, 0.0
        %v2021 = vmax.f32 %v803, 0.0
        %v2022 = vmax.f32 %v806, 0.0
        %v2023 = vmax.f32 %v808, 0.0
        %v2024 = vmax.f32 %v811, 0.0
        %v2025 = vmax.f32 %v813, 0.0
        %v2026 = vmax.f32 %v816, 0.0
        %v2027 = vmax.f32 %v818, 0.0
        %v2028 = vmax.f32 %v821, 0.0
        %v2029 = vmax.f32 %v823, 0.0
        %v2030 = vmax.f32 %v826, 0.0
        %v2031 = vmax.f32 %v828, 0.0
        %v2032 = vmax.f32 %v831, 0.0
        %v2033 = vmax.f32 %v833, 0.0
        %v2034 = vmax.f32 %v836, 0.0
        %v2035 = vmax.f32 %v838, 0.0
        %v2036 = vmax.f32 %v841, 0.0
        %v2037 = vmax.f32 %v843, 0.0
        %v2038 = vmax.f32 %v846, 0.0
        %v2039 = vmax.f32 %v848, 0.0
        %v2040 = vmax.f32 %v851, 0.0
        %v2041 = vmax.f32 %v853, 0.0
        %v2042 = vmax.f32 %v856, 0.0
        %v2043 = vmax.f32 %v858, 0.0
        %v2044 = vmax.f32 %v861, 0.0
        %v2045 = vmax.f32 %v863, 0.0
        %v2046 = vmax.f32 %v866, 0.0
        %v2047 = vmax.f32 %v868, 0.0
        %v2048 = vmax.f32 %v871, 0.0
        %v2049 = vmax.f32 %v873, 0.0
        %v2050 = vmax.f32 %v876, 0.0
        %v2051 = vmax.f32 %v878, 0.0
        %v2052 = vmax.f32 %v881, 0.0
        %v2053 = vmax.f32 %v883, 0.0
        %v2054 = vmax.f32 %v886, 0.0
        %v2055 = vmax.f32 %v888, 0.0
        %v2056 = vmax.f32 %v891, 0.0
        %v2057 = vmax.f32 %v893, 0.0
        %v2058 = vmax.f32 %v896, 0.0
        %v2059 = vmax.f32 %v898, 0.0
        %v2060 = vmax.f32 %v901, 0.0
        %v2061 = vmax.f32 %v903, 0.0
        %v2062 = vmax.f32 %v906, 0.0
        %v2063 = vmax.f32 %v908, 0.0
        %v2064 = vmax.f32 %v911, 0.0
        %v2065 = vmax.f32 %v913, 0.0
        %v2066 = vmax.f32 %v916, 0.0
        %v2067 = vmax.f32 %v918, 0.0
        %v2068 = vmax.f32 %v921, 0.0
        %v2069 = vmax.f32 %v923, 0.0
        %v2070 = vmax.f32 %v926, 0.0
        %v2071 = vmax.f32 %v928, 0.0
        %v2072 = vmax.f32 %v931, 0.0
        %v2073 = vmax.f32 %v933, 0.0
        %v2074 = vmax.f32 %v936, 0.0
        %v2075 = vmax.f32 %v938, 0.0
        %v2076 = vmax.f32 %v941, 0.0
        %v2077 = vmax.f32 %v943, 0.0
        %v2078 = vmax.f32 %v946, 0.0
        %v2079 = vmax.f32 %v948, 0.0
        %v2080 = vmax.f32 %v951, 0.0
        %v2081 = vmax.f32 %v953, 0.0
        %v2082 = vmax.f32 %v956, 0.0
        %v2083 = vmax.f32 %v958, 0.0
        %v2084 = vmax.f32 %v961, 0.0
        %v2085 = vmax.f32 %v963, 0.0
        %v2086 = vmax.f32 %v966, 0.0
        %v2087 = vmax.f32 %v968, 0.0
        %v2088 = vmax.f32 %v971, 0.0
        %v2089 = vmax.f32 %v973, 0.0
        %v2090 = vmul.f32 %v1962, %v1962
        %v2091 = vmul.f32 %v1963, %v1963
        %v2092 = vmul.f32 %v1964, %v1964
        %v2093 = vmul.f32 %v1965, %v1965
        %v2094 = vmul.f32 %v1966, %v1966
        %v2095 = vmul.f32 %v1967, %v1967
        %v2096 = vmul.f32 %v1968, %v1968
        %v2097 = vmul.f32 %v1969, %v1969
        %v2098 = vmul.f32 %v1970, %v1970
        %v2099 = vmul.f32 %v1971, %v1971
        %v2100 = vmul.f32 %v1972, %v1972
        %v2101 = vmul.f32 %v1973, %v1973
        %v2102 = vmul.f32 %v1974, %v1974
        %v2103 = vmul.f32 %v1975, %v1975
        %v2104 = vmul.f32 %v1976, %v1976
        %v2105 = vmul.f32 %v1977, %v1977
        %v2106 = vmul.f32 %v1978, %v1978
        %v2107 = vmul.f32 %v1979, %v1979
        %v2108 = vmul.f32 %v1980, %v1980
        %v2109 = vmul.f32 %v1981, %v1981
        %v2110 = vmul.f32 %v1982, %v1982
        %v2111 = vmul.f32 %v1983, %v1983
        %v2112 = vmul.f32 %v1984, %v1984
        %v2113 = vmul.f32 %v1985, %v1985
        %v2114 = vmul.f32 %v1986, %v1986
        %v2115 = vmul.f32 %v1987, %v1987
        %v2116 = vmul.f32 %v1988, %v1988
        %v2117 = vmul.f32 %v1989, %v1989
        %v2118 = vmul.f32 %v1990, %v1990
        %v2119 = vmul.f32 %v1991, %v1991
        %v2120 = vmul.f32 %v1992, %v1992
        %v2121 = vmul.f32 %v1993, %v1993
        %v2122 = vmul.f32 %v1994, %v1994
        %v2123 = vmul.f32 %v1995, %v1995
        %v2124 = vmul.f32 %v1996, %v1996
        %v2125 = vmul.f32 %v1997, %v1997
        %v2126 = vmul.f32 %v1998, %v1998
        %v2127 = vmul.f32 %v1999, %v1999
        %v2128 = vmul.f32 %v2000, %v2000
        %v2129 = vmul.f32 %v2001, %v2001
        %v2130 = vmul.f32 %v2002, %v2002
        %v2131 = vmul.f32 %v2003, %v2003
        %v2132 = vmul.f32 %v2004, %v2004
        %v2133 = vmul.f32 %v2005, %v2005
        %v2134 = vmul.f32 %v2006, %v2006
        %v2135 = vmul.f32 %v2007, %v2007
        %v2136 = vmul.f32 %v2008, %v2008
        %v2137 = vmul.f32 %v2009, %v2009
        %v2138 = vmul.f32 %v2010, %v2010
        %v2139 = vmul.f32 %v2011, %v2011
        %v2140 = vmul.f32 %v2012, %v2012
        %v2141 = vmul.f32 %v2013, %v2013
        %v2142 = vmul.f32 %v2014, %v2014
        %v2143 = vmul.f32 %v2015, %v2015
        %v2144 = vmul.f32 %v2016, %v2016
        %v2145 = vmul.f32 %v2017, %v2017
        %v2146 = vmul.f32 %v2018, %v2018
        %v2147 = vmul.f32 %v2019, %v2019
        %v2148 = vmul.f32 %v2020, %v2020
        %v2149 = vmul.f32 %v2021, %v2021
        %v2150 = vmul.f32 %v2022, %v2022
        %v2151 = vmul.f32 %v2023, %v2023
        %v2152 = vmul.f32 %v2024, %v2024
        %v2153 = vmul.f32 %v2025, %v2025
        %v2154 = vmul.f32 %v2026, %v2026
        %v2155 = vmul.f32 %v2027, %v2027
        %v2156 = vmul.f32 %v2028, %v2028
        %v2157 = vmul.f32 %v2029, %v2029
        %v2158 = vmul.f32 %v2030, %v2030
        %v2159 = vmul.f32 %v2031, %v2031
        %v2160 = vmul.f32 %v2032, %v2032
        %v2161 = vmul.f32 %v2033, %v2033
        %v2162 = vmul.f32 %v2034, %v2034
        %v2163 = vmul.f32 %v2035, %v2035
        %v2164 = vmul.f32 %v2036, %v2036
        %v2165 = vmul.f32 %v2037, %v2037
        %v2166 = vmul.f32 %v2038, %v2038
        %v2167 = vmul.f32 %v2039, %v2039
        %v2168 = vmul.f32 %v2040, %v2040
        %v2169 = vmul.f32 %v2041, %v2041
        %v2170 = vmul.f32 %v2042, %v2042
        %v2171 = vmul.f32 %v2043, %v2043
        %v2172 = vmul.f32 %v2044, %v2044
        %v2173 = vmul.f32 %v2045, %v2045
        %v2174 = vmul.f32 %v2046, %v2046
        %v2175 = vmul.f32 %v2047, %v2047
        %v2176 = vmul.f32 %v2048, %v2048
        %v2177 = vmul.f32 %v2049, %v2049
        %v2178 = vmul.f32 %v2050, %v2050
        %v2179 = vmul.f32 %v2051, %v2051
        %v2180 = vmul.f32 %v2052, %v2052
        %v2181 = vmul.f32 %v2053, %v2053
        %v2182 = vmul.f32 %v2054, %v2054
        %v2183 = vmul.f32 %v2055, %v2055
        %v2184 = vmul.f32 %v2056, %v2056
        %v2185 = vmul.f32 %v2057, %v2057
        %v2186 = vmul.f32 %v2058, %v2058
        %v2187 = vmul.f32 %v2059, %v2059
        %v2188 = vmul.f32 %v2060, %v2060
        %v2189 = vmul.f32 %v2061, %v2061
        %v2190 = vmul.f32 %v2062, %v2062
        %v2191 = vmul.f32 %v2063, %v2063
        %v2192 = vmul.f32 %v2064, %v2064
        %v2193 = vmul.f32 %v2065, %v2065
        %v2194 = vmul.f32 %v2066, %v2066
        %v2195 = vmul.f32 %v2067, %v2067
        %v2196 = vmul.f32 %v2068, %v2068
        %v2197 = vmul.f32 %v2069, %v2069
        %v2198 = vmul.f32 %v2070, %v2070
        %v2199 = vmul.f32 %v2071, %v2071
        %v2200 = vmul.f32 %v2072, %v2072
        %v2201 = vmul.f32 %v2073, %v2073
        %v2202 = vmul.f32 %v2074, %v2074
        %v2203 = vmul.f32 %v2075, %v2075
        %v2204 = vmul.f32 %v2076, %v2076
        %v2205 = vmul.f32 %v2077, %v2077
        %v2206 = vmul.f32 %v2078, %v2078
        %v2207 = vmul.f32 %v2079, %v2079
        %v2208 = vmul.f32 %v2080, %v2080
        %v2209 = vmul.f32 %v2081, %v2081
        %v2210 = vmul.f32 %v2082, %v2082
        %v2211 = vmul.f32 %v2083, %v2083
        %v2212 = vmul.f32 %v2084, %v2084
        %v2213 = vmul.f32 %v2085, %v2085
        %v2214 = vmul.f32 %v2086, %v2086
        %v2215 = vmul.f32 %v2087, %v2087
        %v2216 = vmul.f32 %v2088, %v2088
        %v2217 = vmul.f32 %v2089, %v2089
        %v2218 = vpack.c.bf16 %v2091, %v2090
        %v2219 = vpack.c.bf16 %v2093, %v2092
        %v2220 = vpack.c.bf16 %v2095, %v2094
        %v2221 = vpack.c.bf16 %v2097, %v2096
        %v2222 = vpack.c.bf16 %v2099, %v2098
        %v2223 = vpack.c.bf16 %v2101, %v2100
        %v2224 = vpack.c.bf16 %v2103, %v2102
        %v2225 = vpack.c.bf16 %v2105, %v2104
        %v2226 = vpack.c.bf16 %v2107, %v2106
        %v2227 = vpack.c.bf16 %v2109, %v2108
        %v2228 = vpack.c.bf16 %v2111, %v2110
        %v2229 = vpack.c.bf16 %v2113, %v2112
        %v2230 = vpack.c.bf16 %v2115, %v2114
        %v2231 = vpack.c.bf16 %v2117, %v2116
        %v2232 = vpack.c.bf16 %v2119, %v2118
        %v2233 = vpack.c.bf16 %v2121, %v2120
        %v2234 = vpack.c.bf16 %v2123, %v2122
        %v2235 = vpack.c.bf16 %v2125, %v2124
        %v2236 = vpack.c.bf16 %v2127, %v2126
        %v2237 = vpack.c.bf16 %v2129, %v2128
        %v2238 = vpack.c.bf16 %v2131, %v2130
        %v2239 = vpack.c.bf16 %v2133, %v2132
        %v2240 = vpack.c.bf16 %v2135, %v2134
        %v2241 = vpack.c.bf16 %v2137, %v2136
        %v2242 = vpack.c.bf16 %v2139, %v2138
        %v2243 = vpack.c.bf16 %v2141, %v2140
        %v2244 = vpack.c.bf16 %v2143, %v2142
        %v2245 = vpack.c.bf16 %v2145, %v2144
        %v2246 = vpack.c.bf16 %v2147, %v2146
        %v2247 = vpack.c.bf16 %v2149, %v2148
        %v2248 = vpack.c.bf16 %v2151, %v2150
        %v2249 = vpack.c.bf16 %v2153, %v2152
        %v2250 = vpack.c.bf16 %v2155, %v2154
        %v2251 = vpack.c.bf16 %v2157, %v2156
        %v2252 = vpack.c.bf16 %v2159, %v2158
        %v2253 = vpack.c.bf16 %v2161, %v2160
        %v2254 = vpack.c.bf16 %v2163, %v2162
        %v2255 = vpack.c.bf16 %v2165, %v2164
        %v2256 = vpack.c.bf16 %v2167, %v2166
        %v2257 = vpack.c.bf16 %v2169, %v2168
        %v2258 = vpack.c.bf16 %v2171, %v2170
        %v2259 = vpack.c.bf16 %v2173, %v2172
        %v2260 = vpack.c.bf16 %v2175, %v2174
        %v2261 = vpack.c.bf16 %v2177, %v2176
        %v2262 = vpack.c.bf16 %v2179, %v2178
        %v2263 = vpack.c.bf16 %v2181, %v2180
        %v2264 = vpack.c.bf16 %v2183, %v2182
        %v2265 = vpack.c.bf16 %v2185, %v2184
        %v2266 = vpack.c.bf16 %v2187, %v2186
        %v2267 = vpack.c.bf16 %v2189, %v2188
        %v2268 = vpack.c.bf16 %v2191, %v2190
        %v2269 = vpack.c.bf16 %v2193, %v2192
        %v2270 = vpack.c.bf16 %v2195, %v2194
        %v2271 = vpack.c.bf16 %v2197, %v2196
        %v2272 = vpack.c.bf16 %v2199, %v2198
        %v2273 = vpack.c.bf16 %v2201, %v2200
        %v2274 = vpack.c.bf16 %v2203, %v2202
        %v2275 = vpack.c.bf16 %v2205, %v2204
        %v2276 = vpack.c.bf16 %v2207, %v2206
        %v2277 = vpack.c.bf16 %v2209, %v2208
        %v2278 = vpack.c.bf16 %v2211, %v2210
        %v2279 = vpack.c.bf16 %v2213, %v2212
        %v2280 = vpack.c.bf16 %v2215, %v2214
        %v2281 = vpack.c.bf16 %v2217, %v2216
        %v2282 = vld [vmem:[%s3] sm:$0xf]
        %v2283 = vld [vmem:[%s3 + $0x4] sm:$0xf]
        %v2284 = vld [vmem:[%s3 + $0x8] sm:$0xf]
        %v2285 = vld [vmem:[%s3 + $0xc] sm:$0xf]
        %v2286 = vld [vmem:[%s3 + $0x10] sm:$0xf]
        %v2287 = vld [vmem:[%s3 + $0x14] sm:$0xf]
        %v2288 = vld [vmem:[%s3 + $0x18] sm:$0xf]
        %v2289 = vld [vmem:[%s3 + $0x1c] sm:$0xf]
        %v2290 = vld [vmem:[%s3 + $0x20] sm:$0xf]
        %v2291 = vld [vmem:[%s3 + $0x24] sm:$0xf]
        %v2292 = vld [vmem:[%s3 + $0x28] sm:$0xf]
        %v2293 = vld [vmem:[%s3 + $0x2c] sm:$0xf]
        %v2294 = vld [vmem:[%s3 + $0x30] sm:$0xf]
        %v2295 = vld [vmem:[%s3 + $0x34] sm:$0xf]
        %v2296 = vld [vmem:[%s3 + $0x38] sm:$0xf]
        %v2297 = vld [vmem:[%s3 + $0x3c] sm:$0xf]
        %v2314 = vunpack.c.l.b16 %v2282
        %v2315 = vunpack.c.l.b16 %v2283
        %v2316 = vunpack.c.l.b16 %v2284
        %v2317 = vunpack.c.l.b16 %v2285
        %v2318 = vunpack.c.l.b16 %v2286
        %v2319 = vunpack.c.l.b16 %v2287
        %v2320 = vunpack.c.l.b16 %v2288
        %v2321 = vunpack.c.l.b16 %v2289
        %v2322 = vunpack.c.l.b16 %v2290
        %v2323 = vunpack.c.l.b16 %v2291
        %v2324 = vunpack.c.l.b16 %v2292
        %v2325 = vunpack.c.l.b16 %v2293
        %v2326 = vunpack.c.l.b16 %v2294
        %v2327 = vunpack.c.l.b16 %v2295
        %v2328 = vunpack.c.l.b16 %v2296
        %v2329 = vunpack.c.l.b16 %v2297
        %v2330 = vpack.c.b16 %v2315, %v2314
        %v2331 = vpack.c.b16 %v2317, %v2316
        %v2332 = vpack.c.b16 %v2319, %v2318
        %v2333 = vpack.c.b16 %v2321, %v2320
        %v2334 = vpack.c.b16 %v2323, %v2322
        %v2335 = vpack.c.b16 %v2325, %v2324
        %v2336 = vpack.c.b16 %v2327, %v2326
        %v2337 = vpack.c.b16 %v2329, %v2328
        %2346 = vmatpush.bf16.msra.mxu0 %v2337
        %2347 = vmatpush.bf16.msra.mxu0 %v2336
        %2348 = vmatpush.bf16.msra.mxu0 %v2335
        %2349 = vmatpush.bf16.msra.mxu0 %v2334
        %2350 = vmatpush.bf16.msra.mxu0 %v2333
        %2351 = vmatpush.bf16.msra.mxu0 %v2332
        %2352 = vmatpush.bf16.msra.mxu0 %v2331
        %2353 = vmatpush.bf16.msra.mxu0 %v2330
        %2354 = vmatmul.bf16.gmra.mxu0 %v2218
        %v2355 = vpop.f32.mrf.mxu0
        %v2356 = vadd.f32 %v985, %v2355
        %v2357 = vpop.f32.mrf.mxu0
        %v2358 = vadd.f32 %v987, %v2357
        %2359 = vmatmul.bf16.gmra.mxu0 %v2219
        %v2360 = vpop.f32.mrf.mxu0
        %v2361 = vadd.f32 %v990, %v2360
        %v2362 = vpop.f32.mrf.mxu0
        %v2363 = vadd.f32 %v992, %v2362
        %2364 = vmatmul.bf16.gmra.mxu0 %v2220
        %v2365 = vpop.f32.mrf.mxu0
        %v2366 = vadd.f32 %v995, %v2365
        %v2367 = vpop.f32.mrf.mxu0
        %v2368 = vadd.f32 %v997, %v2367
        %2369 = vmatmul.bf16.gmra.mxu0 %v2221
        %v2370 = vpop.f32.mrf.mxu0
        %v2371 = vadd.f32 %v1000, %v2370
        %v2372 = vpop.f32.mrf.mxu0
        %v2373 = vadd.f32 %v1002, %v2372
        %2374 = vmatmul.bf16.gmra.mxu0 %v2222
        %v2375 = vpop.f32.mrf.mxu0
        %v2376 = vadd.f32 %v1005, %v2375
        %v2377 = vpop.f32.mrf.mxu0
        %v2378 = vadd.f32 %v1007, %v2377
        %2379 = vmatmul.bf16.gmra.mxu0 %v2223
        %v2380 = vpop.f32.mrf.mxu0
        %v2381 = vadd.f32 %v1010, %v2380
        %v2382 = vpop.f32.mrf.mxu0
        %v2383 = vadd.f32 %v1012, %v2382
        %2384 = vmatmul.bf16.gmra.mxu0 %v2224
        %v2385 = vpop.f32.mrf.mxu0
        %v2386 = vadd.f32 %v1015, %v2385
        %v2387 = vpop.f32.mrf.mxu0
        %v2388 = vadd.f32 %v1017, %v2387
        %2389 = vmatmul.bf16.gmra.mxu0 %v2225
        %v2390 = vpop.f32.mrf.mxu0
        %v2391 = vadd.f32 %v1020, %v2390
        %v2392 = vpop.f32.mrf.mxu0
        %v2393 = vadd.f32 %v1022, %v2392
        %2394 = vmatmul.bf16.gmra.mxu0 %v2226
        %v2395 = vpop.f32.mrf.mxu0
        %v2396 = vadd.f32 %v1025, %v2395
        %v2397 = vpop.f32.mrf.mxu0
        %v2398 = vadd.f32 %v1027, %v2397
        %2399 = vmatmul.bf16.gmra.mxu0 %v2227
        %v2400 = vpop.f32.mrf.mxu0
        %v2401 = vadd.f32 %v1030, %v2400
        %v2402 = vpop.f32.mrf.mxu0
        %v2403 = vadd.f32 %v1032, %v2402
        %2404 = vmatmul.bf16.gmra.mxu0 %v2228
        %v2405 = vpop.f32.mrf.mxu0
        %v2406 = vadd.f32 %v1035, %v2405
        %v2407 = vpop.f32.mrf.mxu0
        %v2408 = vadd.f32 %v1037, %v2407
        %2409 = vmatmul.bf16.gmra.mxu0 %v2229
        %v2410 = vpop.f32.mrf.mxu0
        %v2411 = vadd.f32 %v1040, %v2410
        %v2412 = vpop.f32.mrf.mxu0
        %v2413 = vadd.f32 %v1042, %v2412
        %2414 = vmatmul.bf16.gmra.mxu0 %v2230
        %v2415 = vpop.f32.mrf.mxu0
        %v2416 = vadd.f32 %v1045, %v2415
        %v2417 = vpop.f32.mrf.mxu0
        %v2418 = vadd.f32 %v1047, %v2417
        %2419 = vmatmul.bf16.gmra.mxu0 %v2231
        %v2420 = vpop.f32.mrf.mxu0
        %v2421 = vadd.f32 %v1050, %v2420
        %v2422 = vpop.f32.mrf.mxu0
        %v2423 = vadd.f32 %v1052, %v2422
        %2424 = vmatmul.bf16.gmra.mxu0 %v2232
        %v2425 = vpop.f32.mrf.mxu0
        %v2426 = vadd.f32 %v1055, %v2425
        %v2427 = vpop.f32.mrf.mxu0
        %v2428 = vadd.f32 %v1057, %v2427
        %2429 = vmatmul.bf16.gmra.mxu0 %v2233
        %v2430 = vpop.f32.mrf.mxu0
        %v2431 = vadd.f32 %v1060, %v2430
        %v2432 = vpop.f32.mrf.mxu0
        %v2433 = vadd.f32 %v1062, %v2432
        %2434 = vmatmul.bf16.gmra.mxu0 %v2234
        %v2435 = vpop.f32.mrf.mxu0
        %v2436 = vadd.f32 %v1065, %v2435
        %v2437 = vpop.f32.mrf.mxu0
        %v2438 = vadd.f32 %v1067, %v2437
        %2439 = vmatmul.bf16.gmra.mxu0 %v2235
        %v2440 = vpop.f32.mrf.mxu0
        %v2441 = vadd.f32 %v1070, %v2440
        %v2442 = vpop.f32.mrf.mxu0
        %v2443 = vadd.f32 %v1072, %v2442
        %2444 = vmatmul.bf16.gmra.mxu0 %v2236
        %v2445 = vpop.f32.mrf.mxu0
        %v2446 = vadd.f32 %v1075, %v2445
        %v2447 = vpop.f32.mrf.mxu0
        %v2448 = vadd.f32 %v1077, %v2447
        %2449 = vmatmul.bf16.gmra.mxu0 %v2237
        %v2450 = vpop.f32.mrf.mxu0
        %v2451 = vadd.f32 %v1080, %v2450
        %v2452 = vpop.f32.mrf.mxu0
        %v2453 = vadd.f32 %v1082, %v2452
        %2454 = vmatmul.bf16.gmra.mxu0 %v2238
        %v2455 = vpop.f32.mrf.mxu0
        %v2456 = vadd.f32 %v1085, %v2455
        %v2457 = vpop.f32.mrf.mxu0
        %v2458 = vadd.f32 %v1087, %v2457
        %2459 = vmatmul.bf16.gmra.mxu0 %v2239
        %v2460 = vpop.f32.mrf.mxu0
        %v2461 = vadd.f32 %v1090, %v2460
        %v2462 = vpop.f32.mrf.mxu0
        %v2463 = vadd.f32 %v1092, %v2462
        %2464 = vmatmul.bf16.gmra.mxu0 %v2240
        %v2465 = vpop.f32.mrf.mxu0
        %v2466 = vadd.f32 %v1095, %v2465
        %v2467 = vpop.f32.mrf.mxu0
        %v2468 = vadd.f32 %v1097, %v2467
        %2469 = vmatmul.bf16.gmra.mxu0 %v2241
        %v2470 = vpop.f32.mrf.mxu0
        %v2471 = vadd.f32 %v1100, %v2470
        %v2472 = vpop.f32.mrf.mxu0
        %v2473 = vadd.f32 %v1102, %v2472
        %2474 = vmatmul.bf16.gmra.mxu0 %v2242
        %v2475 = vpop.f32.mrf.mxu0
        %v2476 = vadd.f32 %v1105, %v2475
        %v2477 = vpop.f32.mrf.mxu0
        %v2478 = vadd.f32 %v1107, %v2477
        %2479 = vmatmul.bf16.gmra.mxu0 %v2243
        %v2480 = vpop.f32.mrf.mxu0
        %v2481 = vadd.f32 %v1110, %v2480
        %v2482 = vpop.f32.mrf.mxu0
        %v2483 = vadd.f32 %v1112, %v2482
        %2484 = vmatmul.bf16.gmra.mxu0 %v2244
        %v2485 = vpop.f32.mrf.mxu0
        %v2486 = vadd.f32 %v1115, %v2485
        %v2487 = vpop.f32.mrf.mxu0
        %v2488 = vadd.f32 %v1117, %v2487
        %2489 = vmatmul.bf16.gmra.mxu0 %v2245
        %v2490 = vpop.f32.mrf.mxu0
        %v2491 = vadd.f32 %v1120, %v2490
        %v2492 = vpop.f32.mrf.mxu0
        %v2493 = vadd.f32 %v1122, %v2492
        %2494 = vmatmul.bf16.gmra.mxu0 %v2246
        %v2495 = vpop.f32.mrf.mxu0
        %v2496 = vadd.f32 %v1125, %v2495
        %v2497 = vpop.f32.mrf.mxu0
        %v2498 = vadd.f32 %v1127, %v2497
        %2499 = vmatmul.bf16.gmra.mxu0 %v2247
        %v2500 = vpop.f32.mrf.mxu0
        %v2501 = vadd.f32 %v1130, %v2500
        %v2502 = vpop.f32.mrf.mxu0
        %v2503 = vadd.f32 %v1132, %v2502
        %2504 = vmatmul.bf16.gmra.mxu0 %v2248
        %v2505 = vpop.f32.mrf.mxu0
        %v2506 = vadd.f32 %v1135, %v2505
        %v2507 = vpop.f32.mrf.mxu0
        %v2508 = vadd.f32 %v1137, %v2507
        %2509 = vmatmul.bf16.gmra.mxu0 %v2249
        %v2510 = vpop.f32.mrf.mxu0
        %v2511 = vadd.f32 %v1140, %v2510
        %v2512 = vpop.f32.mrf.mxu0
        %v2513 = vadd.f32 %v1142, %v2512
        %2514 = vmatmul.bf16.gmra.mxu0 %v2250
        %v2515 = vpop.f32.mrf.mxu0
        %v2516 = vadd.f32 %v1145, %v2515
        %v2517 = vpop.f32.mrf.mxu0
        %v2518 = vadd.f32 %v1147, %v2517
        %2519 = vmatmul.bf16.gmra.mxu0 %v2251
        %v2520 = vpop.f32.mrf.mxu0
        %v2521 = vadd.f32 %v1150, %v2520
        %v2522 = vpop.f32.mrf.mxu0
        %v2523 = vadd.f32 %v1152, %v2522
        %2524 = vmatmul.bf16.gmra.mxu0 %v2252
        %v2525 = vpop.f32.mrf.mxu0
        %v2526 = vadd.f32 %v1155, %v2525
        %v2527 = vpop.f32.mrf.mxu0
        %v2528 = vadd.f32 %v1157, %v2527
        %2529 = vmatmul.bf16.gmra.mxu0 %v2253
        %v2530 = vpop.f32.mrf.mxu0
        %v2531 = vadd.f32 %v1160, %v2530
        %v2532 = vpop.f32.mrf.mxu0
        %v2533 = vadd.f32 %v1162, %v2532
        %2534 = vmatmul.bf16.gmra.mxu0 %v2254
        %v2535 = vpop.f32.mrf.mxu0
        %v2536 = vadd.f32 %v1165, %v2535
        %v2537 = vpop.f32.mrf.mxu0
        %v2538 = vadd.f32 %v1167, %v2537
        %2539 = vmatmul.bf16.gmra.mxu0 %v2255
        %v2540 = vpop.f32.mrf.mxu0
        %v2541 = vadd.f32 %v1170, %v2540
        %v2542 = vpop.f32.mrf.mxu0
        %v2543 = vadd.f32 %v1172, %v2542
        %2544 = vmatmul.bf16.gmra.mxu0 %v2256
        %v2545 = vpop.f32.mrf.mxu0
        %v2546 = vadd.f32 %v1175, %v2545
        %v2547 = vpop.f32.mrf.mxu0
        %v2548 = vadd.f32 %v1177, %v2547
        %2549 = vmatmul.bf16.gmra.mxu0 %v2257
        %v2550 = vpop.f32.mrf.mxu0
        %v2551 = vadd.f32 %v1180, %v2550
        %v2552 = vpop.f32.mrf.mxu0
        %v2553 = vadd.f32 %v1182, %v2552
        %2554 = vmatmul.bf16.gmra.mxu0 %v2258
        %v2555 = vpop.f32.mrf.mxu0
        %v2556 = vadd.f32 %v1185, %v2555
        %v2557 = vpop.f32.mrf.mxu0
        %v2558 = vadd.f32 %v1187, %v2557
        %2559 = vmatmul.bf16.gmra.mxu0 %v2259
        %v2560 = vpop.f32.mrf.mxu0
        %v2561 = vadd.f32 %v1190, %v2560
        %v2562 = vpop.f32.mrf.mxu0
        %v2563 = vadd.f32 %v1192, %v2562
        %2564 = vmatmul.bf16.gmra.mxu0 %v2260
        %v2565 = vpop.f32.mrf.mxu0
        %v2566 = vadd.f32 %v1195, %v2565
        %v2567 = vpop.f32.mrf.mxu0
        %v2568 = vadd.f32 %v1197, %v2567
        %2569 = vmatmul.bf16.gmra.mxu0 %v2261
        %v2570 = vpop.f32.mrf.mxu0
        %v2571 = vadd.f32 %v1200, %v2570
        %v2572 = vpop.f32.mrf.mxu0
        %v2573 = vadd.f32 %v1202, %v2572
        %2574 = vmatmul.bf16.gmra.mxu0 %v2262
        %v2575 = vpop.f32.mrf.mxu0
        %v2576 = vadd.f32 %v1205, %v2575
        %v2577 = vpop.f32.mrf.mxu0
        %v2578 = vadd.f32 %v1207, %v2577
        %2579 = vmatmul.bf16.gmra.mxu0 %v2263
        %v2580 = vpop.f32.mrf.mxu0
        %v2581 = vadd.f32 %v1210, %v2580
        %v2582 = vpop.f32.mrf.mxu0
        %v2583 = vadd.f32 %v1212, %v2582
        %2584 = vmatmul.bf16.gmra.mxu0 %v2264
        %v2585 = vpop.f32.mrf.mxu0
        %v2586 = vadd.f32 %v1215, %v2585
        %v2587 = vpop.f32.mrf.mxu0
        %v2588 = vadd.f32 %v1217, %v2587
        %2589 = vmatmul.bf16.gmra.mxu0 %v2265
        %v2590 = vpop.f32.mrf.mxu0
        %v2591 = vadd.f32 %v1220, %v2590
        %v2592 = vpop.f32.mrf.mxu0
        %v2593 = vadd.f32 %v1222, %v2592
        %2594 = vmatmul.bf16.gmra.mxu0 %v2266
        %v2595 = vpop.f32.mrf.mxu0
        %v2596 = vadd.f32 %v1225, %v2595
        %v2597 = vpop.f32.mrf.mxu0
        %v2598 = vadd.f32 %v1227, %v2597
        %2599 = vmatmul.bf16.gmra.mxu0 %v2267
        %v2600 = vpop.f32.mrf.mxu0
        %v2601 = vadd.f32 %v1230, %v2600
        %v2602 = vpop.f32.mrf.mxu0
        %v2603 = vadd.f32 %v1232, %v2602
        %2604 = vmatmul.bf16.gmra.mxu0 %v2268
        %v2605 = vpop.f32.mrf.mxu0
        %v2606 = vadd.f32 %v1235, %v2605
        %v2607 = vpop.f32.mrf.mxu0
        %v2608 = vadd.f32 %v1237, %v2607
        %2609 = vmatmul.bf16.gmra.mxu0 %v2269
        %v2610 = vpop.f32.mrf.mxu0
        %v2611 = vadd.f32 %v1240, %v2610
        %v2612 = vpop.f32.mrf.mxu0
        %v2613 = vadd.f32 %v1242, %v2612
        %2614 = vmatmul.bf16.gmra.mxu0 %v2270
        %v2615 = vpop.f32.mrf.mxu0
        %v2616 = vadd.f32 %v1245, %v2615
        %v2617 = vpop.f32.mrf.mxu0
        %v2618 = vadd.f32 %v1247, %v2617
        %2619 = vmatmul.bf16.gmra.mxu0 %v2271
        %v2620 = vpop.f32.mrf.mxu0
        %v2621 = vadd.f32 %v1250, %v2620
        %v2622 = vpop.f32.mrf.mxu0
        %v2623 = vadd.f32 %v1252, %v2622
        %2624 = vmatmul.bf16.gmra.mxu0 %v2272
        %v2625 = vpop.f32.mrf.mxu0
        %v2626 = vadd.f32 %v1255, %v2625
        %v2627 = vpop.f32.mrf.mxu0
        %v2628 = vadd.f32 %v1257, %v2627
        %2629 = vmatmul.bf16.gmra.mxu0 %v2273
        %v2630 = vpop.f32.mrf.mxu0
        %v2631 = vadd.f32 %v1260, %v2630
        %v2632 = vpop.f32.mrf.mxu0
        %v2633 = vadd.f32 %v1262, %v2632
        %2634 = vmatmul.bf16.gmra.mxu0 %v2274
        %v2635 = vpop.f32.mrf.mxu0
        %v2636 = vadd.f32 %v1265, %v2635
        %v2637 = vpop.f32.mrf.mxu0
        %v2638 = vadd.f32 %v1267, %v2637
        %2639 = vmatmul.bf16.gmra.mxu0 %v2275
        %v2640 = vpop.f32.mrf.mxu0
        %v2641 = vadd.f32 %v1270, %v2640
        %v2642 = vpop.f32.mrf.mxu0
        %v2643 = vadd.f32 %v1272, %v2642
        %2644 = vmatmul.bf16.gmra.mxu0 %v2276
        %v2645 = vpop.f32.mrf.mxu0
        %v2646 = vadd.f32 %v1275, %v2645
        %v2647 = vpop.f32.mrf.mxu0
        %v2648 = vadd.f32 %v1277, %v2647
        %2649 = vmatmul.bf16.gmra.mxu0 %v2277
        %v2650 = vpop.f32.mrf.mxu0
        %v2651 = vadd.f32 %v1280, %v2650
        %v2652 = vpop.f32.mrf.mxu0
        %v2653 = vadd.f32 %v1282, %v2652
        %2654 = vmatmul.bf16.gmra.mxu0 %v2278
        %v2655 = vpop.f32.mrf.mxu0
        %v2656 = vadd.f32 %v1285, %v2655
        %v2657 = vpop.f32.mrf.mxu0
        %v2658 = vadd.f32 %v1287, %v2657
        %2659 = vmatmul.bf16.gmra.mxu0 %v2279
        %v2660 = vpop.f32.mrf.mxu0
        %v2661 = vadd.f32 %v1290, %v2660
        %v2662 = vpop.f32.mrf.mxu0
        %v2663 = vadd.f32 %v1292, %v2662
        %2664 = vmatmul.bf16.gmra.mxu0 %v2280
        %v2665 = vpop.f32.mrf.mxu0
        %v2666 = vadd.f32 %v1295, %v2665
        %v2667 = vpop.f32.mrf.mxu0
        %v2668 = vadd.f32 %v1297, %v2667
        %2669 = vmatmul.bf16.gmra.mxu0 %v2281
        %v2670 = vpop.f32.mrf.mxu0
        %v2671 = vadd.f32 %v1300, %v2670
        %v2672 = vpop.f32.mrf.mxu0
        %v2673 = vadd.f32 %v1302, %v2672
        %2674 = vdwg.mxu0
        %v2675 = vmax.f32 %v2356, 0.0
        %v2676 = vmax.f32 %v2358, 0.0
        %v2677 = vmax.f32 %v2361, 0.0
        %v2678 = vmax.f32 %v2363, 0.0
        %v2679 = vmax.f32 %v2366, 0.0
        %v2680 = vmax.f32 %v2368, 0.0
        %v2681 = vmax.f32 %v2371, 0.0
        %v2682 = vmax.f32 %v2373, 0.0
        %v2683 = vmax.f32 %v2376, 0.0
        %v2684 = vmax.f32 %v2378, 0.0
        %v2685 = vmax.f32 %v2381, 0.0
        %v2686 = vmax.f32 %v2383, 0.0
        %v2687 = vmax.f32 %v2386, 0.0
        %v2688 = vmax.f32 %v2388, 0.0
        %v2689 = vmax.f32 %v2391, 0.0
        %v2690 = vmax.f32 %v2393, 0.0
        %v2691 = vmax.f32 %v2396, 0.0
        %v2692 = vmax.f32 %v2398, 0.0
        %v2693 = vmax.f32 %v2401, 0.0
        %v2694 = vmax.f32 %v2403, 0.0
        %v2695 = vmax.f32 %v2406, 0.0
        %v2696 = vmax.f32 %v2408, 0.0
        %v2697 = vmax.f32 %v2411, 0.0
        %v2698 = vmax.f32 %v2413, 0.0
        %v2699 = vmax.f32 %v2416, 0.0
        %v2700 = vmax.f32 %v2418, 0.0
        %v2701 = vmax.f32 %v2421, 0.0
        %v2702 = vmax.f32 %v2423, 0.0
        %v2703 = vmax.f32 %v2426, 0.0
        %v2704 = vmax.f32 %v2428, 0.0
        %v2705 = vmax.f32 %v2431, 0.0
        %v2706 = vmax.f32 %v2433, 0.0
        %v2707 = vmax.f32 %v2436, 0.0
        %v2708 = vmax.f32 %v2438, 0.0
        %v2709 = vmax.f32 %v2441, 0.0
        %v2710 = vmax.f32 %v2443, 0.0
        %v2711 = vmax.f32 %v2446, 0.0
        %v2712 = vmax.f32 %v2448, 0.0
        %v2713 = vmax.f32 %v2451, 0.0
        %v2714 = vmax.f32 %v2453, 0.0
        %v2715 = vmax.f32 %v2456, 0.0
        %v2716 = vmax.f32 %v2458, 0.0
        %v2717 = vmax.f32 %v2461, 0.0
        %v2718 = vmax.f32 %v2463, 0.0
        %v2719 = vmax.f32 %v2466, 0.0
        %v2720 = vmax.f32 %v2468, 0.0
        %v2721 = vmax.f32 %v2471, 0.0
        %v2722 = vmax.f32 %v2473, 0.0
        %v2723 = vmax.f32 %v2476, 0.0
        %v2724 = vmax.f32 %v2478, 0.0
        %v2725 = vmax.f32 %v2481, 0.0
        %v2726 = vmax.f32 %v2483, 0.0
        %v2727 = vmax.f32 %v2486, 0.0
        %v2728 = vmax.f32 %v2488, 0.0
        %v2729 = vmax.f32 %v2491, 0.0
        %v2730 = vmax.f32 %v2493, 0.0
        %v2731 = vmax.f32 %v2496, 0.0
        %v2732 = vmax.f32 %v2498, 0.0
        %v2733 = vmax.f32 %v2501, 0.0
        %v2734 = vmax.f32 %v2503, 0.0
        %v2735 = vmax.f32 %v2506, 0.0
        %v2736 = vmax.f32 %v2508, 0.0
        %v2737 = vmax.f32 %v2511, 0.0
        %v2738 = vmax.f32 %v2513, 0.0
        %v2739 = vmax.f32 %v2516, 0.0
        %v2740 = vmax.f32 %v2518, 0.0
        %v2741 = vmax.f32 %v2521, 0.0
        %v2742 = vmax.f32 %v2523, 0.0
        %v2743 = vmax.f32 %v2526, 0.0
        %v2744 = vmax.f32 %v2528, 0.0
        %v2745 = vmax.f32 %v2531, 0.0
        %v2746 = vmax.f32 %v2533, 0.0
        %v2747 = vmax.f32 %v2536, 0.0
        %v2748 = vmax.f32 %v2538, 0.0
        %v2749 = vmax.f32 %v2541, 0.0
        %v2750 = vmax.f32 %v2543, 0.0
        %v2751 = vmax.f32 %v2546, 0.0
        %v2752 = vmax.f32 %v2548, 0.0
        %v2753 = vmax.f32 %v2551, 0.0
        %v2754 = vmax.f32 %v2553, 0.0
        %v2755 = vmax.f32 %v2556, 0.0
        %v2756 = vmax.f32 %v2558, 0.0
        %v2757 = vmax.f32 %v2561, 0.0
        %v2758 = vmax.f32 %v2563, 0.0
        %v2759 = vmax.f32 %v2566, 0.0
        %v2760 = vmax.f32 %v2568, 0.0
        %v2761 = vmax.f32 %v2571, 0.0
        %v2762 = vmax.f32 %v2573, 0.0
        %v2763 = vmax.f32 %v2576, 0.0
        %v2764 = vmax.f32 %v2578, 0.0
        %v2765 = vmax.f32 %v2581, 0.0
        %v2766 = vmax.f32 %v2583, 0.0
        %v2767 = vmax.f32 %v2586, 0.0
        %v2768 = vmax.f32 %v2588, 0.0
        %v2769 = vmax.f32 %v2591, 0.0
        %v2770 = vmax.f32 %v2593, 0.0
        %v2771 = vmax.f32 %v2596, 0.0
        %v2772 = vmax.f32 %v2598, 0.0
        %v2773 = vmax.f32 %v2601, 0.0
        %v2774 = vmax.f32 %v2603, 0.0
        %v2775 = vmax.f32 %v2606, 0.0
        %v2776 = vmax.f32 %v2608, 0.0
        %v2777 = vmax.f32 %v2611, 0.0
        %v2778 = vmax.f32 %v2613, 0.0
        %v2779 = vmax.f32 %v2616, 0.0
        %v2780 = vmax.f32 %v2618, 0.0
        %v2781 = vmax.f32 %v2621, 0.0
        %v2782 = vmax.f32 %v2623, 0.0
        %v2783 = vmax.f32 %v2626, 0.0
        %v2784 = vmax.f32 %v2628, 0.0
        %v2785 = vmax.f32 %v2631, 0.0
        %v2786 = vmax.f32 %v2633, 0.0
        %v2787 = vmax.f32 %v2636, 0.0
        %v2788 = vmax.f32 %v2638, 0.0
        %v2789 = vmax.f32 %v2641, 0.0
        %v2790 = vmax.f32 %v2643, 0.0
        %v2791 = vmax.f32 %v2646, 0.0
        %v2792 = vmax.f32 %v2648, 0.0
        %v2793 = vmax.f32 %v2651, 0.0
        %v2794 = vmax.f32 %v2653, 0.0
        %v2795 = vmax.f32 %v2656, 0.0
        %v2796 = vmax.f32 %v2658, 0.0
        %v2797 = vmax.f32 %v2661, 0.0
        %v2798 = vmax.f32 %v2663, 0.0
        %v2799 = vmax.f32 %v2666, 0.0
        %v2800 = vmax.f32 %v2668, 0.0
        %v2801 = vmax.f32 %v2671, 0.0
        %v2802 = vmax.f32 %v2673, 0.0
        %v2803 = vpack.c.bf16 %v2676, %v2675
        %v2804 = vpack.c.bf16 %v2678, %v2677
        %v2805 = vpack.c.bf16 %v2680, %v2679
        %v2806 = vpack.c.bf16 %v2682, %v2681
        %v2807 = vpack.c.bf16 %v2684, %v2683
        %v2808 = vpack.c.bf16 %v2686, %v2685
        %v2809 = vpack.c.bf16 %v2688, %v2687
        %v2810 = vpack.c.bf16 %v2690, %v2689
        %v2811 = vpack.c.bf16 %v2692, %v2691
        %v2812 = vpack.c.bf16 %v2694, %v2693
        %v2813 = vpack.c.bf16 %v2696, %v2695
        %v2814 = vpack.c.bf16 %v2698, %v2697
        %v2815 = vpack.c.bf16 %v2700, %v2699
        %v2816 = vpack.c.bf16 %v2702, %v2701
        %v2817 = vpack.c.bf16 %v2704, %v2703
        %v2818 = vpack.c.bf16 %v2706, %v2705
        %v2819 = vpack.c.bf16 %v2708, %v2707
        %v2820 = vpack.c.bf16 %v2710, %v2709
        %v2821 = vpack.c.bf16 %v2712, %v2711
        %v2822 = vpack.c.bf16 %v2714, %v2713
        %v2823 = vpack.c.bf16 %v2716, %v2715
        %v2824 = vpack.c.bf16 %v2718, %v2717
        %v2825 = vpack.c.bf16 %v2720, %v2719
        %v2826 = vpack.c.bf16 %v2722, %v2721
        %v2827 = vpack.c.bf16 %v2724, %v2723
        %v2828 = vpack.c.bf16 %v2726, %v2725
        %v2829 = vpack.c.bf16 %v2728, %v2727
        %v2830 = vpack.c.bf16 %v2730, %v2729
        %v2831 = vpack.c.bf16 %v2732, %v2731
        %v2832 = vpack.c.bf16 %v2734, %v2733
        %v2833 = vpack.c.bf16 %v2736, %v2735
        %v2834 = vpack.c.bf16 %v2738, %v2737
        %v2835 = vpack.c.bf16 %v2740, %v2739
        %v2836 = vpack.c.bf16 %v2742, %v2741
        %v2837 = vpack.c.bf16 %v2744, %v2743
        %v2838 = vpack.c.bf16 %v2746, %v2745
        %v2839 = vpack.c.bf16 %v2748, %v2747
        %v2840 = vpack.c.bf16 %v2750, %v2749
        %v2841 = vpack.c.bf16 %v2752, %v2751
        %v2842 = vpack.c.bf16 %v2754, %v2753
        %v2843 = vpack.c.bf16 %v2756, %v2755
        %v2844 = vpack.c.bf16 %v2758, %v2757
        %v2845 = vpack.c.bf16 %v2760, %v2759
        %v2846 = vpack.c.bf16 %v2762, %v2761
        %v2847 = vpack.c.bf16 %v2764, %v2763
        %v2848 = vpack.c.bf16 %v2766, %v2765
        %v2849 = vpack.c.bf16 %v2768, %v2767
        %v2850 = vpack.c.bf16 %v2770, %v2769
        %v2851 = vpack.c.bf16 %v2772, %v2771
        %v2852 = vpack.c.bf16 %v2774, %v2773
        %v2853 = vpack.c.bf16 %v2776, %v2775
        %v2854 = vpack.c.bf16 %v2778, %v2777
        %v2855 = vpack.c.bf16 %v2780, %v2779
        %v2856 = vpack.c.bf16 %v2782, %v2781
        %v2857 = vpack.c.bf16 %v2784, %v2783
        %v2858 = vpack.c.bf16 %v2786, %v2785
        %v2859 = vpack.c.bf16 %v2788, %v2787
        %v2860 = vpack.c.bf16 %v2790, %v2789
        %v2861 = vpack.c.bf16 %v2792, %v2791
        %v2862 = vpack.c.bf16 %v2794, %v2793
        %v2863 = vpack.c.bf16 %v2796, %v2795
        %v2864 = vpack.c.bf16 %v2798, %v2797
        %v2865 = vpack.c.bf16 %v2800, %v2799
        %v2866 = vpack.c.bf16 %v2802, %v2801
        %s2867 = scalar_lea.vmem %s3, 64
        %v2868 = vld [vmem:[%s2867] sm:$0xf]
        %v2869 = vld [vmem:[%s2867 + $0x4] sm:$0xf]
        %v2870 = vld [vmem:[%s2867 + $0x8] sm:$0xf]
        %v2871 = vld [vmem:[%s2867 + $0xc] sm:$0xf]
        %v2872 = vld [vmem:[%s2867 + $0x10] sm:$0xf]
        %v2873 = vld [vmem:[%s2867 + $0x14] sm:$0xf]
        %v2874 = vld [vmem:[%s2867 + $0x18] sm:$0xf]
        %v2875 = vld [vmem:[%s2867 + $0x1c] sm:$0xf]
        %v2876 = vld [vmem:[%s2867 + $0x20] sm:$0xf]
        %v2877 = vld [vmem:[%s2867 + $0x24] sm:$0xf]
        %v2878 = vld [vmem:[%s2867 + $0x28] sm:$0xf]
        %v2879 = vld [vmem:[%s2867 + $0x2c] sm:$0xf]
        %v2880 = vld [vmem:[%s2867 + $0x30] sm:$0xf]
        %v2881 = vld [vmem:[%s2867 + $0x34] sm:$0xf]
        %v2882 = vld [vmem:[%s2867 + $0x38] sm:$0xf]
        %v2883 = vld [vmem:[%s2867 + $0x3c] sm:$0xf]
        %v2900 = vunpack.c.l.b16 %v2868
        %v2901 = vunpack.c.l.b16 %v2869
        %v2902 = vunpack.c.l.b16 %v2870
        %v2903 = vunpack.c.l.b16 %v2871
        %v2904 = vunpack.c.l.b16 %v2872
        %v2905 = vunpack.c.l.b16 %v2873
        %v2906 = vunpack.c.l.b16 %v2874
        %v2907 = vunpack.c.l.b16 %v2875
        %v2908 = vunpack.c.l.b16 %v2876
        %v2909 = vunpack.c.l.b16 %v2877
        %v2910 = vunpack.c.l.b16 %v2878
        %v2911 = vunpack.c.l.b16 %v2879
        %v2912 = vunpack.c.l.b16 %v2880
        %v2913 = vunpack.c.l.b16 %v2881
        %v2914 = vunpack.c.l.b16 %v2882
        %v2915 = vunpack.c.l.b16 %v2883
        %v2916 = vpack.c.b16 %v2901, %v2900
        %v2917 = vpack.c.b16 %v2903, %v2902
        %v2918 = vpack.c.b16 %v2905, %v2904
        %v2919 = vpack.c.b16 %v2907, %v2906
        %v2920 = vpack.c.b16 %v2909, %v2908
        %v2921 = vpack.c.b16 %v2911, %v2910
        %v2922 = vpack.c.b16 %v2913, %v2912
        %v2923 = vpack.c.b16 %v2915, %v2914
        %2932 = vmatpush.bf16.msra.mxu0 %v2923
        %2933 = vmatpush.bf16.msra.mxu0 %v2922
        %2934 = vmatpush.bf16.msra.mxu0 %v2921
        %2935 = vmatpush.bf16.msra.mxu0 %v2920
        %2936 = vmatpush.bf16.msra.mxu0 %v2919
        %2937 = vmatpush.bf16.msra.mxu0 %v2918
        %2938 = vmatpush.bf16.msra.mxu0 %v2917
        %2939 = vmatpush.bf16.msra.mxu0 %v2916
        %2940 = vmatmul.bf16.gmra.mxu0 %v2803
        %v2941 = vpop.f32.mrf.mxu0
        %v2942 = vadd.f32 %v1314, %v2941
        %v2943 = vpop.f32.mrf.mxu0
        %v2944 = vadd.f32 %v1316, %v2943
        %2945 = vmatmul.bf16.gmra.mxu0 %v2804
        %v2946 = vpop.f32.mrf.mxu0
        %v2947 = vadd.f32 %v1319, %v2946
        %v2948 = vpop.f32.mrf.mxu0
        %v2949 = vadd.f32 %v1321, %v2948
        %2950 = vmatmul.bf16.gmra.mxu0 %v2805
        %v2951 = vpop.f32.mrf.mxu0
        %v2952 = vadd.f32 %v1324, %v2951
        %v2953 = vpop.f32.mrf.mxu0
        %v2954 = vadd.f32 %v1326, %v2953
        %2955 = vmatmul.bf16.gmra.mxu0 %v2806
        %v2956 = vpop.f32.mrf.mxu0
        %v2957 = vadd.f32 %v1329, %v2956
        %v2958 = vpop.f32.mrf.mxu0
        %v2959 = vadd.f32 %v1331, %v2958
        %2960 = vmatmul.bf16.gmra.mxu0 %v2807
        %v2961 = vpop.f32.mrf.mxu0
        %v2962 = vadd.f32 %v1334, %v2961
        %v2963 = vpop.f32.mrf.mxu0
        %v2964 = vadd.f32 %v1336, %v2963
        %2965 = vmatmul.bf16.gmra.mxu0 %v2808
        %v2966 = vpop.f32.mrf.mxu0
        %v2967 = vadd.f32 %v1339, %v2966
        %v2968 = vpop.f32.mrf.mxu0
        %v2969 = vadd.f32 %v1341, %v2968
        %2970 = vmatmul.bf16.gmra.mxu0 %v2809
        %v2971 = vpop.f32.mrf.mxu0
        %v2972 = vadd.f32 %v1344, %v2971
        %v2973 = vpop.f32.mrf.mxu0
        %v2974 = vadd.f32 %v1346, %v2973
        %2975 = vmatmul.bf16.gmra.mxu0 %v2810
        %v2976 = vpop.f32.mrf.mxu0
        %v2977 = vadd.f32 %v1349, %v2976
        %v2978 = vpop.f32.mrf.mxu0
        %v2979 = vadd.f32 %v1351, %v2978
        %2980 = vmatmul.bf16.gmra.mxu0 %v2811
        %v2981 = vpop.f32.mrf.mxu0
        %v2982 = vadd.f32 %v1354, %v2981
        %v2983 = vpop.f32.mrf.mxu0
        %v2984 = vadd.f32 %v1356, %v2983
        %2985 = vmatmul.bf16.gmra.mxu0 %v2812
        %v2986 = vpop.f32.mrf.mxu0
        %v2987 = vadd.f32 %v1359, %v2986
        %v2988 = vpop.f32.mrf.mxu0
        %v2989 = vadd.f32 %v1361, %v2988
        %2990 = vmatmul.bf16.gmra.mxu0 %v2813
        %v2991 = vpop.f32.mrf.mxu0
        %v2992 = vadd.f32 %v1364, %v2991
        %v2993 = vpop.f32.mrf.mxu0
        %v2994 = vadd.f32 %v1366, %v2993
        %2995 = vmatmul.bf16.gmra.mxu0 %v2814
        %v2996 = vpop.f32.mrf.mxu0
        %v2997 = vadd.f32 %v1369, %v2996
        %v2998 = vpop.f32.mrf.mxu0
        %v2999 = vadd.f32 %v1371, %v2998
        %3000 = vmatmul.bf16.gmra.mxu0 %v2815
        %v3001 = vpop.f32.mrf.mxu0
        %v3002 = vadd.f32 %v1374, %v3001
        %v3003 = vpop.f32.mrf.mxu0
        %v3004 = vadd.f32 %v1376, %v3003
        %3005 = vmatmul.bf16.gmra.mxu0 %v2816
        %v3006 = vpop.f32.mrf.mxu0
        %v3007 = vadd.f32 %v1379, %v3006
        %v3008 = vpop.f32.mrf.mxu0
        %v3009 = vadd.f32 %v1381, %v3008
        %3010 = vmatmul.bf16.gmra.mxu0 %v2817
        %v3011 = vpop.f32.mrf.mxu0
        %v3012 = vadd.f32 %v1384, %v3011
        %v3013 = vpop.f32.mrf.mxu0
        %v3014 = vadd.f32 %v1386, %v3013
        %3015 = vmatmul.bf16.gmra.mxu0 %v2818
        %v3016 = vpop.f32.mrf.mxu0
        %v3017 = vadd.f32 %v1389, %v3016
        %v3018 = vpop.f32.mrf.mxu0
        %v3019 = vadd.f32 %v1391, %v3018
        %3020 = vmatmul.bf16.gmra.mxu0 %v2819
        %v3021 = vpop.f32.mrf.mxu0
        %v3022 = vadd.f32 %v1394, %v3021
        %v3023 = vpop.f32.mrf.mxu0
        %v3024 = vadd.f32 %v1396, %v3023
        %3025 = vmatmul.bf16.gmra.mxu0 %v2820
        %v3026 = vpop.f32.mrf.mxu0
        %v3027 = vadd.f32 %v1399, %v3026
        %v3028 = vpop.f32.mrf.mxu0
        %v3029 = vadd.f32 %v1401, %v3028
        %3030 = vmatmul.bf16.gmra.mxu0 %v2821
        %v3031 = vpop.f32.mrf.mxu0
        %v3032 = vadd.f32 %v1404, %v3031
        %v3033 = vpop.f32.mrf.mxu0
        %v3034 = vadd.f32 %v1406, %v3033
        %3035 = vmatmul.bf16.gmra.mxu0 %v2822
        %v3036 = vpop.f32.mrf.mxu0
        %v3037 = vadd.f32 %v1409, %v3036
        %v3038 = vpop.f32.mrf.mxu0
        %v3039 = vadd.f32 %v1411, %v3038
        %3040 = vmatmul.bf16.gmra.mxu0 %v2823
        %v3041 = vpop.f32.mrf.mxu0
        %v3042 = vadd.f32 %v1414, %v3041
        %v3043 = vpop.f32.mrf.mxu0
        %v3044 = vadd.f32 %v1416, %v3043
        %3045 = vmatmul.bf16.gmra.mxu0 %v2824
        %v3046 = vpop.f32.mrf.mxu0
        %v3047 = vadd.f32 %v1419, %v3046
        %v3048 = vpop.f32.mrf.mxu0
        %v3049 = vadd.f32 %v1421, %v3048
        %3050 = vmatmul.bf16.gmra.mxu0 %v2825
        %v3051 = vpop.f32.mrf.mxu0
        %v3052 = vadd.f32 %v1424, %v3051
        %v3053 = vpop.f32.mrf.mxu0
        %v3054 = vadd.f32 %v1426, %v3053
        %3055 = vmatmul.bf16.gmra.mxu0 %v2826
        %v3056 = vpop.f32.mrf.mxu0
        %v3057 = vadd.f32 %v1429, %v3056
        %v3058 = vpop.f32.mrf.mxu0
        %v3059 = vadd.f32 %v1431, %v3058
        %3060 = vmatmul.bf16.gmra.mxu0 %v2827
        %v3061 = vpop.f32.mrf.mxu0
        %v3062 = vadd.f32 %v1434, %v3061
        %v3063 = vpop.f32.mrf.mxu0
        %v3064 = vadd.f32 %v1436, %v3063
        %3065 = vmatmul.bf16.gmra.mxu0 %v2828
        %v3066 = vpop.f32.mrf.mxu0
        %v3067 = vadd.f32 %v1439, %v3066
        %v3068 = vpop.f32.mrf.mxu0
        %v3069 = vadd.f32 %v1441, %v3068
        %3070 = vmatmul.bf16.gmra.mxu0 %v2829
        %v3071 = vpop.f32.mrf.mxu0
        %v3072 = vadd.f32 %v1444, %v3071
        %v3073 = vpop.f32.mrf.mxu0
        %v3074 = vadd.f32 %v1446, %v3073
        %3075 = vmatmul.bf16.gmra.mxu0 %v2830
        %v3076 = vpop.f32.mrf.mxu0
        %v3077 = vadd.f32 %v1449, %v3076
        %v3078 = vpop.f32.mrf.mxu0
        %v3079 = vadd.f32 %v1451, %v3078
        %3080 = vmatmul.bf16.gmra.mxu0 %v2831
        %v3081 = vpop.f32.mrf.mxu0
        %v3082 = vadd.f32 %v1454, %v3081
        %v3083 = vpop.f32.mrf.mxu0
        %v3084 = vadd.f32 %v1456, %v3083
        %3085 = vmatmul.bf16.gmra.mxu0 %v2832
        %v3086 = vpop.f32.mrf.mxu0
        %v3087 = vadd.f32 %v1459, %v3086
        %v3088 = vpop.f32.mrf.mxu0
        %v3089 = vadd.f32 %v1461, %v3088
        %3090 = vmatmul.bf16.gmra.mxu0 %v2833
        %v3091 = vpop.f32.mrf.mxu0
        %v3092 = vadd.f32 %v1464, %v3091
        %v3093 = vpop.f32.mrf.mxu0
        %v3094 = vadd.f32 %v1466, %v3093
        %3095 = vmatmul.bf16.gmra.mxu0 %v2834
        %v3096 = vpop.f32.mrf.mxu0
        %v3097 = vadd.f32 %v1469, %v3096
        %v3098 = vpop.f32.mrf.mxu0
        %v3099 = vadd.f32 %v1471, %v3098
        %3100 = vmatmul.bf16.gmra.mxu0 %v2835
        %v3101 = vpop.f32.mrf.mxu0
        %v3102 = vadd.f32 %v1474, %v3101
        %v3103 = vpop.f32.mrf.mxu0
        %v3104 = vadd.f32 %v1476, %v3103
        %3105 = vmatmul.bf16.gmra.mxu0 %v2836
        %v3106 = vpop.f32.mrf.mxu0
        %v3107 = vadd.f32 %v1479, %v3106
        %v3108 = vpop.f32.mrf.mxu0
        %v3109 = vadd.f32 %v1481, %v3108
        %3110 = vmatmul.bf16.gmra.mxu0 %v2837
        %v3111 = vpop.f32.mrf.mxu0
        %v3112 = vadd.f32 %v1484, %v3111
        %v3113 = vpop.f32.mrf.mxu0
        %v3114 = vadd.f32 %v1486, %v3113
        %3115 = vmatmul.bf16.gmra.mxu0 %v2838
        %v3116 = vpop.f32.mrf.mxu0
        %v3117 = vadd.f32 %v1489, %v3116
        %v3118 = vpop.f32.mrf.mxu0
        %v3119 = vadd.f32 %v1491, %v3118
        %3120 = vmatmul.bf16.gmra.mxu0 %v2839
        %v3121 = vpop.f32.mrf.mxu0
        %v3122 = vadd.f32 %v1494, %v3121
        %v3123 = vpop.f32.mrf.mxu0
        %v3124 = vadd.f32 %v1496, %v3123
        %3125 = vmatmul.bf16.gmra.mxu0 %v2840
        %v3126 = vpop.f32.mrf.mxu0
        %v3127 = vadd.f32 %v1499, %v3126
        %v3128 = vpop.f32.mrf.mxu0
        %v3129 = vadd.f32 %v1501, %v3128
        %3130 = vmatmul.bf16.gmra.mxu0 %v2841
        %v3131 = vpop.f32.mrf.mxu0
        %v3132 = vadd.f32 %v1504, %v3131
        %v3133 = vpop.f32.mrf.mxu0
        %v3134 = vadd.f32 %v1506, %v3133
        %3135 = vmatmul.bf16.gmra.mxu0 %v2842
        %v3136 = vpop.f32.mrf.mxu0
        %v3137 = vadd.f32 %v1509, %v3136
        %v3138 = vpop.f32.mrf.mxu0
        %v3139 = vadd.f32 %v1511, %v3138
        %3140 = vmatmul.bf16.gmra.mxu0 %v2843
        %v3141 = vpop.f32.mrf.mxu0
        %v3142 = vadd.f32 %v1514, %v3141
        %v3143 = vpop.f32.mrf.mxu0
        %v3144 = vadd.f32 %v1516, %v3143
        %3145 = vmatmul.bf16.gmra.mxu0 %v2844
        %v3146 = vpop.f32.mrf.mxu0
        %v3147 = vadd.f32 %v1519, %v3146
        %v3148 = vpop.f32.mrf.mxu0
        %v3149 = vadd.f32 %v1521, %v3148
        %3150 = vmatmul.bf16.gmra.mxu0 %v2845
        %v3151 = vpop.f32.mrf.mxu0
        %v3152 = vadd.f32 %v1524, %v3151
        %v3153 = vpop.f32.mrf.mxu0
        %v3154 = vadd.f32 %v1526, %v3153
        %3155 = vmatmul.bf16.gmra.mxu0 %v2846
        %v3156 = vpop.f32.mrf.mxu0
        %v3157 = vadd.f32 %v1529, %v3156
        %v3158 = vpop.f32.mrf.mxu0
        %v3159 = vadd.f32 %v1531, %v3158
        %3160 = vmatmul.bf16.gmra.mxu0 %v2847
        %v3161 = vpop.f32.mrf.mxu0
        %v3162 = vadd.f32 %v1534, %v3161
        %v3163 = vpop.f32.mrf.mxu0
        %v3164 = vadd.f32 %v1536, %v3163
        %3165 = vmatmul.bf16.gmra.mxu0 %v2848
        %v3166 = vpop.f32.mrf.mxu0
        %v3167 = vadd.f32 %v1539, %v3166
        %v3168 = vpop.f32.mrf.mxu0
        %v3169 = vadd.f32 %v1541, %v3168
        %3170 = vmatmul.bf16.gmra.mxu0 %v2849
        %v3171 = vpop.f32.mrf.mxu0
        %v3172 = vadd.f32 %v1544, %v3171
        %v3173 = vpop.f32.mrf.mxu0
        %v3174 = vadd.f32 %v1546, %v3173
        %3175 = vmatmul.bf16.gmra.mxu0 %v2850
        %v3176 = vpop.f32.mrf.mxu0
        %v3177 = vadd.f32 %v1549, %v3176
        %v3178 = vpop.f32.mrf.mxu0
        %v3179 = vadd.f32 %v1551, %v3178
        %3180 = vmatmul.bf16.gmra.mxu0 %v2851
        %v3181 = vpop.f32.mrf.mxu0
        %v3182 = vadd.f32 %v1554, %v3181
        %v3183 = vpop.f32.mrf.mxu0
        %v3184 = vadd.f32 %v1556, %v3183
        %3185 = vmatmul.bf16.gmra.mxu0 %v2852
        %v3186 = vpop.f32.mrf.mxu0
        %v3187 = vadd.f32 %v1559, %v3186
        %v3188 = vpop.f32.mrf.mxu0
        %v3189 = vadd.f32 %v1561, %v3188
        %3190 = vmatmul.bf16.gmra.mxu0 %v2853
        %v3191 = vpop.f32.mrf.mxu0
        %v3192 = vadd.f32 %v1564, %v3191
        %v3193 = vpop.f32.mrf.mxu0
        %v3194 = vadd.f32 %v1566, %v3193
        %3195 = vmatmul.bf16.gmra.mxu0 %v2854
        %v3196 = vpop.f32.mrf.mxu0
        %v3197 = vadd.f32 %v1569, %v3196
        %v3198 = vpop.f32.mrf.mxu0
        %v3199 = vadd.f32 %v1571, %v3198
        %3200 = vmatmul.bf16.gmra.mxu0 %v2855
        %v3201 = vpop.f32.mrf.mxu0
        %v3202 = vadd.f32 %v1574, %v3201
        %v3203 = vpop.f32.mrf.mxu0
        %v3204 = vadd.f32 %v1576, %v3203
        %3205 = vmatmul.bf16.gmra.mxu0 %v2856
        %v3206 = vpop.f32.mrf.mxu0
        %v3207 = vadd.f32 %v1579, %v3206
        %v3208 = vpop.f32.mrf.mxu0
        %v3209 = vadd.f32 %v1581, %v3208
        %3210 = vmatmul.bf16.gmra.mxu0 %v2857
        %v3211 = vpop.f32.mrf.mxu0
        %v3212 = vadd.f32 %v1584, %v3211
        %v3213 = vpop.f32.mrf.mxu0
        %v3214 = vadd.f32 %v1586, %v3213
        %3215 = vmatmul.bf16.gmra.mxu0 %v2858
        %v3216 = vpop.f32.mrf.mxu0
        %v3217 = vadd.f32 %v1589, %v3216
        %v3218 = vpop.f32.mrf.mxu0
        %v3219 = vadd.f32 %v1591, %v3218
        %3220 = vmatmul.bf16.gmra.mxu0 %v2859
        %v3221 = vpop.f32.mrf.mxu0
        %v3222 = vadd.f32 %v1594, %v3221
        %v3223 = vpop.f32.mrf.mxu0
        %v3224 = vadd.f32 %v1596, %v3223
        %3225 = vmatmul.bf16.gmra.mxu0 %v2860
        %v3226 = vpop.f32.mrf.mxu0
        %v3227 = vadd.f32 %v1599, %v3226
        %v3228 = vpop.f32.mrf.mxu0
        %v3229 = vadd.f32 %v1601, %v3228
        %3230 = vmatmul.bf16.gmra.mxu0 %v2861
        %v3231 = vpop.f32.mrf.mxu0
        %v3232 = vadd.f32 %v1604, %v3231
        %v3233 = vpop.f32.mrf.mxu0
        %v3234 = vadd.f32 %v1606, %v3233
        %3235 = vmatmul.bf16.gmra.mxu0 %v2862
        %v3236 = vpop.f32.mrf.mxu0
        %v3237 = vadd.f32 %v1609, %v3236
        %v3238 = vpop.f32.mrf.mxu0
        %v3239 = vadd.f32 %v1611, %v3238
        %3240 = vmatmul.bf16.gmra.mxu0 %v2863
        %v3241 = vpop.f32.mrf.mxu0
        %v3242 = vadd.f32 %v1614, %v3241
        %v3243 = vpop.f32.mrf.mxu0
        %v3244 = vadd.f32 %v1616, %v3243
        %3245 = vmatmul.bf16.gmra.mxu0 %v2864
        %v3246 = vpop.f32.mrf.mxu0
        %v3247 = vadd.f32 %v1619, %v3246
        %v3248 = vpop.f32.mrf.mxu0
        %v3249 = vadd.f32 %v1621, %v3248
        %3250 = vmatmul.bf16.gmra.mxu0 %v2865
        %v3251 = vpop.f32.mrf.mxu0
        %v3252 = vadd.f32 %v1624, %v3251
        %v3253 = vpop.f32.mrf.mxu0
        %v3254 = vadd.f32 %v1626, %v3253
        %3255 = vmatmul.bf16.gmra.mxu0 %v2866
        %v3256 = vpop.f32.mrf.mxu0
        %v3257 = vadd.f32 %v1629, %v3256
        %v3258 = vpop.f32.mrf.mxu0
        %v3259 = vadd.f32 %v1631, %v3258
        %3260 = vdwg.mxu0
        %v3261 = vmax.f32 %v2942, 0.0
        %v3262 = vmax.f32 %v2944, 0.0
        %v3263 = vmax.f32 %v2947, 0.0
        %v3264 = vmax.f32 %v2949, 0.0
        %v3265 = vmax.f32 %v2952, 0.0
        %v3266 = vmax.f32 %v2954, 0.0
        %v3267 = vmax.f32 %v2957, 0.0
        %v3268 = vmax.f32 %v2959, 0.0
        %v3269 = vmax.f32 %v2962, 0.0
        %v3270 = vmax.f32 %v2964, 0.0
        %v3271 = vmax.f32 %v2967, 0.0
        %v3272 = vmax.f32 %v2969, 0.0
        %v3273 = vmax.f32 %v2972, 0.0
        %v3274 = vmax.f32 %v2974, 0.0
        %v3275 = vmax.f32 %v2977, 0.0
        %v3276 = vmax.f32 %v2979, 0.0
        %v3277 = vmax.f32 %v2982, 0.0
        %v3278 = vmax.f32 %v2984, 0.0
        %v3279 = vmax.f32 %v2987, 0.0
        %v3280 = vmax.f32 %v2989, 0.0
        %v3281 = vmax.f32 %v2992, 0.0
        %v3282 = vmax.f32 %v2994, 0.0
        %v3283 = vmax.f32 %v2997, 0.0
        %v3284 = vmax.f32 %v2999, 0.0
        %v3285 = vmax.f32 %v3002, 0.0
        %v3286 = vmax.f32 %v3004, 0.0
        %v3287 = vmax.f32 %v3007, 0.0
        %v3288 = vmax.f32 %v3009, 0.0
        %v3289 = vmax.f32 %v3012, 0.0
        %v3290 = vmax.f32 %v3014, 0.0
        %v3291 = vmax.f32 %v3017, 0.0
        %v3292 = vmax.f32 %v3019, 0.0
        %v3293 = vmax.f32 %v3022, 0.0
        %v3294 = vmax.f32 %v3024, 0.0
        %v3295 = vmax.f32 %v3027, 0.0
        %v3296 = vmax.f32 %v3029, 0.0
        %v3297 = vmax.f32 %v3032, 0.0
        %v3298 = vmax.f32 %v3034, 0.0
        %v3299 = vmax.f32 %v3037, 0.0
        %v3300 = vmax.f32 %v3039, 0.0
        %v3301 = vmax.f32 %v3042, 0.0
        %v3302 = vmax.f32 %v3044, 0.0
        %v3303 = vmax.f32 %v3047, 0.0
        %v3304 = vmax.f32 %v3049, 0.0
        %v3305 = vmax.f32 %v3052, 0.0
        %v3306 = vmax.f32 %v3054, 0.0
        %v3307 = vmax.f32 %v3057, 0.0
        %v3308 = vmax.f32 %v3059, 0.0
        %v3309 = vmax.f32 %v3062, 0.0
        %v3310 = vmax.f32 %v3064, 0.0
        %v3311 = vmax.f32 %v3067, 0.0
        %v3312 = vmax.f32 %v3069, 0.0
        %v3313 = vmax.f32 %v3072, 0.0
        %v3314 = vmax.f32 %v3074, 0.0
        %v3315 = vmax.f32 %v3077, 0.0
        %v3316 = vmax.f32 %v3079, 0.0
        %v3317 = vmax.f32 %v3082, 0.0
        %v3318 = vmax.f32 %v3084, 0.0
        %v3319 = vmax.f32 %v3087, 0.0
        %v3320 = vmax.f32 %v3089, 0.0
        %v3321 = vmax.f32 %v3092, 0.0
        %v3322 = vmax.f32 %v3094, 0.0
        %v3323 = vmax.f32 %v3097, 0.0
        %v3324 = vmax.f32 %v3099, 0.0
        %v3325 = vmax.f32 %v3102, 0.0
        %v3326 = vmax.f32 %v3104, 0.0
        %v3327 = vmax.f32 %v3107, 0.0
        %v3328 = vmax.f32 %v3109, 0.0
        %v3329 = vmax.f32 %v3112, 0.0
        %v3330 = vmax.f32 %v3114, 0.0
        %v3331 = vmax.f32 %v3117, 0.0
        %v3332 = vmax.f32 %v3119, 0.0
        %v3333 = vmax.f32 %v3122, 0.0
        %v3334 = vmax.f32 %v3124, 0.0
        %v3335 = vmax.f32 %v3127, 0.0
        %v3336 = vmax.f32 %v3129, 0.0
        %v3337 = vmax.f32 %v3132, 0.0
        %v3338 = vmax.f32 %v3134, 0.0
        %v3339 = vmax.f32 %v3137, 0.0
        %v3340 = vmax.f32 %v3139, 0.0
        %v3341 = vmax.f32 %v3142, 0.0
        %v3342 = vmax.f32 %v3144, 0.0
        %v3343 = vmax.f32 %v3147, 0.0
        %v3344 = vmax.f32 %v3149, 0.0
        %v3345 = vmax.f32 %v3152, 0.0
        %v3346 = vmax.f32 %v3154, 0.0
        %v3347 = vmax.f32 %v3157, 0.0
        %v3348 = vmax.f32 %v3159, 0.0
        %v3349 = vmax.f32 %v3162, 0.0
        %v3350 = vmax.f32 %v3164, 0.0
        %v3351 = vmax.f32 %v3167, 0.0
        %v3352 = vmax.f32 %v3169, 0.0
        %v3353 = vmax.f32 %v3172, 0.0
        %v3354 = vmax.f32 %v3174, 0.0
        %v3355 = vmax.f32 %v3177, 0.0
        %v3356 = vmax.f32 %v3179, 0.0
        %v3357 = vmax.f32 %v3182, 0.0
        %v3358 = vmax.f32 %v3184, 0.0
        %v3359 = vmax.f32 %v3187, 0.0
        %v3360 = vmax.f32 %v3189, 0.0
        %v3361 = vmax.f32 %v3192, 0.0
        %v3362 = vmax.f32 %v3194, 0.0
        %v3363 = vmax.f32 %v3197, 0.0
        %v3364 = vmax.f32 %v3199, 0.0
        %v3365 = vmax.f32 %v3202, 0.0
        %v3366 = vmax.f32 %v3204, 0.0
        %v3367 = vmax.f32 %v3207, 0.0
        %v3368 = vmax.f32 %v3209, 0.0
        %v3369 = vmax.f32 %v3212, 0.0
        %v3370 = vmax.f32 %v3214, 0.0
        %v3371 = vmax.f32 %v3217, 0.0
        %v3372 = vmax.f32 %v3219, 0.0
        %v3373 = vmax.f32 %v3222, 0.0
        %v3374 = vmax.f32 %v3224, 0.0
        %v3375 = vmax.f32 %v3227, 0.0
        %v3376 = vmax.f32 %v3229, 0.0
        %v3377 = vmax.f32 %v3232, 0.0
        %v3378 = vmax.f32 %v3234, 0.0
        %v3379 = vmax.f32 %v3237, 0.0
        %v3380 = vmax.f32 %v3239, 0.0
        %v3381 = vmax.f32 %v3242, 0.0
        %v3382 = vmax.f32 %v3244, 0.0
        %v3383 = vmax.f32 %v3247, 0.0
        %v3384 = vmax.f32 %v3249, 0.0
        %v3385 = vmax.f32 %v3252, 0.0
        %v3386 = vmax.f32 %v3254, 0.0
        %v3387 = vmax.f32 %v3257, 0.0
        %v3388 = vmax.f32 %v3259, 0.0
        %v3389 = vmul.f32 %v1643, %v1643
        %v3390 = vmul.f32 %v1645, %v1645
        %v3391 = vmul.f32 %v1648, %v1648
        %v3392 = vmul.f32 %v1650, %v1650
        %v3393 = vmul.f32 %v1653, %v1653
        %v3394 = vmul.f32 %v1655, %v1655
        %v3395 = vmul.f32 %v1658, %v1658
        %v3396 = vmul.f32 %v1660, %v1660
        %v3397 = vmul.f32 %v1663, %v1663
        %v3398 = vmul.f32 %v1665, %v1665
        %v3399 = vmul.f32 %v1668, %v1668
        %v3400 = vmul.f32 %v1670, %v1670
        %v3401 = vmul.f32 %v1673, %v1673
        %v3402 = vmul.f32 %v1675, %v1675
        %v3403 = vmul.f32 %v1678, %v1678
        %v3404 = vmul.f32 %v1680, %v1680
        %v3405 = vmul.f32 %v1683, %v1683
        %v3406 = vmul.f32 %v1685, %v1685
        %v3407 = vmul.f32 %v1688, %v1688
        %v3408 = vmul.f32 %v1690, %v1690
        %v3409 = vmul.f32 %v1693, %v1693
        %v3410 = vmul.f32 %v1695, %v1695
        %v3411 = vmul.f32 %v1698, %v1698
        %v3412 = vmul.f32 %v1700, %v1700
        %v3413 = vmul.f32 %v1703, %v1703
        %v3414 = vmul.f32 %v1705, %v1705
        %v3415 = vmul.f32 %v1708, %v1708
        %v3416 = vmul.f32 %v1710, %v1710
        %v3417 = vmul.f32 %v1713, %v1713
        %v3418 = vmul.f32 %v1715, %v1715
        %v3419 = vmul.f32 %v1718, %v1718
        %v3420 = vmul.f32 %v1720, %v1720
        %v3421 = vmul.f32 %v1723, %v1723
        %v3422 = vmul.f32 %v1725, %v1725
        %v3423 = vmul.f32 %v1728, %v1728
        %v3424 = vmul.f32 %v1730, %v1730
        %v3425 = vmul.f32 %v1733, %v1733
        %v3426 = vmul.f32 %v1735, %v1735
        %v3427 = vmul.f32 %v1738, %v1738
        %v3428 = vmul.f32 %v1740, %v1740
        %v3429 = vmul.f32 %v1743, %v1743
        %v3430 = vmul.f32 %v1745, %v1745
        %v3431 = vmul.f32 %v1748, %v1748
        %v3432 = vmul.f32 %v1750, %v1750
        %v3433 = vmul.f32 %v1753, %v1753
        %v3434 = vmul.f32 %v1755, %v1755
        %v3435 = vmul.f32 %v1758, %v1758
        %v3436 = vmul.f32 %v1760, %v1760
        %v3437 = vmul.f32 %v1763, %v1763
        %v3438 = vmul.f32 %v1765, %v1765
        %v3439 = vmul.f32 %v1768, %v1768
        %v3440 = vmul.f32 %v1770, %v1770
        %v3441 = vmul.f32 %v1773, %v1773
        %v3442 = vmul.f32 %v1775, %v1775
        %v3443 = vmul.f32 %v1778, %v1778
        %v3444 = vmul.f32 %v1780, %v1780
        %v3445 = vmul.f32 %v1783, %v1783
        %v3446 = vmul.f32 %v1785, %v1785
        %v3447 = vmul.f32 %v1788, %v1788
        %v3448 = vmul.f32 %v1790, %v1790
        %v3449 = vmul.f32 %v1793, %v1793
        %v3450 = vmul.f32 %v1795, %v1795
        %v3451 = vmul.f32 %v1798, %v1798
        %v3452 = vmul.f32 %v1800, %v1800
        %v3453 = vmul.f32 %v1803, %v1803
        %v3454 = vmul.f32 %v1805, %v1805
        %v3455 = vmul.f32 %v1808, %v1808
        %v3456 = vmul.f32 %v1810, %v1810
        %v3457 = vmul.f32 %v1813, %v1813
        %v3458 = vmul.f32 %v1815, %v1815
        %v3459 = vmul.f32 %v1818, %v1818
        %v3460 = vmul.f32 %v1820, %v1820
        %v3461 = vmul.f32 %v1823, %v1823
        %v3462 = vmul.f32 %v1825, %v1825
        %v3463 = vmul.f32 %v1828, %v1828
        %v3464 = vmul.f32 %v1830, %v1830
        %v3465 = vmul.f32 %v1833, %v1833
        %v3466 = vmul.f32 %v1835, %v1835
        %v3467 = vmul.f32 %v1838, %v1838
        %v3468 = vmul.f32 %v1840, %v1840
        %v3469 = vmul.f32 %v1843, %v1843
        %v3470 = vmul.f32 %v1845, %v1845
        %v3471 = vmul.f32 %v1848, %v1848
        %v3472 = vmul.f32 %v1850, %v1850
        %v3473 = vmul.f32 %v1853, %v1853
        %v3474 = vmul.f32 %v1855, %v1855
        %v3475 = vmul.f32 %v1858, %v1858
        %v3476 = vmul.f32 %v1860, %v1860
        %v3477 = vmul.f32 %v1863, %v1863
        %v3478 = vmul.f32 %v1865, %v1865
        %v3479 = vmul.f32 %v1868, %v1868
        %v3480 = vmul.f32 %v1870, %v1870
        %v3481 = vmul.f32 %v1873, %v1873
        %v3482 = vmul.f32 %v1875, %v1875
        %v3483 = vmul.f32 %v1878, %v1878
        %v3484 = vmul.f32 %v1880, %v1880
        %v3485 = vmul.f32 %v1883, %v1883
        %v3486 = vmul.f32 %v1885, %v1885
        %v3487 = vmul.f32 %v1888, %v1888
        %v3488 = vmul.f32 %v1890, %v1890
        %v3489 = vmul.f32 %v1893, %v1893
        %v3490 = vmul.f32 %v1895, %v1895
        %v3491 = vmul.f32 %v1898, %v1898
        %v3492 = vmul.f32 %v1900, %v1900
        %v3493 = vmul.f32 %v1903, %v1903
        %v3494 = vmul.f32 %v1905, %v1905
        %v3495 = vmul.f32 %v1908, %v1908
        %v3496 = vmul.f32 %v1910, %v1910
        %v3497 = vmul.f32 %v1913, %v1913
        %v3498 = vmul.f32 %v1915, %v1915
        %v3499 = vmul.f32 %v1918, %v1918
        %v3500 = vmul.f32 %v1920, %v1920
        %v3501 = vmul.f32 %v1923, %v1923
        %v3502 = vmul.f32 %v1925, %v1925
        %v3503 = vmul.f32 %v1928, %v1928
        %v3504 = vmul.f32 %v1930, %v1930
        %v3505 = vmul.f32 %v1933, %v1933
        %v3506 = vmul.f32 %v1935, %v1935
        %v3507 = vmul.f32 %v1938, %v1938
        %v3508 = vmul.f32 %v1940, %v1940
        %v3509 = vmul.f32 %v1943, %v1943
        %v3510 = vmul.f32 %v1945, %v1945
        %v3511 = vmul.f32 %v1948, %v1948
        %v3512 = vmul.f32 %v1950, %v1950
        %v3513 = vmul.f32 %v1953, %v1953
        %v3514 = vmul.f32 %v1955, %v1955
        %v3515 = vmul.f32 %v1958, %v1958
        %v3516 = vmul.f32 %v1960, %v1960
        %v3517 = vld [vmem:[%s4] sm:$0x3]
        %v3519 = vperm.slane %v3517, 0
        %v3520 = vperm.slane %v3517, 1
        %3523 = vmatpush.xpose.msra.mxu0 %v3276
        %3524 = vmatpush.xpose.msra.mxu0 %v3275
        %3525 = vmatpush.xpose.msra.mxu0 %v3274
        %3526 = vmatpush.xpose.msra.mxu0 %v3273
        %3527 = vmatpush.xpose.msra.mxu0 %v3272
        %3528 = vmatpush.xpose.msra.mxu0 %v3271
        %3529 = vmatpush.xpose.msra.mxu0 %v3270
        %3530 = vmatpush.xpose.msra.mxu0 %v3269
        %3531 = vmatpush.xpose.msra.mxu0 %v3268
        %3532 = vmatpush.xpose.msra.mxu0 %v3267
        %3533 = vmatpush.xpose.msra.mxu0 %v3266
        %3534 = vmatpush.xpose.msra.mxu0 %v3265
        %3535 = vmatpush.xpose.msra.mxu0 %v3264
        %3536 = vmatpush.xpose.msra.mxu0 %v3263
        %3537 = vmatpush.xpose.msra.mxu0 %v3262
        %3538 = vmatpush.xpose.msra.mxu0 %v3261
        %3539 = vmatmul.f32.gmra.mxu0 %v3519
        %v3540 = vpop.f32.mrf.mxu0
        %v3541 = vadd.f32 0.0, %v3540
        %3542 = vdwg.mxu0
        %3543 = vmatpush.xpose.msra.mxu0 %v3404
        %3544 = vmatpush.xpose.msra.mxu0 %v3403
        %3545 = vmatpush.xpose.msra.mxu0 %v3402
        %3546 = vmatpush.xpose.msra.mxu0 %v3401
        %3547 = vmatpush.xpose.msra.mxu0 %v3400
        %3548 = vmatpush.xpose.msra.mxu0 %v3399
        %3549 = vmatpush.xpose.msra.mxu0 %v3398
        %3550 = vmatpush.xpose.msra.mxu0 %v3397
        %3551 = vmatpush.xpose.msra.mxu0 %v3396
        %3552 = vmatpush.xpose.msra.mxu0 %v3395
        %3553 = vmatpush.xpose.msra.mxu0 %v3394
        %3554 = vmatpush.xpose.msra.mxu0 %v3393
        %3555 = vmatpush.xpose.msra.mxu0 %v3392
        %3556 = vmatpush.xpose.msra.mxu0 %v3391
        %3557 = vmatpush.xpose.msra.mxu0 %v3390
        %3558 = vmatpush.xpose.msra.mxu0 %v3389
        %3559 = vmatmul.f32.gmra.mxu0 %v3520
        %v3560 = vpop.f32.mrf.mxu0
        %v3561 = vadd.f32 %v3541, %v3560
        %3562 = vdwg.mxu0
        %3563 = vmatpush.xpose.msra.mxu0 %v3292
        %3564 = vmatpush.xpose.msra.mxu0 %v3291
        %3565 = vmatpush.xpose.msra.mxu0 %v3290
        %3566 = vmatpush.xpose.msra.mxu0 %v3289
        %3567 = vmatpush.xpose.msra.mxu0 %v3288
        %3568 = vmatpush.xpose.msra.mxu0 %v3287
        %3569 = vmatpush.xpose.msra.mxu0 %v3286
        %3570 = vmatpush.xpose.msra.mxu0 %v3285
        %3571 = vmatpush.xpose.msra.mxu0 %v3284
        %3572 = vmatpush.xpose.msra.mxu0 %v3283
        %3573 = vmatpush.xpose.msra.mxu0 %v3282
        %3574 = vmatpush.xpose.msra.mxu0 %v3281
        %3575 = vmatpush.xpose.msra.mxu0 %v3280
        %3576 = vmatpush.xpose.msra.mxu0 %v3279
        %3577 = vmatpush.xpose.msra.mxu0 %v3278
        %3578 = vmatpush.xpose.msra.mxu0 %v3277
        %3579 = vmatmul.f32.gmra.mxu0 %v3519
        %v3580 = vpop.f32.mrf.mxu0
        %v3581 = vadd.f32 0.0, %v3580
        %3582 = vdwg.mxu0
        %3583 = vmatpush.xpose.msra.mxu0 %v3420
        %3584 = vmatpush.xpose.msra.mxu0 %v3419
        %3585 = vmatpush.xpose.msra.mxu0 %v3418
        %3586 = vmatpush.xpose.msra.mxu0 %v3417
        %3587 = vmatpush.xpose.msra.mxu0 %v3416
        %3588 = vmatpush.xpose.msra.mxu0 %v3415
        %3589 = vmatpush.xpose.msra.mxu0 %v3414
        %3590 = vmatpush.xpose.msra.mxu0 %v3413
        %3591 = vmatpush.xpose.msra.mxu0 %v3412
        %3592 = vmatpush.xpose.msra.mxu0 %v3411
        %3593 = vmatpush.xpose.msra.mxu0 %v3410
        %3594 = vmatpush.xpose.msra.mxu0 %v3409
        %3595 = vmatpush.xpose.msra.mxu0 %v3408
        %3596 = vmatpush.xpose.msra.mxu0 %v3407
        %3597 = vmatpush.xpose.msra.mxu0 %v3406
        %3598 = vmatpush.xpose.msra.mxu0 %v3405
        %3599 = vmatmul.f32.gmra.mxu0 %v3520
        %v3600 = vpop.f32.mrf.mxu0
        %v3601 = vadd.f32 %v3581, %v3600
        %3602 = vdwg.mxu0
        %3603 = vmatpush.xpose.msra.mxu0 %v3308
        %3604 = vmatpush.xpose.msra.mxu0 %v3307
        %3605 = vmatpush.xpose.msra.mxu0 %v3306
        %3606 = vmatpush.xpose.msra.mxu0 %v3305
        %3607 = vmatpush.xpose.msra.mxu0 %v3304
        %3608 = vmatpush.xpose.msra.mxu0 %v3303
        %3609 = vmatpush.xpose.msra.mxu0 %v3302
        %3610 = vmatpush.xpose.msra.mxu0 %v3301
        %3611 = vmatpush.xpose.msra.mxu0 %v3300
        %3612 = vmatpush.xpose.msra.mxu0 %v3299
        %3613 = vmatpush.xpose.msra.mxu0 %v3298
        %3614 = vmatpush.xpose.msra.mxu0 %v3297
        %3615 = vmatpush.xpose.msra.mxu0 %v3296
        %3616 = vmatpush.xpose.msra.mxu0 %v3295
        %3617 = vmatpush.xpose.msra.mxu0 %v3294
        %3618 = vmatpush.xpose.msra.mxu0 %v3293
        %3619 = vmatmul.f32.gmra.mxu0 %v3519
        %v3620 = vpop.f32.mrf.mxu0
        %v3621 = vadd.f32 0.0, %v3620
        %3622 = vdwg.mxu0
        %3623 = vmatpush.xpose.msra.mxu0 %v3436
        %3624 = vmatpush.xpose.msra.mxu0 %v3435
        %3625 = vmatpush.xpose.msra.mxu0 %v3434
        %3626 = vmatpush.xpose.msra.mxu0 %v3433
        %3627 = vmatpush.xpose.msra.mxu0 %v3432
        %3628 = vmatpush.xpose.msra.mxu0 %v3431
        %3629 = vmatpush.xpose.msra.mxu0 %v3430
        %3630 = vmatpush.xpose.msra.mxu0 %v3429
        %3631 = vmatpush.xpose.msra.mxu0 %v3428
        %3632 = vmatpush.xpose.msra.mxu0 %v3427
        %3633 = vmatpush.xpose.msra.mxu0 %v3426
        %3634 = vmatpush.xpose.msra.mxu0 %v3425
        %3635 = vmatpush.xpose.msra.mxu0 %v3424
        %3636 = vmatpush.xpose.msra.mxu0 %v3423
        %3637 = vmatpush.xpose.msra.mxu0 %v3422
        %3638 = vmatpush.xpose.msra.mxu0 %v3421
        %3639 = vmatmul.f32.gmra.mxu0 %v3520
        %v3640 = vpop.f32.mrf.mxu0
        %v3641 = vadd.f32 %v3621, %v3640
        %3642 = vdwg.mxu0
        %3643 = vmatpush.xpose.msra.mxu0 %v3324
        %3644 = vmatpush.xpose.msra.mxu0 %v3323
        %3645 = vmatpush.xpose.msra.mxu0 %v3322
        %3646 = vmatpush.xpose.msra.mxu0 %v3321
        %3647 = vmatpush.xpose.msra.mxu0 %v3320
        %3648 = vmatpush.xpose.msra.mxu0 %v3319
        %3649 = vmatpush.xpose.msra.mxu0 %v3318
        %3650 = vmatpush.xpose.msra.mxu0 %v3317
        %3651 = vmatpush.xpose.msra.mxu0 %v3316
        %3652 = vmatpush.xpose.msra.mxu0 %v3315
        %3653 = vmatpush.xpose.msra.mxu0 %v3314
        %3654 = vmatpush.xpose.msra.mxu0 %v3313
        %3655 = vmatpush.xpose.msra.mxu0 %v3312
        %3656 = vmatpush.xpose.msra.mxu0 %v3311
        %3657 = vmatpush.xpose.msra.mxu0 %v3310
        %3658 = vmatpush.xpose.msra.mxu0 %v3309
        %3659 = vmatmul.f32.gmra.mxu0 %v3519
        %v3660 = vpop.f32.mrf.mxu0
        %v3661 = vadd.f32 0.0, %v3660
        %3662 = vdwg.mxu0
        %3663 = vmatpush.xpose.msra.mxu0 %v3452
        %3664 = vmatpush.xpose.msra.mxu0 %v3451
        %3665 = vmatpush.xpose.msra.mxu0 %v3450
        %3666 = vmatpush.xpose.msra.mxu0 %v3449
        %3667 = vmatpush.xpose.msra.mxu0 %v3448
        %3668 = vmatpush.xpose.msra.mxu0 %v3447
        %3669 = vmatpush.xpose.msra.mxu0 %v3446
        %3670 = vmatpush.xpose.msra.mxu0 %v3445
        %3671 = vmatpush.xpose.msra.mxu0 %v3444
        %3672 = vmatpush.xpose.msra.mxu0 %v3443
        %3673 = vmatpush.xpose.msra.mxu0 %v3442
        %3674 = vmatpush.xpose.msra.mxu0 %v3441
        %3675 = vmatpush.xpose.msra.mxu0 %v3440
        %3676 = vmatpush.xpose.msra.mxu0 %v3439
        %3677 = vmatpush.xpose.msra.mxu0 %v3438
        %3678 = vmatpush.xpose.msra.mxu0 %v3437
        %3679 = vmatmul.f32.gmra.mxu0 %v3520
        %v3680 = vpop.f32.mrf.mxu0
        %v3681 = vadd.f32 %v3661, %v3680
        %3682 = vdwg.mxu0
        %3683 = vmatpush.xpose.msra.mxu0 %v3340
        %3684 = vmatpush.xpose.msra.mxu0 %v3339
        %3685 = vmatpush.xpose.msra.mxu0 %v3338
        %3686 = vmatpush.xpose.msra.mxu0 %v3337
        %3687 = vmatpush.xpose.msra.mxu0 %v3336
        %3688 = vmatpush.xpose.msra.mxu0 %v3335
        %3689 = vmatpush.xpose.msra.mxu0 %v3334
        %3690 = vmatpush.xpose.msra.mxu0 %v3333
        %3691 = vmatpush.xpose.msra.mxu0 %v3332
        %3692 = vmatpush.xpose.msra.mxu0 %v3331
        %3693 = vmatpush.xpose.msra.mxu0 %v3330
        %3694 = vmatpush.xpose.msra.mxu0 %v3329
        %3695 = vmatpush.xpose.msra.mxu0 %v3328
        %3696 = vmatpush.xpose.msra.mxu0 %v3327
        %3697 = vmatpush.xpose.msra.mxu0 %v3326
        %3698 = vmatpush.xpose.msra.mxu0 %v3325
        %3699 = vmatmul.f32.gmra.mxu0 %v3519
        %v3700 = vpop.f32.mrf.mxu0
        %v3701 = vadd.f32 0.0, %v3700
        %3702 = vdwg.mxu0
        %3703 = vmatpush.xpose.msra.mxu0 %v3468
        %3704 = vmatpush.xpose.msra.mxu0 %v3467
        %3705 = vmatpush.xpose.msra.mxu0 %v3466
        %3706 = vmatpush.xpose.msra.mxu0 %v3465
        %3707 = vmatpush.xpose.msra.mxu0 %v3464
        %3708 = vmatpush.xpose.msra.mxu0 %v3463
        %3709 = vmatpush.xpose.msra.mxu0 %v3462
        %3710 = vmatpush.xpose.msra.mxu0 %v3461
        %3711 = vmatpush.xpose.msra.mxu0 %v3460
        %3712 = vmatpush.xpose.msra.mxu0 %v3459
        %3713 = vmatpush.xpose.msra.mxu0 %v3458
        %3714 = vmatpush.xpose.msra.mxu0 %v3457
        %3715 = vmatpush.xpose.msra.mxu0 %v3456
        %3716 = vmatpush.xpose.msra.mxu0 %v3455
        %3717 = vmatpush.xpose.msra.mxu0 %v3454
        %3718 = vmatpush.xpose.msra.mxu0 %v3453
        %3719 = vmatmul.f32.gmra.mxu0 %v3520
        %v3720 = vpop.f32.mrf.mxu0
        %v3721 = vadd.f32 %v3701, %v3720
        %3722 = vdwg.mxu0
        %3723 = vmatpush.xpose.msra.mxu0 %v3356
        %3724 = vmatpush.xpose.msra.mxu0 %v3355
        %3725 = vmatpush.xpose.msra.mxu0 %v3354
        %3726 = vmatpush.xpose.msra.mxu0 %v3353
        %3727 = vmatpush.xpose.msra.mxu0 %v3352
        %3728 = vmatpush.xpose.msra.mxu0 %v3351
        %3729 = vmatpush.xpose.msra.mxu0 %v3350
        %3730 = vmatpush.xpose.msra.mxu0 %v3349
        %3731 = vmatpush.xpose.msra.mxu0 %v3348
        %3732 = vmatpush.xpose.msra.mxu0 %v3347
        %3733 = vmatpush.xpose.msra.mxu0 %v3346
        %3734 = vmatpush.xpose.msra.mxu0 %v3345
        %3735 = vmatpush.xpose.msra.mxu0 %v3344
        %3736 = vmatpush.xpose.msra.mxu0 %v3343
        %3737 = vmatpush.xpose.msra.mxu0 %v3342
        %3738 = vmatpush.xpose.msra.mxu0 %v3341
        %3739 = vmatmul.f32.gmra.mxu0 %v3519
        %v3740 = vpop.f32.mrf.mxu0
        %v3741 = vadd.f32 0.0, %v3740
        %3742 = vdwg.mxu0
        %3743 = vmatpush.xpose.msra.mxu0 %v3484
        %3744 = vmatpush.xpose.msra.mxu0 %v3483
        %3745 = vmatpush.xpose.msra.mxu0 %v3482
        %3746 = vmatpush.xpose.msra.mxu0 %v3481
        %3747 = vmatpush.xpose.msra.mxu0 %v3480
        %3748 = vmatpush.xpose.msra.mxu0 %v3479
        %3749 = vmatpush.xpose.msra.mxu0 %v3478
        %3750 = vmatpush.xpose.msra.mxu0 %v3477
        %3751 = vmatpush.xpose.msra.mxu0 %v3476
        %3752 = vmatpush.xpose.msra.mxu0 %v3475
        %3753 = vmatpush.xpose.msra.mxu0 %v3474
        %3754 = vmatpush.xpose.msra.mxu0 %v3473
        %3755 = vmatpush.xpose.msra.mxu0 %v3472
        %3756 = vmatpush.xpose.msra.mxu0 %v3471
        %3757 = vmatpush.xpose.msra.mxu0 %v3470
        %3758 = vmatpush.xpose.msra.mxu0 %v3469
        %3759 = vmatmul.f32.gmra.mxu0 %v3520
        %v3760 = vpop.f32.mrf.mxu0
        %v3761 = vadd.f32 %v3741, %v3760
        %3762 = vdwg.mxu0
        %3763 = vmatpush.xpose.msra.mxu0 %v3372
        %3764 = vmatpush.xpose.msra.mxu0 %v3371
        %3765 = vmatpush.xpose.msra.mxu0 %v3370
        %3766 = vmatpush.xpose.msra.mxu0 %v3369
        %3767 = vmatpush.xpose.msra.mxu0 %v3368
        %3768 = vmatpush.xpose.msra.mxu0 %v3367
        %3769 = vmatpush.xpose.msra.mxu0 %v3366
        %3770 = vmatpush.xpose.msra.mxu0 %v3365
        %3771 = vmatpush.xpose.msra.mxu0 %v3364
        %3772 = vmatpush.xpose.msra.mxu0 %v3363
        %3773 = vmatpush.xpose.msra.mxu0 %v3362
        %3774 = vmatpush.xpose.msra.mxu0 %v3361
        %3775 = vmatpush.xpose.msra.mxu0 %v3360
        %3776 = vmatpush.xpose.msra.mxu0 %v3359
        %3777 = vmatpush.xpose.msra.mxu0 %v3358
        %3778 = vmatpush.xpose.msra.mxu0 %v3357
        %3779 = vmatmul.f32.gmra.mxu0 %v3519
        %v3780 = vpop.f32.mrf.mxu0
        %v3781 = vadd.f32 0.0, %v3780
        %3782 = vdwg.mxu0
        %3783 = vmatpush.xpose.msra.mxu0 %v3500
        %3784 = vmatpush.xpose.msra.mxu0 %v3499
        %3785 = vmatpush.xpose.msra.mxu0 %v3498
        %3786 = vmatpush.xpose.msra.mxu0 %v3497
        %3787 = vmatpush.xpose.msra.mxu0 %v3496
        %3788 = vmatpush.xpose.msra.mxu0 %v3495
        %3789 = vmatpush.xpose.msra.mxu0 %v3494
        %3790 = vmatpush.xpose.msra.mxu0 %v3493
        %3791 = vmatpush.xpose.msra.mxu0 %v3492
        %3792 = vmatpush.xpose.msra.mxu0 %v3491
        %3793 = vmatpush.xpose.msra.mxu0 %v3490
        %3794 = vmatpush.xpose.msra.mxu0 %v3489
        %3795 = vmatpush.xpose.msra.mxu0 %v3488
        %3796 = vmatpush.xpose.msra.mxu0 %v3487
        %3797 = vmatpush.xpose.msra.mxu0 %v3486
        %3798 = vmatpush.xpose.msra.mxu0 %v3485
        %3799 = vmatmul.f32.gmra.mxu0 %v3520
        %v3800 = vpop.f32.mrf.mxu0
        %v3801 = vadd.f32 %v3781, %v3800
        %3802 = vdwg.mxu0
        %3803 = vmatpush.xpose.msra.mxu0 %v3388
        %3804 = vmatpush.xpose.msra.mxu0 %v3387
        %3805 = vmatpush.xpose.msra.mxu0 %v3386
        %3806 = vmatpush.xpose.msra.mxu0 %v3385
        %3807 = vmatpush.xpose.msra.mxu0 %v3384
        %3808 = vmatpush.xpose.msra.mxu0 %v3383
        %3809 = vmatpush.xpose.msra.mxu0 %v3382
        %3810 = vmatpush.xpose.msra.mxu0 %v3381
        %3811 = vmatpush.xpose.msra.mxu0 %v3380
        %3812 = vmatpush.xpose.msra.mxu0 %v3379
        %3813 = vmatpush.xpose.msra.mxu0 %v3378
        %3814 = vmatpush.xpose.msra.mxu0 %v3377
        %3815 = vmatpush.xpose.msra.mxu0 %v3376
        %3816 = vmatpush.xpose.msra.mxu0 %v3375
        %3817 = vmatpush.xpose.msra.mxu0 %v3374
        %3818 = vmatpush.xpose.msra.mxu0 %v3373
        %3819 = vmatmul.f32.gmra.mxu0 %v3519
        %v3820 = vpop.f32.mrf.mxu0
        %v3821 = vadd.f32 0.0, %v3820
        %3822 = vdwg.mxu0
        %3823 = vmatpush.xpose.msra.mxu0 %v3516
        %3824 = vmatpush.xpose.msra.mxu0 %v3515
        %3825 = vmatpush.xpose.msra.mxu0 %v3514
        %3826 = vmatpush.xpose.msra.mxu0 %v3513
        %3827 = vmatpush.xpose.msra.mxu0 %v3512
        %3828 = vmatpush.xpose.msra.mxu0 %v3511
        %3829 = vmatpush.xpose.msra.mxu0 %v3510
        %3830 = vmatpush.xpose.msra.mxu0 %v3509
        %3831 = vmatpush.xpose.msra.mxu0 %v3508
        %3832 = vmatpush.xpose.msra.mxu0 %v3507
        %3833 = vmatpush.xpose.msra.mxu0 %v3506
        %3834 = vmatpush.xpose.msra.mxu0 %v3505
        %3835 = vmatpush.xpose.msra.mxu0 %v3504
        %3836 = vmatpush.xpose.msra.mxu0 %v3503
        %3837 = vmatpush.xpose.msra.mxu0 %v3502
        %3838 = vmatpush.xpose.msra.mxu0 %v3501
        %3839 = vmatmul.f32.gmra.mxu0 %v3520
        %v3840 = vpop.f32.mrf.mxu0
        %v3841 = vadd.f32 %v3821, %v3840
        %3842 = vdwg.mxu0
        %v3851 = vrot.slane %v3601, 7
        %v3852 = vrot.slane %v3641, 6
        %v3853 = vrot.slane %v3681, 5
        %v3854 = vrot.slane %v3721, 4
        %v3855 = vrot.slane %v3761, 3
        %v3856 = vrot.slane %v3801, 2
        %v3857 = vrot.slane %v3841, 1
        %vm3858 = vcmask 1040384
        %v3859 = vsel %vm3858, %v3561, %v3851
        %vm3860 = vcmask 1042434
        %v3861 = vsel %vm3860, %v3852, %v3853
        %vm3862 = vcmask 1041408
        %v3863 = vsel %vm3862, %v3859, %v3861
        %vm3864 = vcmask 1044484
        %v3865 = vsel %vm3864, %v3854, %v3855
        %vm3866 = vcmask 1046534
        %v3867 = vsel %vm3866, %v3856, %v3857
        %vm3868 = vcmask 1045508
        %v3869 = vsel %vm3868, %v3865, %v3867
        %v3870 = vsel %vm633, %v3863, %v3869
        %3872 = vst [vmem:[%s218] sm:$0xff] %v3870
        %s3873 = sand.u32 %s137, 1
        %s3874 = scalar_lea.sflag [#allocation3], %s3873
        %s3875 = sand.u32 %s137, 1
        %s3876 = smul.addr %s3875, 8
        %s3877 = scalar_lea.vmem [#allocation2], %s3876
        // Predicated region
        $region41: #{tpu_custom_call.1} parent=39 // pred_check
          %p3878 = pneg %p147
        $region42: #{tpu_custom_call.1} parent=39 // pred_check_branch
          %3880 = sbr.rel (%p3878) target = $region44
        $region43: #{tpu_custom_call.1} parent=39 // pred_region
          %3882 = vsyncadd %s3874, 0
          %s3883 = smul.addr %s19, 8
          %s3884 = scalar_lea.hbm %s5, %s3883
          %s3886 = sshll.u32 %s3877, 4
          %s3887 = int_to_ptr.vmem [resolvable:$true] %s3886
          %s3888 = sshll.u32 %s3884, 4
          %s3889 = int_to_ptr.hbm [resolvable:$true] %s3888
          %3891 = dma.vmem_to_hbm [thread:$0]  %s3887, 128, %s3889, %s3874
        $region44: #{tpu_custom_call.1} parent=39 // pred_fallthru
          _
      $region40: #{tpu_custom_call.1} parent=5 // pred_fallthru
        _
      %p3892 = scmp.le.s32.totalorder 2, %s14
      // Predicated region
      $region45: #{tpu_custom_call.1} parent=5 // pred_check
        %p3893 = pneg %p3892
      $region46: #{tpu_custom_call.1} parent=5 // pred_check_branch
        %3895 = sbr.rel (%p3893) target = $region48
      $region47: #{tpu_custom_call.1} parent=5 // pred_region
        %s3896 = ssub.s32 %s14, 2
        // Predicated region
        $region49: #{tpu_custom_call.1} parent=47 // pred_check
          %p3897 = pneg %p153
        $region50: #{tpu_custom_call.1} parent=47 // pred_check_branch
          %3899 = sbr.rel (%p3897) target = $region52
        $region51: #{tpu_custom_call.1} parent=47 // pred_region
          %s3900 = sand.u32 %s138, 1
          %s3901 = scalar_lea.sflag [#allocation3], %s3900
          %s3902 = sand.u32 %s138, 1
          %s3903 = smul.addr %s3902, 8
          %s3904 = scalar_lea.vmem [#allocation2], %s3903
          %3906 = dma.done %s3901, 128
        $region52: #{tpu_custom_call.1} parent=47 // pred_fallthru
          _
      $region48: #{tpu_custom_call.1} parent=5 // pred_fallthru
        _
    $region6: #{tpu_custom_call.1} parent=1 // loop_footer
      %s18 = sadd.s32 1, %s14
    $region7: #{tpu_custom_call.1} parent=1 // loop_footer_branch
      %13 = sbr.rel target = $region3
    $region8: #{tpu_custom_call.1} parent=1 // loop_exit
      _
    %3907 = vsyncpa [#allocation3], 1
    %s3908 = scalar_lea.sflag [#allocation3], 1
    %3909 = vsyncpa %s3908, 1

</llo_original>
